<compile_context>
chip_gen: v6e
topology: v6e:2x2x1
jax: 0.10.0
libtpu: 0.0.40
codegen_flags: <defaults>
</compile_context>

<pallas_src>
import functools

import numpy as np
import jax
import jax.numpy as jnp
from jax import lax
from jax.experimental import pallas as pl
from jax.experimental.pallas import tpu as pltpu


# ---------------------------------------------------------------------------
# Fused forward kernel
# ---------------------------------------------------------------------------
# Per batch tile of BT images (everything below stays in VMEM):
#   x streams  xm[r]  : [7*BT, 28]   row = j*BT + b  <->  image row 4j + r
#   conv1 out  O_r    : [6*BT, 256]  row = q*BT + b (oh = 4q + r),
#                                    lane = parity_ow*128 + pw*6 + c1 (72 valid/half)
#   pool1      P1e/o  : [6*BT, 128]  ph = 2q (+1),   lane = pw*6 + c1 (0..71 valid)
#   conv2 out  O2e/o  : [4*BT, 256]  oh2 = 2*q2 (+1), lane = parity*128 + pw2*12 + c2
#   pool2      P2     : [4*BT, 128]  row = q2*BT + b, lane = qw*12 + c2 (0..47 valid)
#   MLP                : [BT, 128] padded lanes; logits in cols 0..9.

def _fmnist_fused_kernel(xm_ref, a1_ref, cb1_ref, a2_ref, cb2_ref,
                         w1_ref, fb1_ref, w2_ref, fb2_ref, w3_ref, fb3_ref,
                         o_ref, *, bt):
    # single merged input block [1, 4, 7*BT, 28]; one load per residue stream
    xm = tuple(xm_ref[0, r] for r in range(4))              # each [7*BT, 28]

    # ---- conv1 + bias + relu: kh-outer / stream-inner (RHS reuse) ----------
    cb1 = cb1_ref[...]                                       # [1, 256] (hoisted)
    acc1 = [None] * 4
    for kh in range(5):
        a1k = a1_ref[kh]                                     # [28, 256]
        for r in range(4):                                   # oh = 4q + r
            t = r + kh
            m, s = t % 4, t // 4
            xs = xm[m][s * bt:(s + 6) * bt, :]               # [6*BT, 28]
            part = jnp.dot(xs, a1k, preferred_element_type=jnp.float32)
            acc1[r] = part if acc1[r] is None else acc1[r] + part
    o1 = [jnp.maximum(a + cb1, 0.0) for a in acc1]           # 4 x [6*BT, 256]

    # ---- pool1 (2x2): row pairs = streams, col pairs = 128-aligned halves --
    p1e = jnp.maximum(jnp.maximum(o1[0][:, :128], o1[0][:, 128:]),
                      jnp.maximum(o1[1][:, :128], o1[1][:, 128:]))  # ph = 2q
    p1o = jnp.maximum(jnp.maximum(o1[2][:, :128], o1[2][:, 128:]),
                      jnp.maximum(o1[3][:, :128], o1[3][:, 128:]))  # ph = 2q+1

    # ---- conv2 + bias + relu: kh-outer / stream-inner (RHS reuse) ----------
    taps = (
        ((p1e, 0), (p1o, 0), (p1e, 1), (p1o, 1), (p1e, 2)),   # oh2 even
        ((p1o, 0), (p1e, 1), (p1o, 1), (p1e, 2), (p1o, 2)),   # oh2 odd
    )
    cb2 = cb2_ref[...]                                        # [1, 256] (hoisted)
    acc2 = [None, None]
    for kh in range(5):
        a2k = a2_ref[kh]                                      # [128, 256]
        for par in range(2):
            src, s = taps[par][kh]
            xs = src[s * bt:(s + 4) * bt, :]                  # [4*BT, 128]
            part = jnp.dot(xs, a2k, preferred_element_type=jnp.float32)
            acc2[par] = part if acc2[par] is None else acc2[par] + part
    o2 = [jnp.maximum(a + cb2, 0.0) for a in acc2]            # 2 x [4*BT, 256]

    # ---- pool2 (2x2): 128-aligned lane halves ------------------------------
    p2 = jnp.maximum(jnp.maximum(o2[0][:, :128], o2[0][:, 128:]),
                     jnp.maximum(o2[1][:, :128], o2[1][:, 128:]))  # [4*BT, 128]

    # ---- MLP: fc1(+relu) as 4 accumulated matmuls, fc2(+relu), out ---------
    # (dropout p=0 is the identity and is omitted)
    acc = None
    for qh in range(4):
        part = jnp.dot(p2[qh * bt:(qh + 1) * bt, :], w1_ref[qh],
                       preferred_element_type=jnp.float32)        # [BT, 128]
        acc = part if acc is None else acc + part
    h1 = jnp.maximum(acc + fb1_ref[...], 0.0)
    h2 = jnp.maximum(jnp.dot(h1, w2_ref[...],
                             preferred_element_type=jnp.float32) + fb2_ref[...],
                     0.0)
    o_ref[...] = jnp.dot(h2, w3_ref[...],
                         preferred_element_type=jnp.float32) + fb3_ref[...]


# ---------------------------------------------------------------------------
# Trace-time weight preparation (one-time, wrapper side; jnp-traceable)
# ---------------------------------------------------------------------------

def _conv1_banded(w1, b1):
    """A1[kh, iw, col]: col = parity*128 + pw*6 + c1, ow = 2*pw + parity.
    Valid lanes 0..71 (even ow) and 128..199 (odd ow); the rest are zero."""
    col = np.arange(256)
    parity, rem = col // 128, col % 128
    pw, co = rem // 6, rem % 6
    valid_col = rem < 72
    ow = 2 * pw + parity                                    # [256]
    iw = np.arange(28)[:, None]                             # [28, 1]
    kw = iw - ow[None, :]                                   # [28, 256]
    valid = valid_col[None, :] & (kw >= 0) & (kw <= 4)
    kwc = np.clip(kw, 0, 4)
    w = w1.reshape(6, 5, 5)                                 # [co, kh, kw]
    a1 = w[co[None, None, :],
           np.arange(5)[:, None, None],
           kwc[None, :, :]]                                 # [5, 28, 256]
    a1 = jnp.where(jnp.asarray(valid)[None], a1, 0.0)
    cb1 = jnp.where(jnp.asarray(valid_col), b1[co], 0.0).reshape(1, 256)
    return a1, cb1


def _conv2_banded(w2, b2):
    """A2[kh, row, col]: row = pw_in*6 + c1 (rows 72..127 zero),
    col = parity*128 + pw2*12 + c2 (valid lanes 0..47 and 128..175)."""
    row = np.arange(128)
    pw_in, c1 = row // 6, row % 6
    valid_row = row < 72
    col = np.arange(256)
    parity, rem = col // 128, col % 128
    pw2, c2 = rem // 12, rem % 12
    valid_col = rem < 48
    ow2 = 2 * pw2 + parity
    kw = pw_in[:, None] - ow2[None, :]                      # [128, 256]
    valid = valid_row[:, None] & valid_col[None, :] & (kw >= 0) & (kw <= 4)
    kwc = np.clip(kw, 0, 4)
    a2 = w2[c2[None, None, :],
            c1[None, :, None],
            np.arange(5)[:, None, None],
            kwc[None, :, :]]                                # [5, 128, 256]
    a2 = jnp.where(jnp.asarray(valid)[None], a2, 0.0)
    cb2 = jnp.where(jnp.asarray(valid_col), b2[c2], 0.0).reshape(1, 256)
    return a2, cb2


def _mlp_weights(params):
    # fc1 rows are permuted once from torch flatten order (c2*16 + qh*4 + qw)
    # to the kernel's pooled layout (qh ; qw*12 + c2), K padded 48 -> 128 to
    # match p2's zero-padded lanes; all MLP lanes padded to 128.
    w1 = params["fc1_w"].reshape(12, 4, 4, 120)             # [c2, qh, qw, j]
    w1 = w1.transpose(1, 2, 0, 3).reshape(4, 48, 120)       # [qh, qw*12+c2, j]
    w1 = jnp.pad(w1, ((0, 0), (0, 80), (0, 8)))             # [4, 128, 128]
    b1 = jnp.pad(params["fc1_b"], (0, 8)).reshape(1, 128)
    w2 = jnp.pad(params["fc2_w"], ((0, 8), (0, 68)))        # [128, 128]
    b2 = jnp.pad(params["fc2_b"], (0, 68)).reshape(1, 128)
    w3 = jnp.pad(params["out_w"], ((0, 68), (0, 118)))      # [128, 128]
    b3 = jnp.pad(params["out_b"], (0, 118)).reshape(1, 128)
    return w1, b1, w2, b2, w3, b3


# ---------------------------------------------------------------------------
# Public forward
# ---------------------------------------------------------------------------

def _round_up(x, m):
    return -(-x // m) * m


def _pick_batch_tile(B, batch_tile):
    # bt must be a multiple of 8 (sublane alignment of the row windows); cap it
    # so nt = ceil(B/bt) stays >= 2 when the batch allows it, keeping both v7x
    # TensorCores busy via the ("parallel",) batch axis.
    bt = min(int(batch_tile), max(8, _round_up(-(-B // 2), 8)))
    return max(8, _round_up(bt, 8))


def fmnist_cnn_forward(x_nchw, params, *, batch_tile=128):
    B = x_nchw.shape[0]
    bt = _pick_batch_tile(B, batch_tile)
    nt = -(-B // bt)                       # ceil(B / bt)
    Bp = nt * bt

    x = x_nchw.astype(jnp.float32).reshape(B, 28, 28)
    if Bp != B:
        x = jnp.pad(x, ((0, Bp - B), (0, 0), (0, 0)))

    # One merged input array [nt, 4, 7*bt, 28]: residue-r stream at index r,
    # rows within a tile ordered (j, b) so every in-kernel conv tap is a
    # contiguous static row window.  image row = 4*j + r.
    xr = x.reshape(nt, bt, 7, 4, 28)                  # (nt, b, j, r, 28)
    xr = xr.transpose(0, 3, 2, 1, 4)                  # (nt, r, j, b, 28)
    streams = xr.reshape(nt, 4, 7 * bt, 28)

    a1, cb1 = _conv1_banded(params["conv1_w"], params["conv1_b"])
    a2, cb2 = _conv2_banded(params["conv2_w"], params["conv2_b"])
    w1, b1, w2, b2, w3, b3 = _mlp_weights(params)

    def full(shape):
        return pl.BlockSpec(shape, lambda i, _n=len(shape): (0,) * _n)

    kernel = functools.partial(_fmnist_fused_kernel, bt=bt)

    out = pl.pallas_call(
        kernel,
        out_shape=jax.ShapeDtypeStruct((Bp, 128), jnp.float32),
        grid=(nt,),
        in_specs=[
            pl.BlockSpec((1, 4, 7 * bt, 28), lambda i: (i, 0, 0, 0)),
            full((5, 28, 256)), full((1, 256)),
            full((5, 128, 256)), full((1, 256)),
            full((4, 128, 128)), full((1, 128)),
            full((128, 128)), full((1, 128)),
            full((128, 128)), full((1, 128)),
        ],
        out_specs=pl.BlockSpec((bt, 128), lambda i: (i, 0)),
        compiler_params=pltpu.CompilerParams(
            dimension_semantics=("parallel",),
            # working set at bt=128 is ~10 MiB; give headroom but stay well
            # under v7x's 64 MiB physical VMEM (v5e default scoped is 16 MiB).
            vmem_limit_bytes=40 * 1024 * 1024),
    )(streams, a1, cb1, a2, cb2, w1, b1, w2, b2, w3, b3)

    return out[:B, :10]


# ---------------------------------------------------------------------------
# Pure-JAX reference (for a correctness check) and params
# ---------------------------------------------------------------------------

def fmnist_cnn_reference(x_nchw, params):
    x = x_nchw.astype(jnp.float32)
    dn = ("NCHW", "OIHW", "NCHW")
    y = lax.conv_general_dilated(x, params["conv1_w"], (1, 1), "VALID",
                                 dimension_numbers=dn)
    y = jnp.maximum(y + params["conv1_b"][None, :, None, None], 0.0)
    y = lax.reduce_window(y, -jnp.inf, lax.max, (1, 1, 2, 2), (1, 1, 2, 2),
                          "VALID")
    y = lax.conv_general_dilated(y, params["conv2_w"], (1, 1), "VALID",
                                 dimension_numbers=dn)
    y = jnp.maximum(y + params["conv2_b"][None, :, None, None], 0.0)
    y = lax.reduce_window(y, -jnp.inf, lax.max, (1, 1, 2, 2), (1, 1, 2, 2),
                          "VALID")
    y = y.reshape(y.shape[0], 12 * 4 * 4)
    y = jnp.maximum(y @ params["fc1_w"] + params["fc1_b"], 0.0)
    y = jnp.maximum(y @ params["fc2_w"] + params["fc2_b"], 0.0)
    return y @ params["out_w"] + params["out_b"]


def init_params(key):
    ks = jax.random.split(key, 10)
    f32 = jnp.float32
    return {
        "conv1_w": 0.1 * jax.random.normal(ks[0], (6, 1, 5, 5), f32),
        "conv1_b": 0.1 * jax.random.normal(ks[1], (6,), f32),
        "conv2_w": 0.1 * jax.random.normal(ks[2], (12, 6, 5, 5), f32),
        "conv2_b": 0.1 * jax.random.normal(ks[3], (12,), f32),
        # linear weights stored pre-transposed: [in_features, out_features]
        "fc1_w": 0.05 * jax.random.normal(ks[4], (192, 120), f32),
        "fc1_b": 0.05 * jax.random.normal(ks[5], (120,), f32),
        "fc2_w": 0.05 * jax.random.normal(ks[6], (120, 60), f32),
        "fc2_b": 0.05 * jax.random.normal(ks[7], (60,), f32),
        "out_w": 0.05 * jax.random.normal(ks[8], (60, 10), f32),
        "out_b": 0.05 * jax.random.normal(ks[9], (10,), f32),
    }


if __name__ == "__main__":
    key = jax.random.PRNGKey(0)
    kx, kp = jax.random.split(key)
    # FMNIST-shaped input (the module's flatten to 12*4*4 implies 28x28 spatial).
    # B=16 -> bt=8, nt=2 (both v7x TensorCores exercised even at this small size).
    x = jax.random.normal(kx, (16, 1, 28, 28), jnp.float32)
    params = init_params(kp)

    out = jax.block_until_ready(jax.jit(fmnist_cnn_forward)(x, params))
    assert out.shape == (16, 10) and out.dtype == jnp.float32

    ref = jax.block_until_ready(jax.jit(fmnist_cnn_reference)(x, params))
    err = float(jnp.max(jnp.abs(out - ref)))
    # Tightened from 2e-2: layout/permutation bugs produce O(1e-1) diffs; 2e-3
    # still tolerates TPU default-matmul-precision differences between the
    # banded-matmul kernel and XLA's conv lowering.
    assert err < 2e-3, f"kernel/reference mismatch, max |diff| = {err}"

    print("KERNEL_OK")
</pallas_src>

<mosaic_0001>
module attributes {stable_mosaic.version = 11 : i64} {
  func.func @_fmnist_fused_kernel(%arg0: i32, %arg1: memref<1x4x56x28xf32, #tpu.memory_space<vmem>>, %arg2: memref<5x28x256xf32, #tpu.memory_space<vmem>>, %arg3: memref<1x256xf32, #tpu.memory_space<vmem>>, %arg4: memref<5x128x256xf32, #tpu.memory_space<vmem>>, %arg5: memref<1x256xf32, #tpu.memory_space<vmem>>, %arg6: memref<4x128x128xf32, #tpu.memory_space<vmem>>, %arg7: memref<1x128xf32, #tpu.memory_space<vmem>>, %arg8: memref<128x128xf32, #tpu.memory_space<vmem>>, %arg9: memref<1x128xf32, #tpu.memory_space<vmem>>, %arg10: memref<128x128xf32, #tpu.memory_space<vmem>>, %arg11: memref<1x128xf32, #tpu.memory_space<vmem>>, %arg12: memref<8x128xf32, #tpu.memory_space<vmem>>) attributes {dimension_semantics = [#tpu.dimension_semantics<parallel>], iteration_bounds = array<i64: 2>, scalar_prefetch = 0 : i64, scratch_operands = 0 : i64, tpu.core_type = #tpu.core_type<tc>, window_params = [{transform_indices = @transform_0, window_bounds = array<i64: 1, 4, 56, 28>}, {pipeline_mode = #tpu.pipeline_mode<synchronous>, transform_indices = @transform_1, window_bounds = array<i64: 5, 28, 256>}, {pipeline_mode = #tpu.pipeline_mode<synchronous>, transform_indices = @transform_2, window_bounds = array<i64: 1, 256>}, {pipeline_mode = #tpu.pipeline_mode<synchronous>, transform_indices = @transform_3, window_bounds = array<i64: 5, 128, 256>}, {pipeline_mode = #tpu.pipeline_mode<synchronous>, transform_indices = @transform_4, window_bounds = array<i64: 1, 256>}, {pipeline_mode = #tpu.pipeline_mode<synchronous>, transform_indices = @transform_5, window_bounds = array<i64: 4, 128, 128>}, {pipeline_mode = #tpu.pipeline_mode<synchronous>, transform_indices = @transform_6, window_bounds = array<i64: 1, 128>}, {pipeline_mode = #tpu.pipeline_mode<synchronous>, transform_indices = @transform_7, window_bounds = array<i64: 128, 128>}, {pipeline_mode = #tpu.pipeline_mode<synchronous>, transform_indices = @transform_8, window_bounds = array<i64: 1, 128>}, {pipeline_mode = #tpu.pipeline_mode<synchronous>, transform_indices = @transform_9, window_bounds = array<i64: 128, 128>}, {pipeline_mode = #tpu.pipeline_mode<synchronous>, transform_indices = @transform_10, window_bounds = array<i64: 1, 128>}, {transform_indices = @transform_11, window_bounds = array<i64: 8, 128>}]} {
    %c0 = arith.constant 0 : index
    %c0_0 = arith.constant 0 : index
    %c0_1 = arith.constant 0 : index
    %c0_2 = arith.constant 0 : index
    %0 = vector.load %arg1[%c0, %c0_0, %c0_1, %c0_2] : memref<1x4x56x28xf32, #tpu.memory_space<vmem>>, vector<1x1x56x28xf32>
    %1 = vector.shape_cast %0 : vector<1x1x56x28xf32> to vector<56x28xf32>
    %c0_3 = arith.constant 0 : index
    %c1 = arith.constant 1 : index
    %c0_4 = arith.constant 0 : index
    %c0_5 = arith.constant 0 : index
    %2 = vector.load %arg1[%c0_3, %c1, %c0_4, %c0_5] : memref<1x4x56x28xf32, #tpu.memory_space<vmem>>, vector<1x1x56x28xf32>
    %3 = vector.shape_cast %2 : vector<1x1x56x28xf32> to vector<56x28xf32>
    %c0_6 = arith.constant 0 : index
    %c2 = arith.constant 2 : index
    %c0_7 = arith.constant 0 : index
    %c0_8 = arith.constant 0 : index
    %4 = vector.load %arg1[%c0_6, %c2, %c0_7, %c0_8] : memref<1x4x56x28xf32, #tpu.memory_space<vmem>>, vector<1x1x56x28xf32>
    %5 = vector.shape_cast %4 : vector<1x1x56x28xf32> to vector<56x28xf32>
    %c0_9 = arith.constant 0 : index
    %c3 = arith.constant 3 : index
    %c0_10 = arith.constant 0 : index
    %c0_11 = arith.constant 0 : index
    %6 = vector.load %arg1[%c0_9, %c3, %c0_10, %c0_11] : memref<1x4x56x28xf32, #tpu.memory_space<vmem>>, vector<1x1x56x28xf32>
    %7 = vector.shape_cast %6 : vector<1x1x56x28xf32> to vector<56x28xf32>
    %c0_12 = arith.constant 0 : index
    %c0_13 = arith.constant 0 : index
    %8 = vector.load %arg3[%c0_12, %c0_13] : memref<1x256xf32, #tpu.memory_space<vmem>>, vector<1x256xf32>
    %c0_14 = arith.constant 0 : index
    %c0_15 = arith.constant 0 : index
    %c0_16 = arith.constant 0 : index
    %9 = vector.load %arg2[%c0_14, %c0_15, %c0_16] : memref<5x28x256xf32, #tpu.memory_space<vmem>>, vector<1x28x256xf32>
    %10 = vector.shape_cast %9 : vector<1x28x256xf32> to vector<28x256xf32>
    %11 = vector.extract_strided_slice %1 {offsets = [0, 0], sizes = [48, 28], strides = [1, 1]} : vector<56x28xf32> to vector<48x28xf32>
    %cst = arith.constant dense<0.000000e+00> : vector<48x256xf32>
    %12 = tpu.matmul %11, %10, %cst {dimension_numbers = #tpu.dot_dimension_numbers<[1], [0], [0], [1], [0, 0, 1, 1], [], []>} : vector<48x28xf32>, vector<28x256xf32>, vector<48x256xf32> -> vector<48x256xf32>
    %13 = vector.extract_strided_slice %3 {offsets = [0, 0], sizes = [48, 28], strides = [1, 1]} : vector<56x28xf32> to vector<48x28xf32>
    %cst_17 = arith.constant dense<0.000000e+00> : vector<48x256xf32>
    %14 = tpu.matmul %13, %10, %cst_17 {dimension_numbers = #tpu.dot_dimension_numbers<[1], [0], [0], [1], [0, 0, 1, 1], [], []>} : vector<48x28xf32>, vector<28x256xf32>, vector<48x256xf32> -> vector<48x256xf32>
    %15 = vector.extract_strided_slice %5 {offsets = [0, 0], sizes = [48, 28], strides = [1, 1]} : vector<56x28xf32> to vector<48x28xf32>
    %cst_18 = arith.constant dense<0.000000e+00> : vector<48x256xf32>
    %16 = tpu.matmul %15, %10, %cst_18 {dimension_numbers = #tpu.dot_dimension_numbers<[1], [0], [0], [1], [0, 0, 1, 1], [], []>} : vector<48x28xf32>, vector<28x256xf32>, vector<48x256xf32> -> vector<48x256xf32>
    %17 = vector.extract_strided_slice %7 {offsets = [0, 0], sizes = [48, 28], strides = [1, 1]} : vector<56x28xf32> to vector<48x28xf32>
    %cst_19 = arith.constant dense<0.000000e+00> : vector<48x256xf32>
    %18 = tpu.matmul %17, %10, %cst_19 {dimension_numbers = #tpu.dot_dimension_numbers<[1], [0], [0], [1], [0, 0, 1, 1], [], []>} : vector<48x28xf32>, vector<28x256xf32>, vector<48x256xf32> -> vector<48x256xf32>
    %c1_20 = arith.constant 1 : index
    %c0_21 = arith.constant 0 : index
    %c0_22 = arith.constant 0 : index
    %19 = vector.load %arg2[%c1_20, %c0_21, %c0_22] : memref<5x28x256xf32, #tpu.memory_space<vmem>>, vector<1x28x256xf32>
    %20 = vector.shape_cast %19 : vector<1x28x256xf32> to vector<28x256xf32>
    %21 = vector.extract_strided_slice %3 {offsets = [0, 0], sizes = [48, 28], strides = [1, 1]} : vector<56x28xf32> to vector<48x28xf32>
    %cst_23 = arith.constant dense<0.000000e+00> : vector<48x256xf32>
    %22 = tpu.matmul %21, %20, %cst_23 {dimension_numbers = #tpu.dot_dimension_numbers<[1], [0], [0], [1], [0, 0, 1, 1], [], []>} : vector<48x28xf32>, vector<28x256xf32>, vector<48x256xf32> -> vector<48x256xf32>
    %23 = arith.addf %12, %22 : vector<48x256xf32>
    %24 = vector.extract_strided_slice %5 {offsets = [0, 0], sizes = [48, 28], strides = [1, 1]} : vector<56x28xf32> to vector<48x28xf32>
    %cst_24 = arith.constant dense<0.000000e+00> : vector<48x256xf32>
    %25 = tpu.matmul %24, %20, %cst_24 {dimension_numbers = #tpu.dot_dimension_numbers<[1], [0], [0], [1], [0, 0, 1, 1], [], []>} : vector<48x28xf32>, vector<28x256xf32>, vector<48x256xf32> -> vector<48x256xf32>
    %26 = arith.addf %14, %25 : vector<48x256xf32>
    %27 = vector.extract_strided_slice %7 {offsets = [0, 0], sizes = [48, 28], strides = [1, 1]} : vector<56x28xf32> to vector<48x28xf32>
    %cst_25 = arith.constant dense<0.000000e+00> : vector<48x256xf32>
    %28 = tpu.matmul %27, %20, %cst_25 {dimension_numbers = #tpu.dot_dimension_numbers<[1], [0], [0], [1], [0, 0, 1, 1], [], []>} : vector<48x28xf32>, vector<28x256xf32>, vector<48x256xf32> -> vector<48x256xf32>
    %29 = arith.addf %16, %28 : vector<48x256xf32>
    %30 = vector.extract_strided_slice %1 {offsets = [8, 0], sizes = [48, 28], strides = [1, 1]} : vector<56x28xf32> to vector<48x28xf32>
    %cst_26 = arith.constant dense<0.000000e+00> : vector<48x256xf32>
    %31 = tpu.matmul %30, %20, %cst_26 {dimension_numbers = #tpu.dot_dimension_numbers<[1], [0], [0], [1], [0, 0, 1, 1], [], []>} : vector<48x28xf32>, vector<28x256xf32>, vector<48x256xf32> -> vector<48x256xf32>
    %32 = arith.addf %18, %31 : vector<48x256xf32>
    %c2_27 = arith.constant 2 : index
    %c0_28 = arith.constant 0 : index
    %c0_29 = arith.constant 0 : index
    %33 = vector.load %arg2[%c2_27, %c0_28, %c0_29] : memref<5x28x256xf32, #tpu.memory_space<vmem>>, vector<1x28x256xf32>
    %34 = vector.shape_cast %33 : vector<1x28x256xf32> to vector<28x256xf32>
    %35 = vector.extract_strided_slice %5 {offsets = [0, 0], sizes = [48, 28], strides = [1, 1]} : vector<56x28xf32> to vector<48x28xf32>
    %cst_30 = arith.constant dense<0.000000e+00> : vector<48x256xf32>
    %36 = tpu.matmul %35, %34, %cst_30 {dimension_numbers = #tpu.dot_dimension_numbers<[1], [0], [0], [1], [0, 0, 1, 1], [], []>} : vector<48x28xf32>, vector<28x256xf32>, vector<48x256xf32> -> vector<48x256xf32>
    %37 = arith.addf %23, %36 : vector<48x256xf32>
    %38 = vector.extract_strided_slice %7 {offsets = [0, 0], sizes = [48, 28], strides = [1, 1]} : vector<56x28xf32> to vector<48x28xf32>
    %cst_31 = arith.constant dense<0.000000e+00> : vector<48x256xf32>
    %39 = tpu.matmul %38, %34, %cst_31 {dimension_numbers = #tpu.dot_dimension_numbers<[1], [0], [0], [1], [0, 0, 1, 1], [], []>} : vector<48x28xf32>, vector<28x256xf32>, vector<48x256xf32> -> vector<48x256xf32>
    %40 = arith.addf %26, %39 : vector<48x256xf32>
    %41 = vector.extract_strided_slice %1 {offsets = [8, 0], sizes = [48, 28], strides = [1, 1]} : vector<56x28xf32> to vector<48x28xf32>
    %cst_32 = arith.constant dense<0.000000e+00> : vector<48x256xf32>
    %42 = tpu.matmul %41, %34, %cst_32 {dimension_numbers = #tpu.dot_dimension_numbers<[1], [0], [0], [1], [0, 0, 1, 1], [], []>} : vector<48x28xf32>, vector<28x256xf32>, vector<48x256xf32> -> vector<48x256xf32>
    %43 = arith.addf %29, %42 : vector<48x256xf32>
    %44 = vector.extract_strided_slice %3 {offsets = [8, 0], sizes = [48, 28], strides = [1, 1]} : vector<56x28xf32> to vector<48x28xf32>
    %cst_33 = arith.constant dense<0.000000e+00> : vector<48x256xf32>
    %45 = tpu.matmul %44, %34, %cst_33 {dimension_numbers = #tpu.dot_dimension_numbers<[1], [0], [0], [1], [0, 0, 1, 1], [], []>} : vector<48x28xf32>, vector<28x256xf32>, vector<48x256xf32> -> vector<48x256xf32>
    %46 = arith.addf %32, %45 : vector<48x256xf32>
    %c3_34 = arith.constant 3 : index
    %c0_35 = arith.constant 0 : index
    %c0_36 = arith.constant 0 : index
    %47 = vector.load %arg2[%c3_34, %c0_35, %c0_36] : memref<5x28x256xf32, #tpu.memory_space<vmem>>, vector<1x28x256xf32>
    %48 = vector.shape_cast %47 : vector<1x28x256xf32> to vector<28x256xf32>
    %49 = vector.extract_strided_slice %7 {offsets = [0, 0], sizes = [48, 28], strides = [1, 1]} : vector<56x28xf32> to vector<48x28xf32>
    %cst_37 = arith.constant dense<0.000000e+00> : vector<48x256xf32>
    %50 = tpu.matmul %49, %48, %cst_37 {dimension_numbers = #tpu.dot_dimension_numbers<[1], [0], [0], [1], [0, 0, 1, 1], [], []>} : vector<48x28xf32>, vector<28x256xf32>, vector<48x256xf32> -> vector<48x256xf32>
    %51 = arith.addf %37, %50 : vector<48x256xf32>
    %52 = vector.extract_strided_slice %1 {offsets = [8, 0], sizes = [48, 28], strides = [1, 1]} : vector<56x28xf32> to vector<48x28xf32>
    %cst_38 = arith.constant dense<0.000000e+00> : vector<48x256xf32>
    %53 = tpu.matmul %52, %48, %cst_38 {dimension_numbers = #tpu.dot_dimension_numbers<[1], [0], [0], [1], [0, 0, 1, 1], [], []>} : vector<48x28xf32>, vector<28x256xf32>, vector<48x256xf32> -> vector<48x256xf32>
    %54 = arith.addf %40, %53 : vector<48x256xf32>
    %55 = vector.extract_strided_slice %3 {offsets = [8, 0], sizes = [48, 28], strides = [1, 1]} : vector<56x28xf32> to vector<48x28xf32>
    %cst_39 = arith.constant dense<0.000000e+00> : vector<48x256xf32>
    %56 = tpu.matmul %55, %48, %cst_39 {dimension_numbers = #tpu.dot_dimension_numbers<[1], [0], [0], [1], [0, 0, 1, 1], [], []>} : vector<48x28xf32>, vector<28x256xf32>, vector<48x256xf32> -> vector<48x256xf32>
    %57 = arith.addf %43, %56 : vector<48x256xf32>
    %58 = vector.extract_strided_slice %5 {offsets = [8, 0], sizes = [48, 28], strides = [1, 1]} : vector<56x28xf32> to vector<48x28xf32>
    %cst_40 = arith.constant dense<0.000000e+00> : vector<48x256xf32>
    %59 = tpu.matmul %58, %48, %cst_40 {dimension_numbers = #tpu.dot_dimension_numbers<[1], [0], [0], [1], [0, 0, 1, 1], [], []>} : vector<48x28xf32>, vector<28x256xf32>, vector<48x256xf32> -> vector<48x256xf32>
    %60 = arith.addf %46, %59 : vector<48x256xf32>
    %c4 = arith.constant 4 : index
    %c0_41 = arith.constant 0 : index
    %c0_42 = arith.constant 0 : index
    %61 = vector.load %arg2[%c4, %c0_41, %c0_42] : memref<5x28x256xf32, #tpu.memory_space<vmem>>, vector<1x28x256xf32>
    %62 = vector.shape_cast %61 : vector<1x28x256xf32> to vector<28x256xf32>
    %63 = vector.extract_strided_slice %1 {offsets = [8, 0], sizes = [48, 28], strides = [1, 1]} : vector<56x28xf32> to vector<48x28xf32>
    %cst_43 = arith.constant dense<0.000000e+00> : vector<48x256xf32>
    %64 = tpu.matmul %63, %62, %cst_43 {dimension_numbers = #tpu.dot_dimension_numbers<[1], [0], [0], [1], [0, 0, 1, 1], [], []>} : vector<48x28xf32>, vector<28x256xf32>, vector<48x256xf32> -> vector<48x256xf32>
    %65 = arith.addf %51, %64 : vector<48x256xf32>
    %66 = vector.extract_strided_slice %3 {offsets = [8, 0], sizes = [48, 28], strides = [1, 1]} : vector<56x28xf32> to vector<48x28xf32>
    %cst_44 = arith.constant dense<0.000000e+00> : vector<48x256xf32>
    %67 = tpu.matmul %66, %62, %cst_44 {dimension_numbers = #tpu.dot_dimension_numbers<[1], [0], [0], [1], [0, 0, 1, 1], [], []>} : vector<48x28xf32>, vector<28x256xf32>, vector<48x256xf32> -> vector<48x256xf32>
    %68 = arith.addf %54, %67 : vector<48x256xf32>
    %69 = vector.extract_strided_slice %5 {offsets = [8, 0], sizes = [48, 28], strides = [1, 1]} : vector<56x28xf32> to vector<48x28xf32>
    %cst_45 = arith.constant dense<0.000000e+00> : vector<48x256xf32>
    %70 = tpu.matmul %69, %62, %cst_45 {dimension_numbers = #tpu.dot_dimension_numbers<[1], [0], [0], [1], [0, 0, 1, 1], [], []>} : vector<48x28xf32>, vector<28x256xf32>, vector<48x256xf32> -> vector<48x256xf32>
    %71 = arith.addf %57, %70 : vector<48x256xf32>
    %72 = vector.extract_strided_slice %7 {offsets = [8, 0], sizes = [48, 28], strides = [1, 1]} : vector<56x28xf32> to vector<48x28xf32>
    %cst_46 = arith.constant dense<0.000000e+00> : vector<48x256xf32>
    %73 = tpu.matmul %72, %62, %cst_46 {dimension_numbers = #tpu.dot_dimension_numbers<[1], [0], [0], [1], [0, 0, 1, 1], [], []>} : vector<48x28xf32>, vector<28x256xf32>, vector<48x256xf32> -> vector<48x256xf32>
    %74 = arith.addf %60, %73 : vector<48x256xf32>
    %75 = vector.broadcast %8 : vector<1x256xf32> to vector<48x256xf32>
    %76 = arith.addf %65, %75 : vector<48x256xf32>
    %cst_47 = arith.constant 0.000000e+00 : f32
    %77 = vector.broadcast %cst_47 : f32 to vector<48x256xf32>
    %78 = arith.maximumf %76, %77 : vector<48x256xf32>
    %79 = vector.broadcast %8 : vector<1x256xf32> to vector<48x256xf32>
    %80 = arith.addf %68, %79 : vector<48x256xf32>
    %cst_48 = arith.constant 0.000000e+00 : f32
    %81 = vector.broadcast %cst_48 : f32 to vector<48x256xf32>
    %82 = arith.maximumf %80, %81 : vector<48x256xf32>
    %83 = vector.broadcast %8 : vector<1x256xf32> to vector<48x256xf32>
    %84 = arith.addf %71, %83 : vector<48x256xf32>
    %cst_49 = arith.constant 0.000000e+00 : f32
    %85 = vector.broadcast %cst_49 : f32 to vector<48x256xf32>
    %86 = arith.maximumf %84, %85 : vector<48x256xf32>
    %87 = vector.broadcast %8 : vector<1x256xf32> to vector<48x256xf32>
    %88 = arith.addf %74, %87 : vector<48x256xf32>
    %cst_50 = arith.constant 0.000000e+00 : f32
    %89 = vector.broadcast %cst_50 : f32 to vector<48x256xf32>
    %90 = arith.maximumf %88, %89 : vector<48x256xf32>
    %91 = vector.extract_strided_slice %78 {offsets = [0, 0], sizes = [48, 128], strides = [1, 1]} : vector<48x256xf32> to vector<48x128xf32>
    %92 = vector.extract_strided_slice %78 {offsets = [0, 128], sizes = [48, 128], strides = [1, 1]} : vector<48x256xf32> to vector<48x128xf32>
    %93 = arith.maximumf %91, %92 : vector<48x128xf32>
    %94 = vector.extract_strided_slice %82 {offsets = [0, 0], sizes = [48, 128], strides = [1, 1]} : vector<48x256xf32> to vector<48x128xf32>
    %95 = vector.extract_strided_slice %82 {offsets = [0, 128], sizes = [48, 128], strides = [1, 1]} : vector<48x256xf32> to vector<48x128xf32>
    %96 = arith.maximumf %94, %95 : vector<48x128xf32>
    %97 = arith.maximumf %93, %96 : vector<48x128xf32>
    %98 = vector.extract_strided_slice %86 {offsets = [0, 0], sizes = [48, 128], strides = [1, 1]} : vector<48x256xf32> to vector<48x128xf32>
    %99 = vector.extract_strided_slice %86 {offsets = [0, 128], sizes = [48, 128], strides = [1, 1]} : vector<48x256xf32> to vector<48x128xf32>
    %100 = arith.maximumf %98, %99 : vector<48x128xf32>
    %101 = vector.extract_strided_slice %90 {offsets = [0, 0], sizes = [48, 128], strides = [1, 1]} : vector<48x256xf32> to vector<48x128xf32>
    %102 = vector.extract_strided_slice %90 {offsets = [0, 128], sizes = [48, 128], strides = [1, 1]} : vector<48x256xf32> to vector<48x128xf32>
    %103 = arith.maximumf %101, %102 : vector<48x128xf32>
    %104 = arith.maximumf %100, %103 : vector<48x128xf32>
    %c0_51 = arith.constant 0 : index
    %c0_52 = arith.constant 0 : index
    %105 = vector.load %arg5[%c0_51, %c0_52] : memref<1x256xf32, #tpu.memory_space<vmem>>, vector<1x256xf32>
    %c0_53 = arith.constant 0 : index
    %c0_54 = arith.constant 0 : index
    %c0_55 = arith.constant 0 : index
    %106 = vector.load %arg4[%c0_53, %c0_54, %c0_55] : memref<5x128x256xf32, #tpu.memory_space<vmem>>, vector<1x128x256xf32>
    %107 = vector.shape_cast %106 : vector<1x128x256xf32> to vector<128x256xf32>
    %108 = vector.extract_strided_slice %97 {offsets = [0, 0], sizes = [32, 128], strides = [1, 1]} : vector<48x128xf32> to vector<32x128xf32>
    %cst_56 = arith.constant dense<0.000000e+00> : vector<32x256xf32>
    %109 = tpu.matmul %108, %107, %cst_56 {dimension_numbers = #tpu.dot_dimension_numbers<[1], [0], [0], [1], [0, 0, 1, 1], [], []>} : vector<32x128xf32>, vector<128x256xf32>, vector<32x256xf32> -> vector<32x256xf32>
    %110 = vector.extract_strided_slice %104 {offsets = [0, 0], sizes = [32, 128], strides = [1, 1]} : vector<48x128xf32> to vector<32x128xf32>
    %cst_57 = arith.constant dense<0.000000e+00> : vector<32x256xf32>
    %111 = tpu.matmul %110, %107, %cst_57 {dimension_numbers = #tpu.dot_dimension_numbers<[1], [0], [0], [1], [0, 0, 1, 1], [], []>} : vector<32x128xf32>, vector<128x256xf32>, vector<32x256xf32> -> vector<32x256xf32>
    %c1_58 = arith.constant 1 : index
    %c0_59 = arith.constant 0 : index
    %c0_60 = arith.constant 0 : index
    %112 = vector.load %arg4[%c1_58, %c0_59, %c0_60] : memref<5x128x256xf32, #tpu.memory_space<vmem>>, vector<1x128x256xf32>
    %113 = vector.shape_cast %112 : vector<1x128x256xf32> to vector<128x256xf32>
    %114 = vector.extract_strided_slice %104 {offsets = [0, 0], sizes = [32, 128], strides = [1, 1]} : vector<48x128xf32> to vector<32x128xf32>
    %cst_61 = arith.constant dense<0.000000e+00> : vector<32x256xf32>
    %115 = tpu.matmul %114, %113, %cst_61 {dimension_numbers = #tpu.dot_dimension_numbers<[1], [0], [0], [1], [0, 0, 1, 1], [], []>} : vector<32x128xf32>, vector<128x256xf32>, vector<32x256xf32> -> vector<32x256xf32>
    %116 = arith.addf %109, %115 : vector<32x256xf32>
    %117 = vector.extract_strided_slice %97 {offsets = [8, 0], sizes = [32, 128], strides = [1, 1]} : vector<48x128xf32> to vector<32x128xf32>
    %cst_62 = arith.constant dense<0.000000e+00> : vector<32x256xf32>
    %118 = tpu.matmul %117, %113, %cst_62 {dimension_numbers = #tpu.dot_dimension_numbers<[1], [0], [0], [1], [0, 0, 1, 1], [], []>} : vector<32x128xf32>, vector<128x256xf32>, vector<32x256xf32> -> vector<32x256xf32>
    %119 = arith.addf %111, %118 : vector<32x256xf32>
    %c2_63 = arith.constant 2 : index
    %c0_64 = arith.constant 0 : index
    %c0_65 = arith.constant 0 : index
    %120 = vector.load %arg4[%c2_63, %c0_64, %c0_65] : memref<5x128x256xf32, #tpu.memory_space<vmem>>, vector<1x128x256xf32>
    %121 = vector.shape_cast %120 : vector<1x128x256xf32> to vector<128x256xf32>
    %122 = vector.extract_strided_slice %97 {offsets = [8, 0], sizes = [32, 128], strides = [1, 1]} : vector<48x128xf32> to vector<32x128xf32>
    %cst_66 = arith.constant dense<0.000000e+00> : vector<32x256xf32>
    %123 = tpu.matmul %122, %121, %cst_66 {dimension_numbers = #tpu.dot_dimension_numbers<[1], [0], [0], [1], [0, 0, 1, 1], [], []>} : vector<32x128xf32>, vector<128x256xf32>, vector<32x256xf32> -> vector<32x256xf32>
    %124 = arith.addf %116, %123 : vector<32x256xf32>
    %125 = vector.extract_strided_slice %104 {offsets = [8, 0], sizes = [32, 128], strides = [1, 1]} : vector<48x128xf32> to vector<32x128xf32>
    %cst_67 = arith.constant dense<0.000000e+00> : vector<32x256xf32>
    %126 = tpu.matmul %125, %121, %cst_67 {dimension_numbers = #tpu.dot_dimension_numbers<[1], [0], [0], [1], [0, 0, 1, 1], [], []>} : vector<32x128xf32>, vector<128x256xf32>, vector<32x256xf32> -> vector<32x256xf32>
    %127 = arith.addf %119, %126 : vector<32x256xf32>
    %c3_68 = arith.constant 3 : index
    %c0_69 = arith.constant 0 : index
    %c0_70 = arith.constant 0 : index
    %128 = vector.load %arg4[%c3_68, %c0_69, %c0_70] : memref<5x128x256xf32, #tpu.memory_space<vmem>>, vector<1x128x256xf32>
    %129 = vector.shape_cast %128 : vector<1x128x256xf32> to vector<128x256xf32>
    %130 = vector.extract_strided_slice %104 {offsets = [8, 0], sizes = [32, 128], strides = [1, 1]} : vector<48x128xf32> to vector<32x128xf32>
    %cst_71 = arith.constant dense<0.000000e+00> : vector<32x256xf32>
    %131 = tpu.matmul %130, %129, %cst_71 {dimension_numbers = #tpu.dot_dimension_numbers<[1], [0], [0], [1], [0, 0, 1, 1], [], []>} : vector<32x128xf32>, vector<128x256xf32>, vector<32x256xf32> -> vector<32x256xf32>
    %132 = arith.addf %124, %131 : vector<32x256xf32>
    %133 = vector.extract_strided_slice %97 {offsets = [16, 0], sizes = [32, 128], strides = [1, 1]} : vector<48x128xf32> to vector<32x128xf32>
    %cst_72 = arith.constant dense<0.000000e+00> : vector<32x256xf32>
    %134 = tpu.matmul %133, %129, %cst_72 {dimension_numbers = #tpu.dot_dimension_numbers<[1], [0], [0], [1], [0, 0, 1, 1], [], []>} : vector<32x128xf32>, vector<128x256xf32>, vector<32x256xf32> -> vector<32x256xf32>
    %135 = arith.addf %127, %134 : vector<32x256xf32>
    %c4_73 = arith.constant 4 : index
    %c0_74 = arith.constant 0 : index
    %c0_75 = arith.constant 0 : index
    %136 = vector.load %arg4[%c4_73, %c0_74, %c0_75] : memref<5x128x256xf32, #tpu.memory_space<vmem>>, vector<1x128x256xf32>
    %137 = vector.shape_cast %136 : vector<1x128x256xf32> to vector<128x256xf32>
    %138 = vector.extract_strided_slice %97 {offsets = [16, 0], sizes = [32, 128], strides = [1, 1]} : vector<48x128xf32> to vector<32x128xf32>
    %cst_76 = arith.constant dense<0.000000e+00> : vector<32x256xf32>
    %139 = tpu.matmul %138, %137, %cst_76 {dimension_numbers = #tpu.dot_dimension_numbers<[1], [0], [0], [1], [0, 0, 1, 1], [], []>} : vector<32x128xf32>, vector<128x256xf32>, vector<32x256xf32> -> vector<32x256xf32>
    %140 = arith.addf %132, %139 : vector<32x256xf32>
    %141 = vector.extract_strided_slice %104 {offsets = [16, 0], sizes = [32, 128], strides = [1, 1]} : vector<48x128xf32> to vector<32x128xf32>
    %cst_77 = arith.constant dense<0.000000e+00> : vector<32x256xf32>
    %142 = tpu.matmul %141, %137, %cst_77 {dimension_numbers = #tpu.dot_dimension_numbers<[1], [0], [0], [1], [0, 0, 1, 1], [], []>} : vector<32x128xf32>, vector<128x256xf32>, vector<32x256xf32> -> vector<32x256xf32>
    %143 = arith.addf %135, %142 : vector<32x256xf32>
    %144 = vector.broadcast %105 : vector<1x256xf32> to vector<32x256xf32>
    %145 = arith.addf %140, %144 : vector<32x256xf32>
    %cst_78 = arith.constant 0.000000e+00 : f32
    %146 = vector.broadcast %cst_78 : f32 to vector<32x256xf32>
    %147 = arith.maximumf %145, %146 : vector<32x256xf32>
    %148 = vector.broadcast %105 : vector<1x256xf32> to vector<32x256xf32>
    %149 = arith.addf %143, %148 : vector<32x256xf32>
    %cst_79 = arith.constant 0.000000e+00 : f32
    %150 = vector.broadcast %cst_79 : f32 to vector<32x256xf32>
    %151 = arith.maximumf %149, %150 : vector<32x256xf32>
    %152 = vector.extract_strided_slice %147 {offsets = [0, 0], sizes = [32, 128], strides = [1, 1]} : vector<32x256xf32> to vector<32x128xf32>
    %153 = vector.extract_strided_slice %147 {offsets = [0, 128], sizes = [32, 128], strides = [1, 1]} : vector<32x256xf32> to vector<32x128xf32>
    %154 = arith.maximumf %152, %153 : vector<32x128xf32>
    %155 = vector.extract_strided_slice %151 {offsets = [0, 0], sizes = [32, 128], strides = [1, 1]} : vector<32x256xf32> to vector<32x128xf32>
    %156 = vector.extract_strided_slice %151 {offsets = [0, 128], sizes = [32, 128], strides = [1, 1]} : vector<32x256xf32> to vector<32x128xf32>
    %157 = arith.maximumf %155, %156 : vector<32x128xf32>
    %158 = arith.maximumf %154, %157 : vector<32x128xf32>
    %159 = vector.extract_strided_slice %158 {offsets = [0, 0], sizes = [8, 128], strides = [1, 1]} : vector<32x128xf32> to vector<8x128xf32>
    %c0_80 = arith.constant 0 : index
    %c0_81 = arith.constant 0 : index
    %c0_82 = arith.constant 0 : index
    %160 = vector.load %arg6[%c0_80, %c0_81, %c0_82] : memref<4x128x128xf32, #tpu.memory_space<vmem>>, vector<1x128x128xf32>
    %161 = vector.shape_cast %160 : vector<1x128x128xf32> to vector<128x128xf32>
    %cst_83 = arith.constant dense<0.000000e+00> : vector<8x128xf32>
    %162 = tpu.matmul %159, %161, %cst_83 {dimension_numbers = #tpu.dot_dimension_numbers<[1], [0], [0], [1], [0, 0, 1, 1], [], []>} : vector<8x128xf32>, vector<128x128xf32>, vector<8x128xf32> -> vector<8x128xf32>
    %163 = vector.extract_strided_slice %158 {offsets = [8, 0], sizes = [8, 128], strides = [1, 1]} : vector<32x128xf32> to vector<8x128xf32>
    %c1_84 = arith.constant 1 : index
    %c0_85 = arith.constant 0 : index
    %c0_86 = arith.constant 0 : index
    %164 = vector.load %arg6[%c1_84, %c0_85, %c0_86] : memref<4x128x128xf32, #tpu.memory_space<vmem>>, vector<1x128x128xf32>
    %165 = vector.shape_cast %164 : vector<1x128x128xf32> to vector<128x128xf32>
    %cst_87 = arith.constant dense<0.000000e+00> : vector<8x128xf32>
    %166 = tpu.matmul %163, %165, %cst_87 {dimension_numbers = #tpu.dot_dimension_numbers<[1], [0], [0], [1], [0, 0, 1, 1], [], []>} : vector<8x128xf32>, vector<128x128xf32>, vector<8x128xf32> -> vector<8x128xf32>
    %167 = arith.addf %162, %166 : vector<8x128xf32>
    %168 = vector.extract_strided_slice %158 {offsets = [16, 0], sizes = [8, 128], strides = [1, 1]} : vector<32x128xf32> to vector<8x128xf32>
    %c2_88 = arith.constant 2 : index
    %c0_89 = arith.constant 0 : index
    %c0_90 = arith.constant 0 : index
    %169 = vector.load %arg6[%c2_88, %c0_89, %c0_90] : memref<4x128x128xf32, #tpu.memory_space<vmem>>, vector<1x128x128xf32>
    %170 = vector.shape_cast %169 : vector<1x128x128xf32> to vector<128x128xf32>
    %cst_91 = arith.constant dense<0.000000e+00> : vector<8x128xf32>
    %171 = tpu.matmul %168, %170, %cst_91 {dimension_numbers = #tpu.dot_dimension_numbers<[1], [0], [0], [1], [0, 0, 1, 1], [], []>} : vector<8x128xf32>, vector<128x128xf32>, vector<8x128xf32> -> vector<8x128xf32>
    %172 = arith.addf %167, %171 : vector<8x128xf32>
    %173 = vector.extract_strided_slice %158 {offsets = [24, 0], sizes = [8, 128], strides = [1, 1]} : vector<32x128xf32> to vector<8x128xf32>
    %c3_92 = arith.constant 3 : index
    %c0_93 = arith.constant 0 : index
    %c0_94 = arith.constant 0 : index
    %174 = vector.load %arg6[%c3_92, %c0_93, %c0_94] : memref<4x128x128xf32, #tpu.memory_space<vmem>>, vector<1x128x128xf32>
    %175 = vector.shape_cast %174 : vector<1x128x128xf32> to vector<128x128xf32>
    %cst_95 = arith.constant dense<0.000000e+00> : vector<8x128xf32>
    %176 = tpu.matmul %173, %175, %cst_95 {dimension_numbers = #tpu.dot_dimension_numbers<[1], [0], [0], [1], [0, 0, 1, 1], [], []>} : vector<8x128xf32>, vector<128x128xf32>, vector<8x128xf32> -> vector<8x128xf32>
    %177 = arith.addf %172, %176 : vector<8x128xf32>
    %c0_96 = arith.constant 0 : index
    %c0_97 = arith.constant 0 : index
    %178 = vector.load %arg7[%c0_96, %c0_97] : memref<1x128xf32, #tpu.memory_space<vmem>>, vector<1x128xf32>
    %179 = vector.broadcast %178 : vector<1x128xf32> to vector<8x128xf32>
    %180 = arith.addf %177, %179 : vector<8x128xf32>
    %cst_98 = arith.constant 0.000000e+00 : f32
    %181 = vector.broadcast %cst_98 : f32 to vector<8x128xf32>
    %182 = arith.maximumf %180, %181 : vector<8x128xf32>
    %c0_99 = arith.constant 0 : index
    %c0_100 = arith.constant 0 : index
    %183 = vector.load %arg8[%c0_99, %c0_100] : memref<128x128xf32, #tpu.memory_space<vmem>>, vector<128x128xf32>
    %cst_101 = arith.constant dense<0.000000e+00> : vector<8x128xf32>
    %184 = tpu.matmul %182, %183, %cst_101 {dimension_numbers = #tpu.dot_dimension_numbers<[1], [0], [0], [1], [0, 0, 1, 1], [], []>} : vector<8x128xf32>, vector<128x128xf32>, vector<8x128xf32> -> vector<8x128xf32>
    %c0_102 = arith.constant 0 : index
    %c0_103 = arith.constant 0 : index
    %185 = vector.load %arg9[%c0_102, %c0_103] : memref<1x128xf32, #tpu.memory_space<vmem>>, vector<1x128xf32>
    %186 = vector.broadcast %185 : vector<1x128xf32> to vector<8x128xf32>
    %187 = arith.addf %184, %186 : vector<8x128xf32>
    %cst_104 = arith.constant 0.000000e+00 : f32
    %188 = vector.broadcast %cst_104 : f32 to vector<8x128xf32>
    %189 = arith.maximumf %187, %188 : vector<8x128xf32>
    %c0_105 = arith.constant 0 : index
    %c0_106 = arith.constant 0 : index
    %190 = vector.load %arg10[%c0_105, %c0_106] : memref<128x128xf32, #tpu.memory_space<vmem>>, vector<128x128xf32>
    %cst_107 = arith.constant dense<0.000000e+00> : vector<8x128xf32>
    %191 = tpu.matmul %189, %190, %cst_107 {dimension_numbers = #tpu.dot_dimension_numbers<[1], [0], [0], [1], [0, 0, 1, 1], [], []>} : vector<8x128xf32>, vector<128x128xf32>, vector<8x128xf32> -> vector<8x128xf32>
    %c0_108 = arith.constant 0 : index
    %c0_109 = arith.constant 0 : index
    %192 = vector.load %arg11[%c0_108, %c0_109] : memref<1x128xf32, #tpu.memory_space<vmem>>, vector<1x128xf32>
    %193 = vector.broadcast %192 : vector<1x128xf32> to vector<8x128xf32>
    %194 = arith.addf %191, %193 : vector<8x128xf32>
    %c0_110 = arith.constant 0 : index
    %c0_111 = arith.constant 0 : index
    %195 = vector.load %arg12[%c0_110, %c0_111] : memref<8x128xf32, #tpu.memory_space<vmem>>, vector<8x128xf32>
    tpu.vector_store %arg12[%c0_110, %c0_111], %194 {strides = array<i32>} : memref<8x128xf32, #tpu.memory_space<vmem>>, vector<8x128xf32>,
    return
  }
  func.func @transform_0(%arg0: i32) -> (i32, i32, i32, i32) {
    %c0_i32 = arith.constant 0 : i32
    %c0_i32_0 = arith.constant 0 : i32
    %c0_i32_1 = arith.constant 0 : i32
    %c0_i32_2 = arith.constant 0 : i32
    return %arg0, %c0_i32, %c0_i32_0, %c0_i32_1 : i32, i32, i32, i32
  }
  func.func @transform_1(%arg0: i32) -> (i32, i32, i32) {
    %c0_i32 = arith.constant 0 : i32
    %c0_i32_0 = arith.constant 0 : i32
    %c0_i32_1 = arith.constant 0 : i32
    %c0_i32_2 = arith.constant 0 : i32
    return %c0_i32, %c0_i32_0, %c0_i32_1 : i32, i32, i32
  }
  func.func @transform_2(%arg0: i32) -> (i32, i32) {
    %c0_i32 = arith.constant 0 : i32
    %c0_i32_0 = arith.constant 0 : i32
    %c0_i32_1 = arith.constant 0 : i32
    return %c0_i32, %c0_i32_0 : i32, i32
  }
  func.func @transform_3(%arg0: i32) -> (i32, i32, i32) {
    %c0_i32 = arith.constant 0 : i32
    %c0_i32_0 = arith.constant 0 : i32
    %c0_i32_1 = arith.constant 0 : i32
    %c0_i32_2 = arith.constant 0 : i32
    return %c0_i32, %c0_i32_0, %c0_i32_1 : i32, i32, i32
  }
  func.func @transform_4(%arg0: i32) -> (i32, i32) {
    %c0_i32 = arith.constant 0 : i32
    %c0_i32_0 = arith.constant 0 : i32
    %c0_i32_1 = arith.constant 0 : i32
    return %c0_i32, %c0_i32_0 : i32, i32
  }
  func.func @transform_5(%arg0: i32) -> (i32, i32, i32) {
    %c0_i32 = arith.constant 0 : i32
    %c0_i32_0 = arith.constant 0 : i32
    %c0_i32_1 = arith.constant 0 : i32
    %c0_i32_2 = arith.constant 0 : i32
    return %c0_i32, %c0_i32_0, %c0_i32_1 : i32, i32, i32
  }
  func.func @transform_6(%arg0: i32) -> (i32, i32) {
    %c0_i32 = arith.constant 0 : i32
    %c0_i32_0 = arith.constant 0 : i32
    %c0_i32_1 = arith.constant 0 : i32
    return %c0_i32, %c0_i32_0 : i32, i32
  }
  func.func @transform_7(%arg0: i32) -> (i32, i32) {
    %c0_i32 = arith.constant 0 : i32
    %c0_i32_0 = arith.constant 0 : i32
    %c0_i32_1 = arith.constant 0 : i32
    return %c0_i32, %c0_i32_0 : i32, i32
  }
  func.func @transform_8(%arg0: i32) -> (i32, i32) {
    %c0_i32 = arith.constant 0 : i32
    %c0_i32_0 = arith.constant 0 : i32
    %c0_i32_1 = arith.constant 0 : i32
    return %c0_i32, %c0_i32_0 : i32, i32
  }
  func.func @transform_9(%arg0: i32) -> (i32, i32) {
    %c0_i32 = arith.constant 0 : i32
    %c0_i32_0 = arith.constant 0 : i32
    %c0_i32_1 = arith.constant 0 : i32
    return %c0_i32, %c0_i32_0 : i32, i32
  }
  func.func @transform_10(%arg0: i32) -> (i32, i32) {
    %c0_i32 = arith.constant 0 : i32
    %c0_i32_0 = arith.constant 0 : i32
    %c0_i32_1 = arith.constant 0 : i32
    return %c0_i32, %c0_i32_0 : i32, i32
  }
  func.func @transform_11(%arg0: i32) -> (i32, i32) {
    %c0_i32 = arith.constant 0 : i32
    %c0_i32_0 = arith.constant 0 : i32
    return %arg0, %c0_i32 : i32, i32
  }
}

</mosaic_0001>

<llo_original>
// kernel: fmnist_cnn_forward.1
$region0: #{fmnist_cnn_forward.1}
  #allocation0 [shape = 'u32[]', space=smem, size = 0x4, offset = 0x4, fixed_abs, tag = 'smem constant byte address 0x4 - core index']
  #allocation1 [shape = 'u32[144,128]{1,0:T(1,128)}', space=vmem, size = 0x12000, scoped, tag = 'internal scratch']
  %s0 = inlined_call_operand.vmem [shape: f32[2,4,56,28], index: 0, kind: input, shape index: {}]
  %s1 = inlined_call_operand.vmem [shape: f32[5,28,256], index: 1, kind: input, shape index: {}]
  %s2 = inlined_call_operand.vmem [shape: f32[1,256], index: 2, kind: input, shape index: {}]
  %s3 = inlined_call_operand.vmem [shape: f32[5,128,256], index: 3, kind: input, shape index: {}]
  %s4 = inlined_call_operand.vmem [shape: f32[1,256], index: 4, kind: input, shape index: {}]
  %s5 = inlined_call_operand.vmem [shape: f32[4,128,128], index: 5, kind: input, shape index: {}]
  %s6 = inlined_call_operand.vmem [shape: f32[1,128], index: 6, kind: input, shape index: {}]
  %s7 = inlined_call_operand.vmem [shape: f32[128,128], index: 7, kind: input, shape index: {}]
  %s8 = inlined_call_operand.vmem [shape: f32[1,128], index: 8, kind: input, shape index: {}]
  %s9 = inlined_call_operand.vmem [shape: f32[128,128], index: 9, kind: input, shape index: {}]
  %s10 = inlined_call_operand.vmem [shape: f32[1,128], index: 10, kind: input, shape index: {}]
  %s11 = inlined_call_operand.hbm [shape: f32[16,128], index: 11, kind: output, shape index: {}]
  %s12 = sld [smem:[#allocation0]]
  $region77: #{fmnist_cnn_forward.1} parent=0
    _
  %s14 = ssub.s32 1, %s12
  %s15 = scalar_select 0, %s14, %s12
  $region1: #{fmnist_cnn_forward.1} parent=0
    #allocation2 [shape = 'u8[8192]{0}', space=vmem, size = 0x2000, scoped, tag = 'output window, operand 0']
    #allocation3 [shape = 's32[2]{0}', space=sflag, size = 0x8, scoped, tag = 'scoped memory for fmnist_cnn_forward.1']
    %16 = vsyncpa [#allocation3], 0
    %s17 = scalar_lea.sflag [#allocation3], 1
    %18 = vsyncpa %s17, 0
    loop: start=0, step=1, limit=4
    $region2: #{fmnist_cnn_forward.1} parent=1 // loop_pre_header
      _
    $region3: #{fmnist_cnn_forward.1} parent=1 // loop_header
      %s20 = sphi 0, %s24
      %p21 = scmp.ge.s32.totalorder %s20, 4
      %s30 = sphi 0, %s32
      %s33 = sphi 0, %s30
      %s34 = sphi 0, %s33
      %s50 = sphi 0, %s34
      %s54 = sphi 0, %s54
      %s56 = sphi 0, %s54
      %s57 = sphi 0, %s56
      %s71 = sphi 0, %s57
      %s75 = sphi 0, %s75
      %s77 = sphi 0, %s75
      %s78 = sphi 0, %s77
      %s92 = sphi 0, %s78
      %s96 = sphi 0, %s96
      %s98 = sphi 0, %s96
      %s99 = sphi 0, %s98
      %s113 = sphi 0, %s99
      %s117 = sphi 0, %s117
      %s119 = sphi 0, %s117
      %s120 = sphi 0, %s119
      %s134 = sphi 0, %s120
      %s138 = sphi 0, %s138
      %s140 = sphi 0, %s138
      %s141 = sphi 0, %s140
      %s155 = sphi 0, %s141
      %s159 = sphi 0, %s159
      %s161 = sphi 0, %s159
      %s162 = sphi 0, %s161
      %s176 = sphi 0, %s162
      %s180 = sphi 0, %s180
      %s182 = sphi 0, %s180
      %s183 = sphi 0, %s182
      %s197 = sphi 0, %s183
      %s201 = sphi 0, %s201
      %s203 = sphi 0, %s201
      %s204 = sphi 0, %s203
      %s218 = sphi 0, %s204
      %s222 = sphi 0, %s222
      %s224 = sphi 0, %s222
      %s225 = sphi 0, %s224
      %s239 = sphi 0, %s225
      %s243 = sphi 0, %s243
      %s245 = sphi 0, %s243
      %s246 = sphi 0, %s245
      %s260 = sphi 0, %s246
      %s266 = sphi 0, %s268
      %s269 = sphi 0, %s266
      %s270 = sphi 0, %s269
      %s286 = sphi 0, %s270
    $region4: #{fmnist_cnn_forward.1} parent=1 // loop_header_branch
      %23 = sbr.rel (%p21) target = $region8
    $region5: #{fmnist_cnn_forward.1} parent=1 // loop_body
      %s25 = ssub.s32 %s20, 1
      %s26 = ssub.s32 %s20, 2
      %s27 = sadd.s32 %s20, 1
      %s28 = ssub.s32 %s20, %s27
      %p29 = scmp.eq.s32.totalorder %s28, 0
      %s31 = sadd.s32 %s30, 1
      %s32 = scalar_select %p29, %s30, %s31
      %p35 = pneg %p29
      %p36 = scmp.eq.s32.totalorder %s20, 1
      %p37 = por %p35, %p36
      %p38 = scmp.ne.s32.totalorder %s30, %s33
      %p39 = scmp.eq.s32.totalorder %s20, 0
      %p40 = por %p38, %p39
      %p41 = scmp.ne.s32.totalorder %s30, %s33
      %p42 = scmp.eq.s32.totalorder %s25, 1
      %p43 = por %p41, %p42
      %p44 = scmp.ne.s32.totalorder %s33, %s34
      %p45 = scmp.eq.s32.totalorder %s25, 0
      %p46 = por %p44, %p45
      %p47 = scmp.ne.s32.totalorder %s33, %s34
      %p48 = scmp.eq.s32.totalorder %s26, 1
      %p49 = por %p47, %p48
      %p51 = scmp.ne.s32.totalorder %s34, %s50
      %p52 = scmp.eq.s32.totalorder %s26, 0
      %p53 = por %p51, %p52
      %s55 = sadd.s32 %s54, 1
      %p58 = scmp.eq.s32.totalorder %s20, 1
      %p59 = scmp.ne.s32.totalorder %s54, %s56
      %p60 = scmp.eq.s32.totalorder %s20, 0
      %p61 = por %p59, %p60
      %p62 = scmp.ne.s32.totalorder %s54, %s56
      %p63 = scmp.eq.s32.totalorder %s25, 1
      %p64 = por %p62, %p63
      %p65 = scmp.ne.s32.totalorder %s56, %s57
      %p66 = scmp.eq.s32.totalorder %s25, 0
      %p67 = por %p65, %p66
      %p68 = scmp.ne.s32.totalorder %s56, %s57
      %p69 = scmp.eq.s32.totalorder %s26, 1
      %p70 = por %p68, %p69
      %p72 = scmp.ne.s32.totalorder %s57, %s71
      %p73 = scmp.eq.s32.totalorder %s26, 0
      %p74 = por %p72, %p73
      %s76 = sadd.s32 %s75, 1
      %p79 = scmp.eq.s32.totalorder %s20, 1
      %p80 = scmp.ne.s32.totalorder %s75, %s77
      %p81 = scmp.eq.s32.totalorder %s20, 0
      %p82 = por %p80, %p81
      %p83 = scmp.ne.s32.totalorder %s75, %s77
      %p84 = scmp.eq.s32.totalorder %s25, 1
      %p85 = por %p83, %p84
      %p86 = scmp.ne.s32.totalorder %s77, %s78
      %p87 = scmp.eq.s32.totalorder %s25, 0
      %p88 = por %p86, %p87
      %p89 = scmp.ne.s32.totalorder %s77, %s78
      %p90 = scmp.eq.s32.totalorder %s26, 1
      %p91 = por %p89, %p90
      %p93 = scmp.ne.s32.totalorder %s78, %s92
      %p94 = scmp.eq.s32.totalorder %s26, 0
      %p95 = por %p93, %p94
      %s97 = sadd.s32 %s96, 1
      %p100 = scmp.eq.s32.totalorder %s20, 1
      %p101 = scmp.ne.s32.totalorder %s96, %s98
      %p102 = scmp.eq.s32.totalorder %s20, 0
      %p103 = por %p101, %p102
      %p104 = scmp.ne.s32.totalorder %s96, %s98
      %p105 = scmp.eq.s32.totalorder %s25, 1
      %p106 = por %p104, %p105
      %p107 = scmp.ne.s32.totalorder %s98, %s99
      %p108 = scmp.eq.s32.totalorder %s25, 0
      %p109 = por %p107, %p108
      %p110 = scmp.ne.s32.totalorder %s98, %s99
      %p111 = scmp.eq.s32.totalorder %s26, 1
      %p112 = por %p110, %p111
      %p114 = scmp.ne.s32.totalorder %s99, %s113
      %p115 = scmp.eq.s32.totalorder %s26, 0
      %p116 = por %p114, %p115
      %s118 = sadd.s32 %s117, 1
      %p121 = scmp.eq.s32.totalorder %s20, 1
      %p122 = scmp.ne.s32.totalorder %s117, %s119
      %p123 = scmp.eq.s32.totalorder %s20, 0
      %p124 = por %p122, %p123
      %p125 = scmp.ne.s32.totalorder %s117, %s119
      %p126 = scmp.eq.s32.totalorder %s25, 1
      %p127 = por %p125, %p126
      %p128 = scmp.ne.s32.totalorder %s119, %s120
      %p129 = scmp.eq.s32.totalorder %s25, 0
      %p130 = por %p128, %p129
      %p131 = scmp.ne.s32.totalorder %s119, %s120
      %p132 = scmp.eq.s32.totalorder %s26, 1
      %p133 = por %p131, %p132
      %p135 = scmp.ne.s32.totalorder %s120, %s134
      %p136 = scmp.eq.s32.totalorder %s26, 0
      %p137 = por %p135, %p136
      %s139 = sadd.s32 %s138, 1
      %p142 = scmp.eq.s32.totalorder %s20, 1
      %p143 = scmp.ne.s32.totalorder %s138, %s140
      %p144 = scmp.eq.s32.totalorder %s20, 0
      %p145 = por %p143, %p144
      %p146 = scmp.ne.s32.totalorder %s138, %s140
      %p147 = scmp.eq.s32.totalorder %s25, 1
      %p148 = por %p146, %p147
      %p149 = scmp.ne.s32.totalorder %s140, %s141
      %p150 = scmp.eq.s32.totalorder %s25, 0
      %p151 = por %p149, %p150
      %p152 = scmp.ne.s32.totalorder %s140, %s141
      %p153 = scmp.eq.s32.totalorder %s26, 1
      %p154 = por %p152, %p153
      %p156 = scmp.ne.s32.totalorder %s141, %s155
      %p157 = scmp.eq.s32.totalorder %s26, 0
      %p158 = por %p156, %p157
      %s160 = sadd.s32 %s159, 1
      %p163 = scmp.eq.s32.totalorder %s20, 1
      %p164 = scmp.ne.s32.totalorder %s159, %s161
      %p165 = scmp.eq.s32.totalorder %s20, 0
      %p166 = por %p164, %p165
      %p167 = scmp.ne.s32.totalorder %s159, %s161
      %p168 = scmp.eq.s32.totalorder %s25, 1
      %p169 = por %p167, %p168
      %p170 = scmp.ne.s32.totalorder %s161, %s162
      %p171 = scmp.eq.s32.totalorder %s25, 0
      %p172 = por %p170, %p171
      %p173 = scmp.ne.s32.totalorder %s161, %s162
      %p174 = scmp.eq.s32.totalorder %s26, 1
      %p175 = por %p173, %p174
      %p177 = scmp.ne.s32.totalorder %s162, %s176
      %p178 = scmp.eq.s32.totalorder %s26, 0
      %p179 = por %p177, %p178
      %s181 = sadd.s32 %s180, 1
      %p184 = scmp.eq.s32.totalorder %s20, 1
      %p185 = scmp.ne.s32.totalorder %s180, %s182
      %p186 = scmp.eq.s32.totalorder %s20, 0
      %p187 = por %p185, %p186
      %p188 = scmp.ne.s32.totalorder %s180, %s182
      %p189 = scmp.eq.s32.totalorder %s25, 1
      %p190 = por %p188, %p189
      %p191 = scmp.ne.s32.totalorder %s182, %s183
      %p192 = scmp.eq.s32.totalorder %s25, 0
      %p193 = por %p191, %p192
      %p194 = scmp.ne.s32.totalorder %s182, %s183
      %p195 = scmp.eq.s32.totalorder %s26, 1
      %p196 = por %p194, %p195
      %p198 = scmp.ne.s32.totalorder %s183, %s197
      %p199 = scmp.eq.s32.totalorder %s26, 0
      %p200 = por %p198, %p199
      %s202 = sadd.s32 %s201, 1
      %p205 = scmp.eq.s32.totalorder %s20, 1
      %p206 = scmp.ne.s32.totalorder %s201, %s203
      %p207 = scmp.eq.s32.totalorder %s20, 0
      %p208 = por %p206, %p207
      %p209 = scmp.ne.s32.totalorder %s201, %s203
      %p210 = scmp.eq.s32.totalorder %s25, 1
      %p211 = por %p209, %p210
      %p212 = scmp.ne.s32.totalorder %s203, %s204
      %p213 = scmp.eq.s32.totalorder %s25, 0
      %p214 = por %p212, %p213
      %p215 = scmp.ne.s32.totalorder %s203, %s204
      %p216 = scmp.eq.s32.totalorder %s26, 1
      %p217 = por %p215, %p216
      %p219 = scmp.ne.s32.totalorder %s204, %s218
      %p220 = scmp.eq.s32.totalorder %s26, 0
      %p221 = por %p219, %p220
      %s223 = sadd.s32 %s222, 1
      %p226 = scmp.eq.s32.totalorder %s20, 1
      %p227 = scmp.ne.s32.totalorder %s222, %s224
      %p228 = scmp.eq.s32.totalorder %s20, 0
      %p229 = por %p227, %p228
      %p230 = scmp.ne.s32.totalorder %s222, %s224
      %p231 = scmp.eq.s32.totalorder %s25, 1
      %p232 = por %p230, %p231
      %p233 = scmp.ne.s32.totalorder %s224, %s225
      %p234 = scmp.eq.s32.totalorder %s25, 0
      %p235 = por %p233, %p234
      %p236 = scmp.ne.s32.totalorder %s224, %s225
      %p237 = scmp.eq.s32.totalorder %s26, 1
      %p238 = por %p236, %p237
      %p240 = scmp.ne.s32.totalorder %s225, %s239
      %p241 = scmp.eq.s32.totalorder %s26, 0
      %p242 = por %p240, %p241
      %s244 = sadd.s32 %s243, 1
      %p247 = scmp.eq.s32.totalorder %s20, 1
      %p248 = scmp.ne.s32.totalorder %s243, %s245
      %p249 = scmp.eq.s32.totalorder %s20, 0
      %p250 = por %p248, %p249
      %p251 = scmp.ne.s32.totalorder %s243, %s245
      %p252 = scmp.eq.s32.totalorder %s25, 1
      %p253 = por %p251, %p252
      %p254 = scmp.ne.s32.totalorder %s245, %s246
      %p255 = scmp.eq.s32.totalorder %s25, 0
      %p256 = por %p254, %p255
      %p257 = scmp.ne.s32.totalorder %s245, %s246
      %p258 = scmp.eq.s32.totalorder %s26, 1
      %p259 = por %p257, %p258
      %p261 = scmp.ne.s32.totalorder %s246, %s260
      %p262 = scmp.eq.s32.totalorder %s26, 0
      %p263 = por %p261, %p262
      %s264 = ssub.s32 %s20, %s27
      %p265 = scmp.eq.s32.totalorder %s264, 0
      %s267 = sadd.s32 %s266, 1
      %s268 = scalar_select %p265, %s266, %s267
      %p271 = pneg %p265
      %p272 = scmp.eq.s32.totalorder %s20, 1
      %p273 = por %p271, %p272
      %p274 = scmp.ne.s32.totalorder %s266, %s269
      %p275 = scmp.eq.s32.totalorder %s20, 0
      %p276 = por %p274, %p275
      %p277 = scmp.ne.s32.totalorder %s266, %s269
      %p278 = scmp.eq.s32.totalorder %s25, 1
      %p279 = por %p277, %p278
      %p280 = scmp.ne.s32.totalorder %s269, %s270
      %p281 = scmp.eq.s32.totalorder %s25, 0
      %p282 = por %p280, %p281
      %p283 = scmp.ne.s32.totalorder %s269, %s270
      %p284 = scmp.eq.s32.totalorder %s26, 1
      %p285 = por %p283, %p284
      %p287 = scmp.ne.s32.totalorder %s270, %s286
      %p288 = scmp.eq.s32.totalorder %s26, 0
      %p289 = por %p287, %p288
      %p290 = scmp.le.s32.totalorder 1, %s20
      %p291 = scmp.lt.s32.totalorder %s20, 3
      %p292 = pnand %p290, %p291
      %p293 = pneg %p292
      // Predicated region
      $region9: #{fmnist_cnn_forward.1} parent=5 // pred_check
        _
      $region10: #{fmnist_cnn_forward.1} parent=5 // pred_check_branch
        %295 = sbr.rel (%p292) target = $region12
      $region11: #{fmnist_cnn_forward.1} parent=5 // pred_region
        %s296 = ssub.s32 %s20, 1
        // Predicated region
        $region13: #{fmnist_cnn_forward.1} parent=11 // pred_check
          %p297 = pneg %p67
        $region14: #{fmnist_cnn_forward.1} parent=11 // pred_check_branch
          %299 = sbr.rel (%p297) target = $region16
        $region15: #{fmnist_cnn_forward.1} parent=11 // pred_region
          _
        $region16: #{fmnist_cnn_forward.1} parent=11 // pred_fallthru
          _
        // Predicated region
        $region17: #{fmnist_cnn_forward.1} parent=11 // pred_check
          %p300 = pneg %p88
        $region18: #{fmnist_cnn_forward.1} parent=11 // pred_check_branch
          %302 = sbr.rel (%p300) target = $region20
        $region19: #{fmnist_cnn_forward.1} parent=11 // pred_region
          _
        $region20: #{fmnist_cnn_forward.1} parent=11 // pred_fallthru
          _
        // Predicated region
        $region21: #{fmnist_cnn_forward.1} parent=11 // pred_check
          %p303 = pneg %p109
        $region22: #{fmnist_cnn_forward.1} parent=11 // pred_check_branch
          %305 = sbr.rel (%p303) target = $region24
        $region23: #{fmnist_cnn_forward.1} parent=11 // pred_region
          _
        $region24: #{fmnist_cnn_forward.1} parent=11 // pred_fallthru
          _
        // Predicated region
        $region25: #{fmnist_cnn_forward.1} parent=11 // pred_check
          %p306 = pneg %p130
        $region26: #{fmnist_cnn_forward.1} parent=11 // pred_check_branch
          %308 = sbr.rel (%p306) target = $region28
        $region27: #{fmnist_cnn_forward.1} parent=11 // pred_region
          _
        $region28: #{fmnist_cnn_forward.1} parent=11 // pred_fallthru
          _
        // Predicated region
        $region29: #{fmnist_cnn_forward.1} parent=11 // pred_check
          %p309 = pneg %p151
        $region30: #{fmnist_cnn_forward.1} parent=11 // pred_check_branch
          %311 = sbr.rel (%p309) target = $region32
        $region31: #{fmnist_cnn_forward.1} parent=11 // pred_region
          _
        $region32: #{fmnist_cnn_forward.1} parent=11 // pred_fallthru
          _
        // Predicated region
        $region33: #{fmnist_cnn_forward.1} parent=11 // pred_check
          %p312 = pneg %p172
        $region34: #{fmnist_cnn_forward.1} parent=11 // pred_check_branch
          %314 = sbr.rel (%p312) target = $region36
        $region35: #{fmnist_cnn_forward.1} parent=11 // pred_region
          _
        $region36: #{fmnist_cnn_forward.1} parent=11 // pred_fallthru
          _
        // Predicated region
        $region37: #{fmnist_cnn_forward.1} parent=11 // pred_check
          %p315 = pneg %p193
        $region38: #{fmnist_cnn_forward.1} parent=11 // pred_check_branch
          %317 = sbr.rel (%p315) target = $region40
        $region39: #{fmnist_cnn_forward.1} parent=11 // pred_region
          _
        $region40: #{fmnist_cnn_forward.1} parent=11 // pred_fallthru
          _
        // Predicated region
        $region41: #{fmnist_cnn_forward.1} parent=11 // pred_check
          %p318 = pneg %p214
        $region42: #{fmnist_cnn_forward.1} parent=11 // pred_check_branch
          %320 = sbr.rel (%p318) target = $region44
        $region43: #{fmnist_cnn_forward.1} parent=11 // pred_region
          _
        $region44: #{fmnist_cnn_forward.1} parent=11 // pred_fallthru
          _
        // Predicated region
        $region45: #{fmnist_cnn_forward.1} parent=11 // pred_check
          %p321 = pneg %p235
        $region46: #{fmnist_cnn_forward.1} parent=11 // pred_check_branch
          %323 = sbr.rel (%p321) target = $region48
        $region47: #{fmnist_cnn_forward.1} parent=11 // pred_region
          _
        $region48: #{fmnist_cnn_forward.1} parent=11 // pred_fallthru
          _
        // Predicated region
        $region49: #{fmnist_cnn_forward.1} parent=11 // pred_check
          %p324 = pneg %p256
        $region50: #{fmnist_cnn_forward.1} parent=11 // pred_check_branch
          %326 = sbr.rel (%p324) target = $region52
        $region51: #{fmnist_cnn_forward.1} parent=11 // pred_region
          _
        $region52: #{fmnist_cnn_forward.1} parent=11 // pred_fallthru
          _
      $region12: #{fmnist_cnn_forward.1} parent=5 // pred_fallthru
        _
      %p327 = scmp.lt.s32.totalorder %s20, 2
      // Predicated region
      $region53: #{fmnist_cnn_forward.1} parent=5 // pred_check
        %p328 = pneg %p327
      $region54: #{fmnist_cnn_forward.1} parent=5 // pred_check_branch
        %330 = sbr.rel (%p328) target = $region56
      $region55: #{fmnist_cnn_forward.1} parent=5 // pred_region
        // Predicated region
        $region57: #{fmnist_cnn_forward.1} parent=55 // pred_check
          %p331 = pneg %p40
        $region58: #{fmnist_cnn_forward.1} parent=55 // pred_check_branch
          %333 = sbr.rel (%p331) target = $region60
        $region59: #{fmnist_cnn_forward.1} parent=55 // pred_region
          %p334 = scmp.lt.s32.totalorder %s20, 1
          %s335 = scalar_select %p334, %s20, 1
          %s336 = smul.addr %s335, 28
          %s337 = smul.addr %s336, 8
          %s338 = scalar_lea.vmem %s0, %s337
        $region60: #{fmnist_cnn_forward.1} parent=55 // pred_fallthru
          _
      $region56: #{fmnist_cnn_forward.1} parent=5 // pred_fallthru
        _
      %p339 = scmp.le.s32.totalorder 1, %s20
      %p340 = scmp.lt.s32.totalorder %s20, 3
      %p341 = pnand %p339, %p340
      %p342 = pneg %p341
      // Predicated region
      $region61: #{fmnist_cnn_forward.1} parent=5 // pred_check
        _
      $region62: #{fmnist_cnn_forward.1} parent=5 // pred_check_branch
        %344 = sbr.rel (%p341) target = $region64
      $region63: #{fmnist_cnn_forward.1} parent=5 // pred_region
        %s345 = ssub.s32 %s20, 1
        %p346 = scmp.lt.s32.totalorder %s25, 1
        %s347 = scalar_select %p346, %s25, 1
        %s348 = smul.addr %s347, 28
        %s349 = smul.addr %s348, 8
        %s350 = scalar_lea.vmem %s0, %s349
        %p351 = pneg %p46
        %p352 = pneg %p43
        %p353 = pneg %p67
        %p354 = pneg %p64
        %p355 = pneg %p88
        %p356 = pneg %p85
        %p357 = pneg %p109
        %p358 = pneg %p106
        %p359 = pneg %p130
        %p360 = pneg %p127
        %p361 = pneg %p151
        %p362 = pneg %p148
        %p363 = pneg %p172
        %p364 = pneg %p169
        %p365 = pneg %p193
        %p366 = pneg %p190
        %p367 = pneg %p214
        %p368 = pneg %p211
        %p369 = pneg %p235
        %p370 = pneg %p232
        %p371 = pneg %p256
        %p372 = pneg %p253
        %p373 = pneg %p282
        %p374 = pneg %p279
        %s375 = sand.u32 %s269, 1
        %s376 = scalar_lea.sflag [#allocation3], %s375
        %s377 = sand.u32 %s269, 1
        %s378 = smul.addr %s377, 8
        %s379 = scalar_lea.vmem [#allocation2], %s378
        %p380 = scmp.lt.s32.totalorder %s25, 1
        %s381 = scalar_select %p380, %s25, 1
        %s382 = smul.addr %s381, 28
        %s383 = smul.addr %s382, 8
        %s384 = scalar_lea.vmem %s0, %s383
        %v385 = vld [vmem:[%s384] sm:$0xff]
        %v386 = vld [vmem:[%s384 + $0x8] sm:$0xff]
        %v387 = vld [vmem:[%s384 + $0x10] sm:$0xff]
        %v388 = vld [vmem:[%s384 + $0x18] sm:$0xff]
        %v389 = vld [vmem:[%s384 + $0x20] sm:$0xff]
        %v390 = vld [vmem:[%s384 + $0x28] sm:$0xff]
        %v391 = vld [vmem:[%s384 + $0x30] sm:$0xff]
        %s392 = scalar_lea.vmem %s384, 56
        %v393 = vld [vmem:[%s392] sm:$0xff]
        %v394 = vld [vmem:[%s392 + $0x8] sm:$0xff]
        %v395 = vld [vmem:[%s392 + $0x10] sm:$0xff]
        %v396 = vld [vmem:[%s392 + $0x18] sm:$0xff]
        %v397 = vld [vmem:[%s392 + $0x20] sm:$0xff]
        %v398 = vld [vmem:[%s392 + $0x28] sm:$0xff]
        %v399 = vld [vmem:[%s392 + $0x30] sm:$0xff]
        %s400 = scalar_lea.vmem %s384, 112
        %v401 = vld [vmem:[%s400] sm:$0xff]
        %v402 = vld [vmem:[%s400 + $0x8] sm:$0xff]
        %v403 = vld [vmem:[%s400 + $0x10] sm:$0xff]
        %v404 = vld [vmem:[%s400 + $0x18] sm:$0xff]
        %v405 = vld [vmem:[%s400 + $0x20] sm:$0xff]
        %v406 = vld [vmem:[%s400 + $0x28] sm:$0xff]
        %v407 = vld [vmem:[%s400 + $0x30] sm:$0xff]
        %s408 = scalar_lea.vmem %s384, 168
        %v409 = vld [vmem:[%s408] sm:$0xff]
        %v410 = vld [vmem:[%s408 + $0x8] sm:$0xff]
        %v411 = vld [vmem:[%s408 + $0x10] sm:$0xff]
        %v412 = vld [vmem:[%s408 + $0x18] sm:$0xff]
        %v413 = vld [vmem:[%s408 + $0x20] sm:$0xff]
        %v414 = vld [vmem:[%s408 + $0x28] sm:$0xff]
        %v415 = vld [vmem:[%s408 + $0x30] sm:$0xff]
        %v416 = vld [vmem:[%s2] sm:$0x3]
        %v417 = vld [vmem:[%s1] sm:$0xff]
        %v418 = vld [vmem:[%s1 + $0x8] sm:$0xff]
        %v419 = vld [vmem:[%s1 + $0x10] sm:$0xff]
        %v420 = vld [vmem:[%s1 + $0x18] sm:$0xff]
        %v421 = vld [vmem:[%s1 + $0x20] sm:$0xff]
        %v422 = vld [vmem:[%s1 + $0x28] sm:$0xff]
        %v423 = vld [vmem:[%s1 + $0x30] sm:$0xf]
        %v424 = vld [vmem:[%s1 + $0x38] sm:$0xf]
        %s425 = scalar_lea.vmem %s1, 64
        %v426 = vld [vmem:[%s425] sm:$0xff]
        %v427 = vld [vmem:[%s425 + $0x8] sm:$0xff]
        %v428 = vld [vmem:[%s425 + $0x10] sm:$0xff]
        %v429 = vld [vmem:[%s425 + $0x18] sm:$0xff]
        %v430 = vld [vmem:[%s425 + $0x20] sm:$0xff]
        %v431 = vld [vmem:[%s425 + $0x28] sm:$0xff]
        %v432 = vld [vmem:[%s425 + $0x30] sm:$0xf]
        %v433 = vld [vmem:[%s425 + $0x38] sm:$0xf]
        %vm434 = vcmask 228352
        %v436 = vsel %vm434, %v393, 0
        %v439 = vsel %vm434, %v394, 0
        %v442 = vsel %vm434, %v395, 0
        %v445 = vsel %vm434, %v396, 0
        %v448 = vsel %vm434, %v397, 0
        %v451 = vsel %vm434, %v398, 0
        %vm453 = vcmask 1043456
        %v455 = vsel %vm453, %v432, 0
        %v458 = vsel %vm453, %v433, 0
        %460 = vmatprep.subr.mxu0 0.0
        %461 = vmatpush1.msra.mxu0 0.0
        %462 = vmatprep.subr.mxu0 0.0
        %463 = vmatpush1.msra.mxu0 0.0
        %464 = vmatprep.subr.mxu0 0.0
        %465 = vmatpush1.msra.mxu0 0.0
        %466 = vmatprep.subr.mxu0 0.0
        %467 = vmatpush1.msra.mxu0 0.0
        %468 = vmatprep.subr.mxu0 0.0
        %469 = vmatpush1.msra.mxu0 0.0
        %470 = vmatprep.subr.mxu0 0.0
        %471 = vmatpush1.msra.mxu0 0.0
        %472 = vmatprep.subr.mxu0 0.0
        %473 = vmatpush1.msra.mxu0 0.0
        %474 = vmatprep.subr.mxu0 0.0
        %475 = vmatpush1.msra.mxu0 0.0
        %476 = vmatprep.subr.mxu0 0.0
        %477 = vmatpush1.msra.mxu0 0.0
        %478 = vmatprep.subr.mxu0 0.0
        %479 = vmatpush1.msra.mxu0 0.0
        %480 = vmatprep.subr.mxu0 0.0
        %481 = vmatpush1.msra.mxu0 0.0
        %482 = vmatprep.subr.mxu0 0.0
        %483 = vmatpush1.msra.mxu0 0.0
        %484 = vmatprep.subr.mxu0 %v458
        %485 = vmatpush1.msra.mxu0 %v455
        %486 = vmatprep.subr.mxu0 %v431
        %487 = vmatpush1.msra.mxu0 %v430
        %488 = vmatprep.subr.mxu0 %v429
        %489 = vmatpush1.msra.mxu0 %v428
        %490 = vmatprep.subr.mxu0 %v427
        %491 = vmatpush1.msra.mxu0 %v426
        %492 = vmatprep.subr.mxu0 0.0
        %493 = vmatpush2.msra.mxu0 0.0
        %494 = vmatprep.subr.mxu0 0.0
        %495 = vmatpush2.msra.mxu0 0.0
        %496 = vmatprep.subr.mxu0 0.0
        %497 = vmatpush2.msra.mxu0 0.0
        %498 = vmatprep.subr.mxu0 0.0
        %499 = vmatpush2.msra.mxu0 0.0
        %500 = vmatprep.subr.mxu0 0.0
        %501 = vmatpush2.msra.mxu0 0.0
        %502 = vmatprep.subr.mxu0 0.0
        %503 = vmatpush2.msra.mxu0 0.0
        %504 = vmatprep.subr.mxu0 0.0
        %505 = vmatpush2.msra.mxu0 0.0
        %506 = vmatprep.subr.mxu0 0.0
        %507 = vmatpush2.msra.mxu0 0.0
        %508 = vmatprep.subr.mxu0 0.0
        %509 = vmatpush2.msra.mxu0 0.0
        %510 = vmatprep.subr.mxu0 0.0
        %511 = vmatpush2.msra.mxu0 0.0
        %512 = vmatprep.subr.mxu0 0.0
        %513 = vmatpush2.msra.mxu0 0.0
        %514 = vmatprep.subr.mxu0 0.0
        %515 = vmatpush2.msra.mxu0 0.0
        %516 = vmatprep.subr.mxu0 0.0
        %517 = vmatpush2.msra.mxu0 0.0
        %518 = vmatprep.subr.mxu0 0.0
        %519 = vmatpush2.msra.mxu0 0.0
        %520 = vmatprep.subr.mxu0 0.0
        %521 = vmatpush2.msra.mxu0 0.0
        %522 = vmatprep.subr.mxu0 0.0
        %523 = vmatpush2.msra.mxu0 0.0
        %524 = vmatprep.mubr.f32.mxu0 0.0
        %525 = vmatmul.mubr.f32.gmra.mxu0 %v436
        %v526 = vpop.f32.mrf.mxu0
        %v527 = vadd.f32 0.0, %v526
        %v528 = vpop.f32.mrf.mxu0
        %v529 = vadd.f32 0.0, %v528
        %530 = vmatprep.mubr.f32.mxu0 0.0
        %531 = vmatmul.mubr.f32.gmra.mxu0 %v439
        %v532 = vpop.f32.mrf.mxu0
        %v533 = vadd.f32 0.0, %v532
        %v534 = vpop.f32.mrf.mxu0
        %v535 = vadd.f32 0.0, %v534
        %536 = vmatprep.mubr.f32.mxu0 0.0
        %537 = vmatmul.mubr.f32.gmra.mxu0 %v442
        %v538 = vpop.f32.mrf.mxu0
        %v539 = vadd.f32 0.0, %v538
        %v540 = vpop.f32.mrf.mxu0
        %v541 = vadd.f32 0.0, %v540
        %542 = vmatprep.mubr.f32.mxu0 0.0
        %543 = vmatmul.mubr.f32.gmra.mxu0 %v445
        %v544 = vpop.f32.mrf.mxu0
        %v545 = vadd.f32 0.0, %v544
        %v546 = vpop.f32.mrf.mxu0
        %v547 = vadd.f32 0.0, %v546
        %548 = vmatprep.mubr.f32.mxu0 0.0
        %549 = vmatmul.mubr.f32.gmra.mxu0 %v448
        %v550 = vpop.f32.mrf.mxu0
        %v551 = vadd.f32 0.0, %v550
        %v552 = vpop.f32.mrf.mxu0
        %v553 = vadd.f32 0.0, %v552
        %554 = vmatprep.mubr.f32.mxu0 0.0
        %555 = vmatmul.mubr.f32.gmra.mxu0 %v451
        %v556 = vpop.f32.mrf.mxu0
        %v557 = vadd.f32 0.0, %v556
        %v558 = vpop.f32.mrf.mxu0
        %v559 = vadd.f32 0.0, %v558
        %560 = vdwg.mxu0
        %v562 = vsel %vm434, %v385, 0
        %v565 = vsel %vm434, %v386, 0
        %v568 = vsel %vm434, %v387, 0
        %v571 = vsel %vm434, %v388, 0
        %v574 = vsel %vm434, %v389, 0
        %v577 = vsel %vm434, %v390, 0
        %v580 = vsel %vm453, %v423, 0
        %v583 = vsel %vm453, %v424, 0
        %585 = vmatprep.subr.mxu0 0.0
        %586 = vmatpush1.msra.mxu0 0.0
        %587 = vmatprep.subr.mxu0 0.0
        %588 = vmatpush1.msra.mxu0 0.0
        %589 = vmatprep.subr.mxu0 0.0
        %590 = vmatpush1.msra.mxu0 0.0
        %591 = vmatprep.subr.mxu0 0.0
        %592 = vmatpush1.msra.mxu0 0.0
        %593 = vmatprep.subr.mxu0 0.0
        %594 = vmatpush1.msra.mxu0 0.0
        %595 = vmatprep.subr.mxu0 0.0
        %596 = vmatpush1.msra.mxu0 0.0
        %597 = vmatprep.subr.mxu0 0.0
        %598 = vmatpush1.msra.mxu0 0.0
        %599 = vmatprep.subr.mxu0 0.0
        %600 = vmatpush1.msra.mxu0 0.0
        %601 = vmatprep.subr.mxu0 0.0
        %602 = vmatpush1.msra.mxu0 0.0
        %603 = vmatprep.subr.mxu0 0.0
        %604 = vmatpush1.msra.mxu0 0.0
        %605 = vmatprep.subr.mxu0 0.0
        %606 = vmatpush1.msra.mxu0 0.0
        %607 = vmatprep.subr.mxu0 0.0
        %608 = vmatpush1.msra.mxu0 0.0
        %609 = vmatprep.subr.mxu0 %v583
        %610 = vmatpush1.msra.mxu0 %v580
        %611 = vmatprep.subr.mxu0 %v422
        %612 = vmatpush1.msra.mxu0 %v421
        %613 = vmatprep.subr.mxu0 %v420
        %614 = vmatpush1.msra.mxu0 %v419
        %615 = vmatprep.subr.mxu0 %v418
        %616 = vmatpush1.msra.mxu0 %v417
        %617 = vmatprep.subr.mxu0 0.0
        %618 = vmatpush2.msra.mxu0 0.0
        %619 = vmatprep.subr.mxu0 0.0
        %620 = vmatpush2.msra.mxu0 0.0
        %621 = vmatprep.subr.mxu0 0.0
        %622 = vmatpush2.msra.mxu0 0.0
        %623 = vmatprep.subr.mxu0 0.0
        %624 = vmatpush2.msra.mxu0 0.0
        %625 = vmatprep.subr.mxu0 0.0
        %626 = vmatpush2.msra.mxu0 0.0
        %627 = vmatprep.subr.mxu0 0.0
        %628 = vmatpush2.msra.mxu0 0.0
        %629 = vmatprep.subr.mxu0 0.0
        %630 = vmatpush2.msra.mxu0 0.0
        %631 = vmatprep.subr.mxu0 0.0
        %632 = vmatpush2.msra.mxu0 0.0
        %633 = vmatprep.subr.mxu0 0.0
        %634 = vmatpush2.msra.mxu0 0.0
        %635 = vmatprep.subr.mxu0 0.0
        %636 = vmatpush2.msra.mxu0 0.0
        %637 = vmatprep.subr.mxu0 0.0
        %638 = vmatpush2.msra.mxu0 0.0
        %639 = vmatprep.subr.mxu0 0.0
        %640 = vmatpush2.msra.mxu0 0.0
        %641 = vmatprep.subr.mxu0 0.0
        %642 = vmatpush2.msra.mxu0 0.0
        %643 = vmatprep.subr.mxu0 0.0
        %644 = vmatpush2.msra.mxu0 0.0
        %645 = vmatprep.subr.mxu0 0.0
        %646 = vmatpush2.msra.mxu0 0.0
        %647 = vmatprep.subr.mxu0 0.0
        %648 = vmatpush2.msra.mxu0 0.0
        %649 = vmatprep.mubr.f32.mxu0 0.0
        %650 = vmatmul.mubr.f32.gmra.mxu0 %v562
        %v651 = vpop.f32.mrf.mxu0
        %v652 = vadd.f32 %v527, %v651
        %v653 = vpop.f32.mrf.mxu0
        %v654 = vadd.f32 %v529, %v653
        %655 = vmatprep.mubr.f32.mxu0 0.0
        %656 = vmatmul.mubr.f32.gmra.mxu0 %v565
        %v657 = vpop.f32.mrf.mxu0
        %v658 = vadd.f32 %v533, %v657
        %v659 = vpop.f32.mrf.mxu0
        %v660 = vadd.f32 %v535, %v659
        %661 = vmatprep.mubr.f32.mxu0 0.0
        %662 = vmatmul.mubr.f32.gmra.mxu0 %v568
        %v663 = vpop.f32.mrf.mxu0
        %v664 = vadd.f32 %v539, %v663
        %v665 = vpop.f32.mrf.mxu0
        %v666 = vadd.f32 %v541, %v665
        %667 = vmatprep.mubr.f32.mxu0 0.0
        %668 = vmatmul.mubr.f32.gmra.mxu0 %v571
        %v669 = vpop.f32.mrf.mxu0
        %v670 = vadd.f32 %v545, %v669
        %v671 = vpop.f32.mrf.mxu0
        %v672 = vadd.f32 %v547, %v671
        %673 = vmatprep.mubr.f32.mxu0 0.0
        %674 = vmatmul.mubr.f32.gmra.mxu0 %v574
        %v675 = vpop.f32.mrf.mxu0
        %v676 = vadd.f32 %v551, %v675
        %v677 = vpop.f32.mrf.mxu0
        %v678 = vadd.f32 %v553, %v677
        %679 = vmatprep.mubr.f32.mxu0 0.0
        %680 = vmatmul.mubr.f32.gmra.mxu0 %v577
        %v681 = vpop.f32.mrf.mxu0
        %v682 = vadd.f32 %v557, %v681
        %v683 = vpop.f32.mrf.mxu0
        %v684 = vadd.f32 %v559, %v683
        %685 = vdwg.mxu0
        %v687 = vsel %vm434, %v401, 0
        %v690 = vsel %vm434, %v402, 0
        %v693 = vsel %vm434, %v403, 0
        %v696 = vsel %vm434, %v404, 0
        %v699 = vsel %vm434, %v405, 0
        %v702 = vsel %vm434, %v406, 0
        %704 = vmatprep.subr.mxu0 0.0
        %705 = vmatpush1.msra.mxu0 0.0
        %706 = vmatprep.subr.mxu0 0.0
        %707 = vmatpush1.msra.mxu0 0.0
        %708 = vmatprep.subr.mxu0 0.0
        %709 = vmatpush1.msra.mxu0 0.0
        %710 = vmatprep.subr.mxu0 0.0
        %711 = vmatpush1.msra.mxu0 0.0
        %712 = vmatprep.subr.mxu0 0.0
        %713 = vmatpush1.msra.mxu0 0.0
        %714 = vmatprep.subr.mxu0 0.0
        %715 = vmatpush1.msra.mxu0 0.0
        %716 = vmatprep.subr.mxu0 0.0
        %717 = vmatpush1.msra.mxu0 0.0
        %718 = vmatprep.subr.mxu0 0.0
        %719 = vmatpush1.msra.mxu0 0.0
        %720 = vmatprep.subr.mxu0 0.0
        %721 = vmatpush1.msra.mxu0 0.0
        %722 = vmatprep.subr.mxu0 0.0
        %723 = vmatpush1.msra.mxu0 0.0
        %724 = vmatprep.subr.mxu0 0.0
        %725 = vmatpush1.msra.mxu0 0.0
        %726 = vmatprep.subr.mxu0 0.0
        %727 = vmatpush1.msra.mxu0 0.0
        %728 = vmatprep.subr.mxu0 %v458
        %729 = vmatpush1.msra.mxu0 %v455
        %730 = vmatprep.subr.mxu0 %v431
        %731 = vmatpush1.msra.mxu0 %v430
        %732 = vmatprep.subr.mxu0 %v429
        %733 = vmatpush1.msra.mxu0 %v428
        %734 = vmatprep.subr.mxu0 %v427
        %735 = vmatpush1.msra.mxu0 %v426
        %736 = vmatprep.subr.mxu0 0.0
        %737 = vmatpush2.msra.mxu0 0.0
        %738 = vmatprep.subr.mxu0 0.0
        %739 = vmatpush2.msra.mxu0 0.0
        %740 = vmatprep.subr.mxu0 0.0
        %741 = vmatpush2.msra.mxu0 0.0
        %742 = vmatprep.subr.mxu0 0.0
        %743 = vmatpush2.msra.mxu0 0.0
        %744 = vmatprep.subr.mxu0 0.0
        %745 = vmatpush2.msra.mxu0 0.0
        %746 = vmatprep.subr.mxu0 0.0
        %747 = vmatpush2.msra.mxu0 0.0
        %748 = vmatprep.subr.mxu0 0.0
        %749 = vmatpush2.msra.mxu0 0.0
        %750 = vmatprep.subr.mxu0 0.0
        %751 = vmatpush2.msra.mxu0 0.0
        %752 = vmatprep.subr.mxu0 0.0
        %753 = vmatpush2.msra.mxu0 0.0
        %754 = vmatprep.subr.mxu0 0.0
        %755 = vmatpush2.msra.mxu0 0.0
        %756 = vmatprep.subr.mxu0 0.0
        %757 = vmatpush2.msra.mxu0 0.0
        %758 = vmatprep.subr.mxu0 0.0
        %759 = vmatpush2.msra.mxu0 0.0
        %760 = vmatprep.subr.mxu0 0.0
        %761 = vmatpush2.msra.mxu0 0.0
        %762 = vmatprep.subr.mxu0 0.0
        %763 = vmatpush2.msra.mxu0 0.0
        %764 = vmatprep.subr.mxu0 0.0
        %765 = vmatpush2.msra.mxu0 0.0
        %766 = vmatprep.subr.mxu0 0.0
        %767 = vmatpush2.msra.mxu0 0.0
        %768 = vmatprep.mubr.f32.mxu0 0.0
        %769 = vmatmul.mubr.f32.gmra.mxu0 %v687
        %v770 = vpop.f32.mrf.mxu0
        %v771 = vadd.f32 0.0, %v770
        %v772 = vpop.f32.mrf.mxu0
        %v773 = vadd.f32 0.0, %v772
        %774 = vmatprep.mubr.f32.mxu0 0.0
        %775 = vmatmul.mubr.f32.gmra.mxu0 %v690
        %v776 = vpop.f32.mrf.mxu0
        %v777 = vadd.f32 0.0, %v776
        %v778 = vpop.f32.mrf.mxu0
        %v779 = vadd.f32 0.0, %v778
        %780 = vmatprep.mubr.f32.mxu0 0.0
        %781 = vmatmul.mubr.f32.gmra.mxu0 %v693
        %v782 = vpop.f32.mrf.mxu0
        %v783 = vadd.f32 0.0, %v782
        %v784 = vpop.f32.mrf.mxu0
        %v785 = vadd.f32 0.0, %v784
        %786 = vmatprep.mubr.f32.mxu0 0.0
        %787 = vmatmul.mubr.f32.gmra.mxu0 %v696
        %v788 = vpop.f32.mrf.mxu0
        %v789 = vadd.f32 0.0, %v788
        %v790 = vpop.f32.mrf.mxu0
        %v791 = vadd.f32 0.0, %v790
        %792 = vmatprep.mubr.f32.mxu0 0.0
        %793 = vmatmul.mubr.f32.gmra.mxu0 %v699
        %v794 = vpop.f32.mrf.mxu0
        %v795 = vadd.f32 0.0, %v794
        %v796 = vpop.f32.mrf.mxu0
        %v797 = vadd.f32 0.0, %v796
        %798 = vmatprep.mubr.f32.mxu0 0.0
        %799 = vmatmul.mubr.f32.gmra.mxu0 %v702
        %v800 = vpop.f32.mrf.mxu0
        %v801 = vadd.f32 0.0, %v800
        %v802 = vpop.f32.mrf.mxu0
        %v803 = vadd.f32 0.0, %v802
        %804 = vdwg.mxu0
        %805 = vmatprep.subr.mxu0 0.0
        %806 = vmatpush1.msra.mxu0 0.0
        %807 = vmatprep.subr.mxu0 0.0
        %808 = vmatpush1.msra.mxu0 0.0
        %809 = vmatprep.subr.mxu0 0.0
        %810 = vmatpush1.msra.mxu0 0.0
        %811 = vmatprep.subr.mxu0 0.0
        %812 = vmatpush1.msra.mxu0 0.0
        %813 = vmatprep.subr.mxu0 0.0
        %814 = vmatpush1.msra.mxu0 0.0
        %815 = vmatprep.subr.mxu0 0.0
        %816 = vmatpush1.msra.mxu0 0.0
        %817 = vmatprep.subr.mxu0 0.0
        %818 = vmatpush1.msra.mxu0 0.0
        %819 = vmatprep.subr.mxu0 0.0
        %820 = vmatpush1.msra.mxu0 0.0
        %821 = vmatprep.subr.mxu0 0.0
        %822 = vmatpush1.msra.mxu0 0.0
        %823 = vmatprep.subr.mxu0 0.0
        %824 = vmatpush1.msra.mxu0 0.0
        %825 = vmatprep.subr.mxu0 0.0
        %826 = vmatpush1.msra.mxu0 0.0
        %827 = vmatprep.subr.mxu0 0.0
        %828 = vmatpush1.msra.mxu0 0.0
        %829 = vmatprep.subr.mxu0 %v583
        %830 = vmatpush1.msra.mxu0 %v580
        %831 = vmatprep.subr.mxu0 %v422
        %832 = vmatpush1.msra.mxu0 %v421
        %833 = vmatprep.subr.mxu0 %v420
        %834 = vmatpush1.msra.mxu0 %v419
        %835 = vmatprep.subr.mxu0 %v418
        %836 = vmatpush1.msra.mxu0 %v417
        %837 = vmatprep.subr.mxu0 0.0
        %838 = vmatpush2.msra.mxu0 0.0
        %839 = vmatprep.subr.mxu0 0.0
        %840 = vmatpush2.msra.mxu0 0.0
        %841 = vmatprep.subr.mxu0 0.0
        %842 = vmatpush2.msra.mxu0 0.0
        %843 = vmatprep.subr.mxu0 0.0
        %844 = vmatpush2.msra.mxu0 0.0
        %845 = vmatprep.subr.mxu0 0.0
        %846 = vmatpush2.msra.mxu0 0.0
        %847 = vmatprep.subr.mxu0 0.0
        %848 = vmatpush2.msra.mxu0 0.0
        %849 = vmatprep.subr.mxu0 0.0
        %850 = vmatpush2.msra.mxu0 0.0
        %851 = vmatprep.subr.mxu0 0.0
        %852 = vmatpush2.msra.mxu0 0.0
        %853 = vmatprep.subr.mxu0 0.0
        %854 = vmatpush2.msra.mxu0 0.0
        %855 = vmatprep.subr.mxu0 0.0
        %856 = vmatpush2.msra.mxu0 0.0
        %857 = vmatprep.subr.mxu0 0.0
        %858 = vmatpush2.msra.mxu0 0.0
        %859 = vmatprep.subr.mxu0 0.0
        %860 = vmatpush2.msra.mxu0 0.0
        %861 = vmatprep.subr.mxu0 0.0
        %862 = vmatpush2.msra.mxu0 0.0
        %863 = vmatprep.subr.mxu0 0.0
        %864 = vmatpush2.msra.mxu0 0.0
        %865 = vmatprep.subr.mxu0 0.0
        %866 = vmatpush2.msra.mxu0 0.0
        %867 = vmatprep.subr.mxu0 0.0
        %868 = vmatpush2.msra.mxu0 0.0
        %869 = vmatprep.mubr.f32.mxu0 0.0
        %870 = vmatmul.mubr.f32.gmra.mxu0 %v436
        %v871 = vpop.f32.mrf.mxu0
        %v872 = vadd.f32 %v771, %v871
        %v873 = vpop.f32.mrf.mxu0
        %v874 = vadd.f32 %v773, %v873
        %875 = vmatprep.mubr.f32.mxu0 0.0
        %876 = vmatmul.mubr.f32.gmra.mxu0 %v439
        %v877 = vpop.f32.mrf.mxu0
        %v878 = vadd.f32 %v777, %v877
        %v879 = vpop.f32.mrf.mxu0
        %v880 = vadd.f32 %v779, %v879
        %881 = vmatprep.mubr.f32.mxu0 0.0
        %882 = vmatmul.mubr.f32.gmra.mxu0 %v442
        %v883 = vpop.f32.mrf.mxu0
        %v884 = vadd.f32 %v783, %v883
        %v885 = vpop.f32.mrf.mxu0
        %v886 = vadd.f32 %v785, %v885
        %887 = vmatprep.mubr.f32.mxu0 0.0
        %888 = vmatmul.mubr.f32.gmra.mxu0 %v445
        %v889 = vpop.f32.mrf.mxu0
        %v890 = vadd.f32 %v789, %v889
        %v891 = vpop.f32.mrf.mxu0
        %v892 = vadd.f32 %v791, %v891
        %893 = vmatprep.mubr.f32.mxu0 0.0
        %894 = vmatmul.mubr.f32.gmra.mxu0 %v448
        %v895 = vpop.f32.mrf.mxu0
        %v896 = vadd.f32 %v795, %v895
        %v897 = vpop.f32.mrf.mxu0
        %v898 = vadd.f32 %v797, %v897
        %899 = vmatprep.mubr.f32.mxu0 0.0
        %900 = vmatmul.mubr.f32.gmra.mxu0 %v451
        %v901 = vpop.f32.mrf.mxu0
        %v902 = vadd.f32 %v801, %v901
        %v903 = vpop.f32.mrf.mxu0
        %v904 = vadd.f32 %v803, %v903
        %905 = vdwg.mxu0
        %v907 = vsel %vm434, %v409, 0
        %v910 = vsel %vm434, %v410, 0
        %v913 = vsel %vm434, %v411, 0
        %v916 = vsel %vm434, %v412, 0
        %v919 = vsel %vm434, %v413, 0
        %v922 = vsel %vm434, %v414, 0
        %924 = vmatprep.subr.mxu0 0.0
        %925 = vmatpush1.msra.mxu0 0.0
        %926 = vmatprep.subr.mxu0 0.0
        %927 = vmatpush1.msra.mxu0 0.0
        %928 = vmatprep.subr.mxu0 0.0
        %929 = vmatpush1.msra.mxu0 0.0
        %930 = vmatprep.subr.mxu0 0.0
        %931 = vmatpush1.msra.mxu0 0.0
        %932 = vmatprep.subr.mxu0 0.0
        %933 = vmatpush1.msra.mxu0 0.0
        %934 = vmatprep.subr.mxu0 0.0
        %935 = vmatpush1.msra.mxu0 0.0
        %936 = vmatprep.subr.mxu0 0.0
        %937 = vmatpush1.msra.mxu0 0.0
        %938 = vmatprep.subr.mxu0 0.0
        %939 = vmatpush1.msra.mxu0 0.0
        %940 = vmatprep.subr.mxu0 0.0
        %941 = vmatpush1.msra.mxu0 0.0
        %942 = vmatprep.subr.mxu0 0.0
        %943 = vmatpush1.msra.mxu0 0.0
        %944 = vmatprep.subr.mxu0 0.0
        %945 = vmatpush1.msra.mxu0 0.0
        %946 = vmatprep.subr.mxu0 0.0
        %947 = vmatpush1.msra.mxu0 0.0
        %948 = vmatprep.subr.mxu0 %v458
        %949 = vmatpush1.msra.mxu0 %v455
        %950 = vmatprep.subr.mxu0 %v431
        %951 = vmatpush1.msra.mxu0 %v430
        %952 = vmatprep.subr.mxu0 %v429
        %953 = vmatpush1.msra.mxu0 %v428
        %954 = vmatprep.subr.mxu0 %v427
        %955 = vmatpush1.msra.mxu0 %v426
        %956 = vmatprep.subr.mxu0 0.0
        %957 = vmatpush2.msra.mxu0 0.0
        %958 = vmatprep.subr.mxu0 0.0
        %959 = vmatpush2.msra.mxu0 0.0
        %960 = vmatprep.subr.mxu0 0.0
        %961 = vmatpush2.msra.mxu0 0.0
        %962 = vmatprep.subr.mxu0 0.0
        %963 = vmatpush2.msra.mxu0 0.0
        %964 = vmatprep.subr.mxu0 0.0
        %965 = vmatpush2.msra.mxu0 0.0
        %966 = vmatprep.subr.mxu0 0.0
        %967 = vmatpush2.msra.mxu0 0.0
        %968 = vmatprep.subr.mxu0 0.0
        %969 = vmatpush2.msra.mxu0 0.0
        %970 = vmatprep.subr.mxu0 0.0
        %971 = vmatpush2.msra.mxu0 0.0
        %972 = vmatprep.subr.mxu0 0.0
        %973 = vmatpush2.msra.mxu0 0.0
        %974 = vmatprep.subr.mxu0 0.0
        %975 = vmatpush2.msra.mxu0 0.0
        %976 = vmatprep.subr.mxu0 0.0
        %977 = vmatpush2.msra.mxu0 0.0
        %978 = vmatprep.subr.mxu0 0.0
        %979 = vmatpush2.msra.mxu0 0.0
        %980 = vmatprep.subr.mxu0 0.0
        %981 = vmatpush2.msra.mxu0 0.0
        %982 = vmatprep.subr.mxu0 0.0
        %983 = vmatpush2.msra.mxu0 0.0
        %984 = vmatprep.subr.mxu0 0.0
        %985 = vmatpush2.msra.mxu0 0.0
        %986 = vmatprep.subr.mxu0 0.0
        %987 = vmatpush2.msra.mxu0 0.0
        %988 = vmatprep.mubr.f32.mxu0 0.0
        %989 = vmatmul.mubr.f32.gmra.mxu0 %v907
        %v990 = vpop.f32.mrf.mxu0
        %v991 = vadd.f32 0.0, %v990
        %v992 = vpop.f32.mrf.mxu0
        %v993 = vadd.f32 0.0, %v992
        %994 = vmatprep.mubr.f32.mxu0 0.0
        %995 = vmatmul.mubr.f32.gmra.mxu0 %v910
        %v996 = vpop.f32.mrf.mxu0
        %v997 = vadd.f32 0.0, %v996
        %v998 = vpop.f32.mrf.mxu0
        %v999 = vadd.f32 0.0, %v998
        %1000 = vmatprep.mubr.f32.mxu0 0.0
        %1001 = vmatmul.mubr.f32.gmra.mxu0 %v913
        %v1002 = vpop.f32.mrf.mxu0
        %v1003 = vadd.f32 0.0, %v1002
        %v1004 = vpop.f32.mrf.mxu0
        %v1005 = vadd.f32 0.0, %v1004
        %1006 = vmatprep.mubr.f32.mxu0 0.0
        %1007 = vmatmul.mubr.f32.gmra.mxu0 %v916
        %v1008 = vpop.f32.mrf.mxu0
        %v1009 = vadd.f32 0.0, %v1008
        %v1010 = vpop.f32.mrf.mxu0
        %v1011 = vadd.f32 0.0, %v1010
        %1012 = vmatprep.mubr.f32.mxu0 0.0
        %1013 = vmatmul.mubr.f32.gmra.mxu0 %v919
        %v1014 = vpop.f32.mrf.mxu0
        %v1015 = vadd.f32 0.0, %v1014
        %v1016 = vpop.f32.mrf.mxu0
        %v1017 = vadd.f32 0.0, %v1016
        %1018 = vmatprep.mubr.f32.mxu0 0.0
        %1019 = vmatmul.mubr.f32.gmra.mxu0 %v922
        %v1020 = vpop.f32.mrf.mxu0
        %v1021 = vadd.f32 0.0, %v1020
        %v1022 = vpop.f32.mrf.mxu0
        %v1023 = vadd.f32 0.0, %v1022
        %1024 = vdwg.mxu0
        %1025 = vmatprep.subr.mxu0 0.0
        %1026 = vmatpush1.msra.mxu0 0.0
        %1027 = vmatprep.subr.mxu0 0.0
        %1028 = vmatpush1.msra.mxu0 0.0
        %1029 = vmatprep.subr.mxu0 0.0
        %1030 = vmatpush1.msra.mxu0 0.0
        %1031 = vmatprep.subr.mxu0 0.0
        %1032 = vmatpush1.msra.mxu0 0.0
        %1033 = vmatprep.subr.mxu0 0.0
        %1034 = vmatpush1.msra.mxu0 0.0
        %1035 = vmatprep.subr.mxu0 0.0
        %1036 = vmatpush1.msra.mxu0 0.0
        %1037 = vmatprep.subr.mxu0 0.0
        %1038 = vmatpush1.msra.mxu0 0.0
        %1039 = vmatprep.subr.mxu0 0.0
        %1040 = vmatpush1.msra.mxu0 0.0
        %1041 = vmatprep.subr.mxu0 0.0
        %1042 = vmatpush1.msra.mxu0 0.0
        %1043 = vmatprep.subr.mxu0 0.0
        %1044 = vmatpush1.msra.mxu0 0.0
        %1045 = vmatprep.subr.mxu0 0.0
        %1046 = vmatpush1.msra.mxu0 0.0
        %1047 = vmatprep.subr.mxu0 0.0
        %1048 = vmatpush1.msra.mxu0 0.0
        %1049 = vmatprep.subr.mxu0 %v583
        %1050 = vmatpush1.msra.mxu0 %v580
        %1051 = vmatprep.subr.mxu0 %v422
        %1052 = vmatpush1.msra.mxu0 %v421
        %1053 = vmatprep.subr.mxu0 %v420
        %1054 = vmatpush1.msra.mxu0 %v419
        %1055 = vmatprep.subr.mxu0 %v418
        %1056 = vmatpush1.msra.mxu0 %v417
        %1057 = vmatprep.subr.mxu0 0.0
        %1058 = vmatpush2.msra.mxu0 0.0
        %1059 = vmatprep.subr.mxu0 0.0
        %1060 = vmatpush2.msra.mxu0 0.0
        %1061 = vmatprep.subr.mxu0 0.0
        %1062 = vmatpush2.msra.mxu0 0.0
        %1063 = vmatprep.subr.mxu0 0.0
        %1064 = vmatpush2.msra.mxu0 0.0
        %1065 = vmatprep.subr.mxu0 0.0
        %1066 = vmatpush2.msra.mxu0 0.0
        %1067 = vmatprep.subr.mxu0 0.0
        %1068 = vmatpush2.msra.mxu0 0.0
        %1069 = vmatprep.subr.mxu0 0.0
        %1070 = vmatpush2.msra.mxu0 0.0
        %1071 = vmatprep.subr.mxu0 0.0
        %1072 = vmatpush2.msra.mxu0 0.0
        %1073 = vmatprep.subr.mxu0 0.0
        %1074 = vmatpush2.msra.mxu0 0.0
        %1075 = vmatprep.subr.mxu0 0.0
        %1076 = vmatpush2.msra.mxu0 0.0
        %1077 = vmatprep.subr.mxu0 0.0
        %1078 = vmatpush2.msra.mxu0 0.0
        %1079 = vmatprep.subr.mxu0 0.0
        %1080 = vmatpush2.msra.mxu0 0.0
        %1081 = vmatprep.subr.mxu0 0.0
        %1082 = vmatpush2.msra.mxu0 0.0
        %1083 = vmatprep.subr.mxu0 0.0
        %1084 = vmatpush2.msra.mxu0 0.0
        %1085 = vmatprep.subr.mxu0 0.0
        %1086 = vmatpush2.msra.mxu0 0.0
        %1087 = vmatprep.subr.mxu0 0.0
        %1088 = vmatpush2.msra.mxu0 0.0
        %1089 = vmatprep.mubr.f32.mxu0 0.0
        %1090 = vmatmul.mubr.f32.gmra.mxu0 %v687
        %v1091 = vpop.f32.mrf.mxu0
        %v1092 = vadd.f32 %v991, %v1091
        %v1093 = vpop.f32.mrf.mxu0
        %v1094 = vadd.f32 %v993, %v1093
        %1095 = vmatprep.mubr.f32.mxu0 0.0
        %1096 = vmatmul.mubr.f32.gmra.mxu0 %v690
        %v1097 = vpop.f32.mrf.mxu0
        %v1098 = vadd.f32 %v997, %v1097
        %v1099 = vpop.f32.mrf.mxu0
        %v1100 = vadd.f32 %v999, %v1099
        %1101 = vmatprep.mubr.f32.mxu0 0.0
        %1102 = vmatmul.mubr.f32.gmra.mxu0 %v693
        %v1103 = vpop.f32.mrf.mxu0
        %v1104 = vadd.f32 %v1003, %v1103
        %v1105 = vpop.f32.mrf.mxu0
        %v1106 = vadd.f32 %v1005, %v1105
        %1107 = vmatprep.mubr.f32.mxu0 0.0
        %1108 = vmatmul.mubr.f32.gmra.mxu0 %v696
        %v1109 = vpop.f32.mrf.mxu0
        %v1110 = vadd.f32 %v1009, %v1109
        %v1111 = vpop.f32.mrf.mxu0
        %v1112 = vadd.f32 %v1011, %v1111
        %1113 = vmatprep.mubr.f32.mxu0 0.0
        %1114 = vmatmul.mubr.f32.gmra.mxu0 %v699
        %v1115 = vpop.f32.mrf.mxu0
        %v1116 = vadd.f32 %v1015, %v1115
        %v1117 = vpop.f32.mrf.mxu0
        %v1118 = vadd.f32 %v1017, %v1117
        %1119 = vmatprep.mubr.f32.mxu0 0.0
        %1120 = vmatmul.mubr.f32.gmra.mxu0 %v702
        %v1121 = vpop.f32.mrf.mxu0
        %v1122 = vadd.f32 %v1021, %v1121
        %v1123 = vpop.f32.mrf.mxu0
        %v1124 = vadd.f32 %v1023, %v1123
        %1125 = vdwg.mxu0
        %v1127 = vsel %vm434, %v391, 0
        %1129 = vmatprep.subr.mxu0 0.0
        %1130 = vmatpush1.msra.mxu0 0.0
        %1131 = vmatprep.subr.mxu0 0.0
        %1132 = vmatpush1.msra.mxu0 0.0
        %1133 = vmatprep.subr.mxu0 0.0
        %1134 = vmatpush1.msra.mxu0 0.0
        %1135 = vmatprep.subr.mxu0 0.0
        %1136 = vmatpush1.msra.mxu0 0.0
        %1137 = vmatprep.subr.mxu0 0.0
        %1138 = vmatpush1.msra.mxu0 0.0
        %1139 = vmatprep.subr.mxu0 0.0
        %1140 = vmatpush1.msra.mxu0 0.0
        %1141 = vmatprep.subr.mxu0 0.0
        %1142 = vmatpush1.msra.mxu0 0.0
        %1143 = vmatprep.subr.mxu0 0.0
        %1144 = vmatpush1.msra.mxu0 0.0
        %1145 = vmatprep.subr.mxu0 0.0
        %1146 = vmatpush1.msra.mxu0 0.0
        %1147 = vmatprep.subr.mxu0 0.0
        %1148 = vmatpush1.msra.mxu0 0.0
        %1149 = vmatprep.subr.mxu0 0.0
        %1150 = vmatpush1.msra.mxu0 0.0
        %1151 = vmatprep.subr.mxu0 0.0
        %1152 = vmatpush1.msra.mxu0 0.0
        %1153 = vmatprep.subr.mxu0 %v458
        %1154 = vmatpush1.msra.mxu0 %v455
        %1155 = vmatprep.subr.mxu0 %v431
        %1156 = vmatpush1.msra.mxu0 %v430
        %1157 = vmatprep.subr.mxu0 %v429
        %1158 = vmatpush1.msra.mxu0 %v428
        %1159 = vmatprep.subr.mxu0 %v427
        %1160 = vmatpush1.msra.mxu0 %v426
        %1161 = vmatprep.subr.mxu0 0.0
        %1162 = vmatpush2.msra.mxu0 0.0
        %1163 = vmatprep.subr.mxu0 0.0
        %1164 = vmatpush2.msra.mxu0 0.0
        %1165 = vmatprep.subr.mxu0 0.0
        %1166 = vmatpush2.msra.mxu0 0.0
        %1167 = vmatprep.subr.mxu0 0.0
        %1168 = vmatpush2.msra.mxu0 0.0
        %1169 = vmatprep.subr.mxu0 0.0
        %1170 = vmatpush2.msra.mxu0 0.0
        %1171 = vmatprep.subr.mxu0 0.0
        %1172 = vmatpush2.msra.mxu0 0.0
        %1173 = vmatprep.subr.mxu0 0.0
        %1174 = vmatpush2.msra.mxu0 0.0
        %1175 = vmatprep.subr.mxu0 0.0
        %1176 = vmatpush2.msra.mxu0 0.0
        %1177 = vmatprep.subr.mxu0 0.0
        %1178 = vmatpush2.msra.mxu0 0.0
        %1179 = vmatprep.subr.mxu0 0.0
        %1180 = vmatpush2.msra.mxu0 0.0
        %1181 = vmatprep.subr.mxu0 0.0
        %1182 = vmatpush2.msra.mxu0 0.0
        %1183 = vmatprep.subr.mxu0 0.0
        %1184 = vmatpush2.msra.mxu0 0.0
        %1185 = vmatprep.subr.mxu0 0.0
        %1186 = vmatpush2.msra.mxu0 0.0
        %1187 = vmatprep.subr.mxu0 0.0
        %1188 = vmatpush2.msra.mxu0 0.0
        %1189 = vmatprep.subr.mxu0 0.0
        %1190 = vmatpush2.msra.mxu0 0.0
        %1191 = vmatprep.subr.mxu0 0.0
        %1192 = vmatpush2.msra.mxu0 0.0
        %1193 = vmatprep.mubr.f32.mxu0 0.0
        %1194 = vmatmul.mubr.f32.gmra.mxu0 %v565
        %v1195 = vpop.f32.mrf.mxu0
        %v1196 = vadd.f32 0.0, %v1195
        %v1197 = vpop.f32.mrf.mxu0
        %v1198 = vadd.f32 0.0, %v1197
        %1199 = vmatprep.mubr.f32.mxu0 0.0
        %1200 = vmatmul.mubr.f32.gmra.mxu0 %v568
        %v1201 = vpop.f32.mrf.mxu0
        %v1202 = vadd.f32 0.0, %v1201
        %v1203 = vpop.f32.mrf.mxu0
        %v1204 = vadd.f32 0.0, %v1203
        %1205 = vmatprep.mubr.f32.mxu0 0.0
        %1206 = vmatmul.mubr.f32.gmra.mxu0 %v571
        %v1207 = vpop.f32.mrf.mxu0
        %v1208 = vadd.f32 0.0, %v1207
        %v1209 = vpop.f32.mrf.mxu0
        %v1210 = vadd.f32 0.0, %v1209
        %1211 = vmatprep.mubr.f32.mxu0 0.0
        %1212 = vmatmul.mubr.f32.gmra.mxu0 %v574
        %v1213 = vpop.f32.mrf.mxu0
        %v1214 = vadd.f32 0.0, %v1213
        %v1215 = vpop.f32.mrf.mxu0
        %v1216 = vadd.f32 0.0, %v1215
        %1217 = vmatprep.mubr.f32.mxu0 0.0
        %1218 = vmatmul.mubr.f32.gmra.mxu0 %v577
        %v1219 = vpop.f32.mrf.mxu0
        %v1220 = vadd.f32 0.0, %v1219
        %v1221 = vpop.f32.mrf.mxu0
        %v1222 = vadd.f32 0.0, %v1221
        %1223 = vmatprep.mubr.f32.mxu0 0.0
        %1224 = vmatmul.mubr.f32.gmra.mxu0 %v1127
        %v1225 = vpop.f32.mrf.mxu0
        %v1226 = vadd.f32 0.0, %v1225
        %v1227 = vpop.f32.mrf.mxu0
        %v1228 = vadd.f32 0.0, %v1227
        %1229 = vdwg.mxu0
        %1230 = vmatprep.subr.mxu0 0.0
        %1231 = vmatpush1.msra.mxu0 0.0
        %1232 = vmatprep.subr.mxu0 0.0
        %1233 = vmatpush1.msra.mxu0 0.0
        %1234 = vmatprep.subr.mxu0 0.0
        %1235 = vmatpush1.msra.mxu0 0.0
        %1236 = vmatprep.subr.mxu0 0.0
        %1237 = vmatpush1.msra.mxu0 0.0
        %1238 = vmatprep.subr.mxu0 0.0
        %1239 = vmatpush1.msra.mxu0 0.0
        %1240 = vmatprep.subr.mxu0 0.0
        %1241 = vmatpush1.msra.mxu0 0.0
        %1242 = vmatprep.subr.mxu0 0.0
        %1243 = vmatpush1.msra.mxu0 0.0
        %1244 = vmatprep.subr.mxu0 0.0
        %1245 = vmatpush1.msra.mxu0 0.0
        %1246 = vmatprep.subr.mxu0 0.0
        %1247 = vmatpush1.msra.mxu0 0.0
        %1248 = vmatprep.subr.mxu0 0.0
        %1249 = vmatpush1.msra.mxu0 0.0
        %1250 = vmatprep.subr.mxu0 0.0
        %1251 = vmatpush1.msra.mxu0 0.0
        %1252 = vmatprep.subr.mxu0 0.0
        %1253 = vmatpush1.msra.mxu0 0.0
        %1254 = vmatprep.subr.mxu0 %v583
        %1255 = vmatpush1.msra.mxu0 %v580
        %1256 = vmatprep.subr.mxu0 %v422
        %1257 = vmatpush1.msra.mxu0 %v421
        %1258 = vmatprep.subr.mxu0 %v420
        %1259 = vmatpush1.msra.mxu0 %v419
        %1260 = vmatprep.subr.mxu0 %v418
        %1261 = vmatpush1.msra.mxu0 %v417
        %1262 = vmatprep.subr.mxu0 0.0
        %1263 = vmatpush2.msra.mxu0 0.0
        %1264 = vmatprep.subr.mxu0 0.0
        %1265 = vmatpush2.msra.mxu0 0.0
        %1266 = vmatprep.subr.mxu0 0.0
        %1267 = vmatpush2.msra.mxu0 0.0
        %1268 = vmatprep.subr.mxu0 0.0
        %1269 = vmatpush2.msra.mxu0 0.0
        %1270 = vmatprep.subr.mxu0 0.0
        %1271 = vmatpush2.msra.mxu0 0.0
        %1272 = vmatprep.subr.mxu0 0.0
        %1273 = vmatpush2.msra.mxu0 0.0
        %1274 = vmatprep.subr.mxu0 0.0
        %1275 = vmatpush2.msra.mxu0 0.0
        %1276 = vmatprep.subr.mxu0 0.0
        %1277 = vmatpush2.msra.mxu0 0.0
        %1278 = vmatprep.subr.mxu0 0.0
        %1279 = vmatpush2.msra.mxu0 0.0
        %1280 = vmatprep.subr.mxu0 0.0
        %1281 = vmatpush2.msra.mxu0 0.0
        %1282 = vmatprep.subr.mxu0 0.0
        %1283 = vmatpush2.msra.mxu0 0.0
        %1284 = vmatprep.subr.mxu0 0.0
        %1285 = vmatpush2.msra.mxu0 0.0
        %1286 = vmatprep.subr.mxu0 0.0
        %1287 = vmatpush2.msra.mxu0 0.0
        %1288 = vmatprep.subr.mxu0 0.0
        %1289 = vmatpush2.msra.mxu0 0.0
        %1290 = vmatprep.subr.mxu0 0.0
        %1291 = vmatpush2.msra.mxu0 0.0
        %1292 = vmatprep.subr.mxu0 0.0
        %1293 = vmatpush2.msra.mxu0 0.0
        %1294 = vmatprep.mubr.f32.mxu0 0.0
        %1295 = vmatmul.mubr.f32.gmra.mxu0 %v907
        %v1296 = vpop.f32.mrf.mxu0
        %v1297 = vadd.f32 %v1196, %v1296
        %v1298 = vpop.f32.mrf.mxu0
        %v1299 = vadd.f32 %v1198, %v1298
        %1300 = vmatprep.mubr.f32.mxu0 0.0
        %1301 = vmatmul.mubr.f32.gmra.mxu0 %v910
        %v1302 = vpop.f32.mrf.mxu0
        %v1303 = vadd.f32 %v1202, %v1302
        %v1304 = vpop.f32.mrf.mxu0
        %v1305 = vadd.f32 %v1204, %v1304
        %1306 = vmatprep.mubr.f32.mxu0 0.0
        %1307 = vmatmul.mubr.f32.gmra.mxu0 %v913
        %v1308 = vpop.f32.mrf.mxu0
        %v1309 = vadd.f32 %v1208, %v1308
        %v1310 = vpop.f32.mrf.mxu0
        %v1311 = vadd.f32 %v1210, %v1310
        %1312 = vmatprep.mubr.f32.mxu0 0.0
        %1313 = vmatmul.mubr.f32.gmra.mxu0 %v916
        %v1314 = vpop.f32.mrf.mxu0
        %v1315 = vadd.f32 %v1214, %v1314
        %v1316 = vpop.f32.mrf.mxu0
        %v1317 = vadd.f32 %v1216, %v1316
        %1318 = vmatprep.mubr.f32.mxu0 0.0
        %1319 = vmatmul.mubr.f32.gmra.mxu0 %v919
        %v1320 = vpop.f32.mrf.mxu0
        %v1321 = vadd.f32 %v1220, %v1320
        %v1322 = vpop.f32.mrf.mxu0
        %v1323 = vadd.f32 %v1222, %v1322
        %1324 = vmatprep.mubr.f32.mxu0 0.0
        %1325 = vmatmul.mubr.f32.gmra.mxu0 %v922
        %v1326 = vpop.f32.mrf.mxu0
        %v1327 = vadd.f32 %v1226, %v1326
        %v1328 = vpop.f32.mrf.mxu0
        %v1329 = vadd.f32 %v1228, %v1328
        %1330 = vdwg.mxu0
        %s1331 = scalar_lea.vmem %s1, 128
        %v1332 = vld [vmem:[%s1331] sm:$0xff]
        %v1333 = vld [vmem:[%s1331 + $0x8] sm:$0xff]
        %v1334 = vld [vmem:[%s1331 + $0x10] sm:$0xff]
        %v1335 = vld [vmem:[%s1331 + $0x18] sm:$0xff]
        %v1336 = vld [vmem:[%s1331 + $0x20] sm:$0xff]
        %v1337 = vld [vmem:[%s1331 + $0x28] sm:$0xff]
        %v1338 = vld [vmem:[%s1331 + $0x30] sm:$0xf]
        %v1339 = vld [vmem:[%s1331 + $0x38] sm:$0xf]
        %v1341 = vsel %vm453, %v1338, 0
        %v1344 = vsel %vm453, %v1339, 0
        %1346 = vmatprep.subr.mxu0 0.0
        %1347 = vmatpush1.msra.mxu0 0.0
        %1348 = vmatprep.subr.mxu0 0.0
        %1349 = vmatpush1.msra.mxu0 0.0
        %1350 = vmatprep.subr.mxu0 0.0
        %1351 = vmatpush1.msra.mxu0 0.0
        %1352 = vmatprep.subr.mxu0 0.0
        %1353 = vmatpush1.msra.mxu0 0.0
        %1354 = vmatprep.subr.mxu0 0.0
        %1355 = vmatpush1.msra.mxu0 0.0
        %1356 = vmatprep.subr.mxu0 0.0
        %1357 = vmatpush1.msra.mxu0 0.0
        %1358 = vmatprep.subr.mxu0 0.0
        %1359 = vmatpush1.msra.mxu0 0.0
        %1360 = vmatprep.subr.mxu0 0.0
        %1361 = vmatpush1.msra.mxu0 0.0
        %1362 = vmatprep.subr.mxu0 0.0
        %1363 = vmatpush1.msra.mxu0 0.0
        %1364 = vmatprep.subr.mxu0 0.0
        %1365 = vmatpush1.msra.mxu0 0.0
        %1366 = vmatprep.subr.mxu0 0.0
        %1367 = vmatpush1.msra.mxu0 0.0
        %1368 = vmatprep.subr.mxu0 0.0
        %1369 = vmatpush1.msra.mxu0 0.0
        %1370 = vmatprep.subr.mxu0 %v1344
        %1371 = vmatpush1.msra.mxu0 %v1341
        %1372 = vmatprep.subr.mxu0 %v1337
        %1373 = vmatpush1.msra.mxu0 %v1336
        %1374 = vmatprep.subr.mxu0 %v1335
        %1375 = vmatpush1.msra.mxu0 %v1334
        %1376 = vmatprep.subr.mxu0 %v1333
        %1377 = vmatpush1.msra.mxu0 %v1332
        %1378 = vmatprep.subr.mxu0 0.0
        %1379 = vmatpush2.msra.mxu0 0.0
        %1380 = vmatprep.subr.mxu0 0.0
        %1381 = vmatpush2.msra.mxu0 0.0
        %1382 = vmatprep.subr.mxu0 0.0
        %1383 = vmatpush2.msra.mxu0 0.0
        %1384 = vmatprep.subr.mxu0 0.0
        %1385 = vmatpush2.msra.mxu0 0.0
        %1386 = vmatprep.subr.mxu0 0.0
        %1387 = vmatpush2.msra.mxu0 0.0
        %1388 = vmatprep.subr.mxu0 0.0
        %1389 = vmatpush2.msra.mxu0 0.0
        %1390 = vmatprep.subr.mxu0 0.0
        %1391 = vmatpush2.msra.mxu0 0.0
        %1392 = vmatprep.subr.mxu0 0.0
        %1393 = vmatpush2.msra.mxu0 0.0
        %1394 = vmatprep.subr.mxu0 0.0
        %1395 = vmatpush2.msra.mxu0 0.0
        %1396 = vmatprep.subr.mxu0 0.0
        %1397 = vmatpush2.msra.mxu0 0.0
        %1398 = vmatprep.subr.mxu0 0.0
        %1399 = vmatpush2.msra.mxu0 0.0
        %1400 = vmatprep.subr.mxu0 0.0
        %1401 = vmatpush2.msra.mxu0 0.0
        %1402 = vmatprep.subr.mxu0 0.0
        %1403 = vmatpush2.msra.mxu0 0.0
        %1404 = vmatprep.subr.mxu0 0.0
        %1405 = vmatpush2.msra.mxu0 0.0
        %1406 = vmatprep.subr.mxu0 0.0
        %1407 = vmatpush2.msra.mxu0 0.0
        %1408 = vmatprep.subr.mxu0 0.0
        %1409 = vmatpush2.msra.mxu0 0.0
        %1410 = vmatprep.mubr.f32.mxu0 0.0
        %1411 = vmatmul.mubr.f32.gmra.mxu0 %v687
        %v1412 = vpop.f32.mrf.mxu0
        %v1413 = vadd.f32 0.0, %v1412
        %v1414 = vpop.f32.mrf.mxu0
        %v1415 = vadd.f32 0.0, %v1414
        %1416 = vmatprep.mubr.f32.mxu0 0.0
        %1417 = vmatmul.mubr.f32.gmra.mxu0 %v690
        %v1418 = vpop.f32.mrf.mxu0
        %v1419 = vadd.f32 0.0, %v1418
        %v1420 = vpop.f32.mrf.mxu0
        %v1421 = vadd.f32 0.0, %v1420
        %1422 = vmatprep.mubr.f32.mxu0 0.0
        %1423 = vmatmul.mubr.f32.gmra.mxu0 %v693
        %v1424 = vpop.f32.mrf.mxu0
        %v1425 = vadd.f32 0.0, %v1424
        %v1426 = vpop.f32.mrf.mxu0
        %v1427 = vadd.f32 0.0, %v1426
        %1428 = vmatprep.mubr.f32.mxu0 0.0
        %1429 = vmatmul.mubr.f32.gmra.mxu0 %v696
        %v1430 = vpop.f32.mrf.mxu0
        %v1431 = vadd.f32 0.0, %v1430
        %v1432 = vpop.f32.mrf.mxu0
        %v1433 = vadd.f32 0.0, %v1432
        %1434 = vmatprep.mubr.f32.mxu0 0.0
        %1435 = vmatmul.mubr.f32.gmra.mxu0 %v699
        %v1436 = vpop.f32.mrf.mxu0
        %v1437 = vadd.f32 0.0, %v1436
        %v1438 = vpop.f32.mrf.mxu0
        %v1439 = vadd.f32 0.0, %v1438
        %1440 = vmatprep.mubr.f32.mxu0 0.0
        %1441 = vmatmul.mubr.f32.gmra.mxu0 %v702
        %v1442 = vpop.f32.mrf.mxu0
        %v1443 = vadd.f32 0.0, %v1442
        %v1444 = vpop.f32.mrf.mxu0
        %v1445 = vadd.f32 0.0, %v1444
        %1446 = vdwg.mxu0
        %v1447 = vadd.f32 %v652, %v1413
        %v1448 = vadd.f32 %v654, %v1415
        %v1449 = vadd.f32 %v658, %v1419
        %v1450 = vadd.f32 %v660, %v1421
        %v1451 = vadd.f32 %v664, %v1425
        %v1452 = vadd.f32 %v666, %v1427
        %v1453 = vadd.f32 %v670, %v1431
        %v1454 = vadd.f32 %v672, %v1433
        %v1455 = vadd.f32 %v676, %v1437
        %v1456 = vadd.f32 %v678, %v1439
        %v1457 = vadd.f32 %v682, %v1443
        %v1458 = vadd.f32 %v684, %v1445
        %1459 = vmatprep.subr.mxu0 0.0
        %1460 = vmatpush1.msra.mxu0 0.0
        %1461 = vmatprep.subr.mxu0 0.0
        %1462 = vmatpush1.msra.mxu0 0.0
        %1463 = vmatprep.subr.mxu0 0.0
        %1464 = vmatpush1.msra.mxu0 0.0
        %1465 = vmatprep.subr.mxu0 0.0
        %1466 = vmatpush1.msra.mxu0 0.0
        %1467 = vmatprep.subr.mxu0 0.0
        %1468 = vmatpush1.msra.mxu0 0.0
        %1469 = vmatprep.subr.mxu0 0.0
        %1470 = vmatpush1.msra.mxu0 0.0
        %1471 = vmatprep.subr.mxu0 0.0
        %1472 = vmatpush1.msra.mxu0 0.0
        %1473 = vmatprep.subr.mxu0 0.0
        %1474 = vmatpush1.msra.mxu0 0.0
        %1475 = vmatprep.subr.mxu0 0.0
        %1476 = vmatpush1.msra.mxu0 0.0
        %1477 = vmatprep.subr.mxu0 0.0
        %1478 = vmatpush1.msra.mxu0 0.0
        %1479 = vmatprep.subr.mxu0 0.0
        %1480 = vmatpush1.msra.mxu0 0.0
        %1481 = vmatprep.subr.mxu0 0.0
        %1482 = vmatpush1.msra.mxu0 0.0
        %1483 = vmatprep.subr.mxu0 %v1344
        %1484 = vmatpush1.msra.mxu0 %v1341
        %1485 = vmatprep.subr.mxu0 %v1337
        %1486 = vmatpush1.msra.mxu0 %v1336
        %1487 = vmatprep.subr.mxu0 %v1335
        %1488 = vmatpush1.msra.mxu0 %v1334
        %1489 = vmatprep.subr.mxu0 %v1333
        %1490 = vmatpush1.msra.mxu0 %v1332
        %1491 = vmatprep.subr.mxu0 0.0
        %1492 = vmatpush2.msra.mxu0 0.0
        %1493 = vmatprep.subr.mxu0 0.0
        %1494 = vmatpush2.msra.mxu0 0.0
        %1495 = vmatprep.subr.mxu0 0.0
        %1496 = vmatpush2.msra.mxu0 0.0
        %1497 = vmatprep.subr.mxu0 0.0
        %1498 = vmatpush2.msra.mxu0 0.0
        %1499 = vmatprep.subr.mxu0 0.0
        %1500 = vmatpush2.msra.mxu0 0.0
        %1501 = vmatprep.subr.mxu0 0.0
        %1502 = vmatpush2.msra.mxu0 0.0
        %1503 = vmatprep.subr.mxu0 0.0
        %1504 = vmatpush2.msra.mxu0 0.0
        %1505 = vmatprep.subr.mxu0 0.0
        %1506 = vmatpush2.msra.mxu0 0.0
        %1507 = vmatprep.subr.mxu0 0.0
        %1508 = vmatpush2.msra.mxu0 0.0
        %1509 = vmatprep.subr.mxu0 0.0
        %1510 = vmatpush2.msra.mxu0 0.0
        %1511 = vmatprep.subr.mxu0 0.0
        %1512 = vmatpush2.msra.mxu0 0.0
        %1513 = vmatprep.subr.mxu0 0.0
        %1514 = vmatpush2.msra.mxu0 0.0
        %1515 = vmatprep.subr.mxu0 0.0
        %1516 = vmatpush2.msra.mxu0 0.0
        %1517 = vmatprep.subr.mxu0 0.0
        %1518 = vmatpush2.msra.mxu0 0.0
        %1519 = vmatprep.subr.mxu0 0.0
        %1520 = vmatpush2.msra.mxu0 0.0
        %1521 = vmatprep.subr.mxu0 0.0
        %1522 = vmatpush2.msra.mxu0 0.0
        %1523 = vmatprep.mubr.f32.mxu0 0.0
        %1524 = vmatmul.mubr.f32.gmra.mxu0 %v907
        %v1525 = vpop.f32.mrf.mxu0
        %v1526 = vadd.f32 0.0, %v1525
        %v1527 = vpop.f32.mrf.mxu0
        %v1528 = vadd.f32 0.0, %v1527
        %1529 = vmatprep.mubr.f32.mxu0 0.0
        %1530 = vmatmul.mubr.f32.gmra.mxu0 %v910
        %v1531 = vpop.f32.mrf.mxu0
        %v1532 = vadd.f32 0.0, %v1531
        %v1533 = vpop.f32.mrf.mxu0
        %v1534 = vadd.f32 0.0, %v1533
        %1535 = vmatprep.mubr.f32.mxu0 0.0
        %1536 = vmatmul.mubr.f32.gmra.mxu0 %v913
        %v1537 = vpop.f32.mrf.mxu0
        %v1538 = vadd.f32 0.0, %v1537
        %v1539 = vpop.f32.mrf.mxu0
        %v1540 = vadd.f32 0.0, %v1539
        %1541 = vmatprep.mubr.f32.mxu0 0.0
        %1542 = vmatmul.mubr.f32.gmra.mxu0 %v916
        %v1543 = vpop.f32.mrf.mxu0
        %v1544 = vadd.f32 0.0, %v1543
        %v1545 = vpop.f32.mrf.mxu0
        %v1546 = vadd.f32 0.0, %v1545
        %1547 = vmatprep.mubr.f32.mxu0 0.0
        %1548 = vmatmul.mubr.f32.gmra.mxu0 %v919
        %v1549 = vpop.f32.mrf.mxu0
        %v1550 = vadd.f32 0.0, %v1549
        %v1551 = vpop.f32.mrf.mxu0
        %v1552 = vadd.f32 0.0, %v1551
        %1553 = vmatprep.mubr.f32.mxu0 0.0
        %1554 = vmatmul.mubr.f32.gmra.mxu0 %v922
        %v1555 = vpop.f32.mrf.mxu0
        %v1556 = vadd.f32 0.0, %v1555
        %v1557 = vpop.f32.mrf.mxu0
        %v1558 = vadd.f32 0.0, %v1557
        %1559 = vdwg.mxu0
        %v1560 = vadd.f32 %v872, %v1526
        %v1561 = vadd.f32 %v874, %v1528
        %v1562 = vadd.f32 %v878, %v1532
        %v1563 = vadd.f32 %v880, %v1534
        %v1564 = vadd.f32 %v884, %v1538
        %v1565 = vadd.f32 %v886, %v1540
        %v1566 = vadd.f32 %v890, %v1544
        %v1567 = vadd.f32 %v892, %v1546
        %v1568 = vadd.f32 %v896, %v1550
        %v1569 = vadd.f32 %v898, %v1552
        %v1570 = vadd.f32 %v902, %v1556
        %v1571 = vadd.f32 %v904, %v1558
        %1572 = vmatprep.subr.mxu0 0.0
        %1573 = vmatpush1.msra.mxu0 0.0
        %1574 = vmatprep.subr.mxu0 0.0
        %1575 = vmatpush1.msra.mxu0 0.0
        %1576 = vmatprep.subr.mxu0 0.0
        %1577 = vmatpush1.msra.mxu0 0.0
        %1578 = vmatprep.subr.mxu0 0.0
        %1579 = vmatpush1.msra.mxu0 0.0
        %1580 = vmatprep.subr.mxu0 0.0
        %1581 = vmatpush1.msra.mxu0 0.0
        %1582 = vmatprep.subr.mxu0 0.0
        %1583 = vmatpush1.msra.mxu0 0.0
        %1584 = vmatprep.subr.mxu0 0.0
        %1585 = vmatpush1.msra.mxu0 0.0
        %1586 = vmatprep.subr.mxu0 0.0
        %1587 = vmatpush1.msra.mxu0 0.0
        %1588 = vmatprep.subr.mxu0 0.0
        %1589 = vmatpush1.msra.mxu0 0.0
        %1590 = vmatprep.subr.mxu0 0.0
        %1591 = vmatpush1.msra.mxu0 0.0
        %1592 = vmatprep.subr.mxu0 0.0
        %1593 = vmatpush1.msra.mxu0 0.0
        %1594 = vmatprep.subr.mxu0 0.0
        %1595 = vmatpush1.msra.mxu0 0.0
        %1596 = vmatprep.subr.mxu0 %v1344
        %1597 = vmatpush1.msra.mxu0 %v1341
        %1598 = vmatprep.subr.mxu0 %v1337
        %1599 = vmatpush1.msra.mxu0 %v1336
        %1600 = vmatprep.subr.mxu0 %v1335
        %1601 = vmatpush1.msra.mxu0 %v1334
        %1602 = vmatprep.subr.mxu0 %v1333
        %1603 = vmatpush1.msra.mxu0 %v1332
        %1604 = vmatprep.subr.mxu0 0.0
        %1605 = vmatpush2.msra.mxu0 0.0
        %1606 = vmatprep.subr.mxu0 0.0
        %1607 = vmatpush2.msra.mxu0 0.0
        %1608 = vmatprep.subr.mxu0 0.0
        %1609 = vmatpush2.msra.mxu0 0.0
        %1610 = vmatprep.subr.mxu0 0.0
        %1611 = vmatpush2.msra.mxu0 0.0
        %1612 = vmatprep.subr.mxu0 0.0
        %1613 = vmatpush2.msra.mxu0 0.0
        %1614 = vmatprep.subr.mxu0 0.0
        %1615 = vmatpush2.msra.mxu0 0.0
        %1616 = vmatprep.subr.mxu0 0.0
        %1617 = vmatpush2.msra.mxu0 0.0
        %1618 = vmatprep.subr.mxu0 0.0
        %1619 = vmatpush2.msra.mxu0 0.0
        %1620 = vmatprep.subr.mxu0 0.0
        %1621 = vmatpush2.msra.mxu0 0.0
        %1622 = vmatprep.subr.mxu0 0.0
        %1623 = vmatpush2.msra.mxu0 0.0
        %1624 = vmatprep.subr.mxu0 0.0
        %1625 = vmatpush2.msra.mxu0 0.0
        %1626 = vmatprep.subr.mxu0 0.0
        %1627 = vmatpush2.msra.mxu0 0.0
        %1628 = vmatprep.subr.mxu0 0.0
        %1629 = vmatpush2.msra.mxu0 0.0
        %1630 = vmatprep.subr.mxu0 0.0
        %1631 = vmatpush2.msra.mxu0 0.0
        %1632 = vmatprep.subr.mxu0 0.0
        %1633 = vmatpush2.msra.mxu0 0.0
        %1634 = vmatprep.subr.mxu0 0.0
        %1635 = vmatpush2.msra.mxu0 0.0
        %1636 = vmatprep.mubr.f32.mxu0 0.0
        %1637 = vmatmul.mubr.f32.gmra.mxu0 %v565
        %v1638 = vpop.f32.mrf.mxu0
        %v1639 = vadd.f32 0.0, %v1638
        %v1640 = vpop.f32.mrf.mxu0
        %v1641 = vadd.f32 0.0, %v1640
        %1642 = vmatprep.mubr.f32.mxu0 0.0
        %1643 = vmatmul.mubr.f32.gmra.mxu0 %v568
        %v1644 = vpop.f32.mrf.mxu0
        %v1645 = vadd.f32 0.0, %v1644
        %v1646 = vpop.f32.mrf.mxu0
        %v1647 = vadd.f32 0.0, %v1646
        %1648 = vmatprep.mubr.f32.mxu0 0.0
        %1649 = vmatmul.mubr.f32.gmra.mxu0 %v571
        %v1650 = vpop.f32.mrf.mxu0
        %v1651 = vadd.f32 0.0, %v1650
        %v1652 = vpop.f32.mrf.mxu0
        %v1653 = vadd.f32 0.0, %v1652
        %1654 = vmatprep.mubr.f32.mxu0 0.0
        %1655 = vmatmul.mubr.f32.gmra.mxu0 %v574
        %v1656 = vpop.f32.mrf.mxu0
        %v1657 = vadd.f32 0.0, %v1656
        %v1658 = vpop.f32.mrf.mxu0
        %v1659 = vadd.f32 0.0, %v1658
        %1660 = vmatprep.mubr.f32.mxu0 0.0
        %1661 = vmatmul.mubr.f32.gmra.mxu0 %v577
        %v1662 = vpop.f32.mrf.mxu0
        %v1663 = vadd.f32 0.0, %v1662
        %v1664 = vpop.f32.mrf.mxu0
        %v1665 = vadd.f32 0.0, %v1664
        %1666 = vmatprep.mubr.f32.mxu0 0.0
        %1667 = vmatmul.mubr.f32.gmra.mxu0 %v1127
        %v1668 = vpop.f32.mrf.mxu0
        %v1669 = vadd.f32 0.0, %v1668
        %v1670 = vpop.f32.mrf.mxu0
        %v1671 = vadd.f32 0.0, %v1670
        %1672 = vdwg.mxu0
        %v1673 = vadd.f32 %v1092, %v1639
        %v1674 = vadd.f32 %v1094, %v1641
        %v1675 = vadd.f32 %v1098, %v1645
        %v1676 = vadd.f32 %v1100, %v1647
        %v1677 = vadd.f32 %v1104, %v1651
        %v1678 = vadd.f32 %v1106, %v1653
        %v1679 = vadd.f32 %v1110, %v1657
        %v1680 = vadd.f32 %v1112, %v1659
        %v1681 = vadd.f32 %v1116, %v1663
        %v1682 = vadd.f32 %v1118, %v1665
        %v1683 = vadd.f32 %v1122, %v1669
        %v1684 = vadd.f32 %v1124, %v1671
        %v1686 = vsel %vm434, %v399, 0
        %1688 = vmatprep.subr.mxu0 0.0
        %1689 = vmatpush1.msra.mxu0 0.0
        %1690 = vmatprep.subr.mxu0 0.0
        %1691 = vmatpush1.msra.mxu0 0.0
        %1692 = vmatprep.subr.mxu0 0.0
        %1693 = vmatpush1.msra.mxu0 0.0
        %1694 = vmatprep.subr.mxu0 0.0
        %1695 = vmatpush1.msra.mxu0 0.0
        %1696 = vmatprep.subr.mxu0 0.0
        %1697 = vmatpush1.msra.mxu0 0.0
        %1698 = vmatprep.subr.mxu0 0.0
        %1699 = vmatpush1.msra.mxu0 0.0
        %1700 = vmatprep.subr.mxu0 0.0
        %1701 = vmatpush1.msra.mxu0 0.0
        %1702 = vmatprep.subr.mxu0 0.0
        %1703 = vmatpush1.msra.mxu0 0.0
        %1704 = vmatprep.subr.mxu0 0.0
        %1705 = vmatpush1.msra.mxu0 0.0
        %1706 = vmatprep.subr.mxu0 0.0
        %1707 = vmatpush1.msra.mxu0 0.0
        %1708 = vmatprep.subr.mxu0 0.0
        %1709 = vmatpush1.msra.mxu0 0.0
        %1710 = vmatprep.subr.mxu0 0.0
        %1711 = vmatpush1.msra.mxu0 0.0
        %1712 = vmatprep.subr.mxu0 %v1344
        %1713 = vmatpush1.msra.mxu0 %v1341
        %1714 = vmatprep.subr.mxu0 %v1337
        %1715 = vmatpush1.msra.mxu0 %v1336
        %1716 = vmatprep.subr.mxu0 %v1335
        %1717 = vmatpush1.msra.mxu0 %v1334
        %1718 = vmatprep.subr.mxu0 %v1333
        %1719 = vmatpush1.msra.mxu0 %v1332
        %1720 = vmatprep.subr.mxu0 0.0
        %1721 = vmatpush2.msra.mxu0 0.0
        %1722 = vmatprep.subr.mxu0 0.0
        %1723 = vmatpush2.msra.mxu0 0.0
        %1724 = vmatprep.subr.mxu0 0.0
        %1725 = vmatpush2.msra.mxu0 0.0
        %1726 = vmatprep.subr.mxu0 0.0
        %1727 = vmatpush2.msra.mxu0 0.0
        %1728 = vmatprep.subr.mxu0 0.0
        %1729 = vmatpush2.msra.mxu0 0.0
        %1730 = vmatprep.subr.mxu0 0.0
        %1731 = vmatpush2.msra.mxu0 0.0
        %1732 = vmatprep.subr.mxu0 0.0
        %1733 = vmatpush2.msra.mxu0 0.0
        %1734 = vmatprep.subr.mxu0 0.0
        %1735 = vmatpush2.msra.mxu0 0.0
        %1736 = vmatprep.subr.mxu0 0.0
        %1737 = vmatpush2.msra.mxu0 0.0
        %1738 = vmatprep.subr.mxu0 0.0
        %1739 = vmatpush2.msra.mxu0 0.0
        %1740 = vmatprep.subr.mxu0 0.0
        %1741 = vmatpush2.msra.mxu0 0.0
        %1742 = vmatprep.subr.mxu0 0.0
        %1743 = vmatpush2.msra.mxu0 0.0
        %1744 = vmatprep.subr.mxu0 0.0
        %1745 = vmatpush2.msra.mxu0 0.0
        %1746 = vmatprep.subr.mxu0 0.0
        %1747 = vmatpush2.msra.mxu0 0.0
        %1748 = vmatprep.subr.mxu0 0.0
        %1749 = vmatpush2.msra.mxu0 0.0
        %1750 = vmatprep.subr.mxu0 0.0
        %1751 = vmatpush2.msra.mxu0 0.0
        %1752 = vmatprep.mubr.f32.mxu0 0.0
        %1753 = vmatmul.mubr.f32.gmra.mxu0 %v439
        %v1754 = vpop.f32.mrf.mxu0
        %v1755 = vadd.f32 0.0, %v1754
        %v1756 = vpop.f32.mrf.mxu0
        %v1757 = vadd.f32 0.0, %v1756
        %1758 = vmatprep.mubr.f32.mxu0 0.0
        %1759 = vmatmul.mubr.f32.gmra.mxu0 %v442
        %v1760 = vpop.f32.mrf.mxu0
        %v1761 = vadd.f32 0.0, %v1760
        %v1762 = vpop.f32.mrf.mxu0
        %v1763 = vadd.f32 0.0, %v1762
        %1764 = vmatprep.mubr.f32.mxu0 0.0
        %1765 = vmatmul.mubr.f32.gmra.mxu0 %v445
        %v1766 = vpop.f32.mrf.mxu0
        %v1767 = vadd.f32 0.0, %v1766
        %v1768 = vpop.f32.mrf.mxu0
        %v1769 = vadd.f32 0.0, %v1768
        %1770 = vmatprep.mubr.f32.mxu0 0.0
        %1771 = vmatmul.mubr.f32.gmra.mxu0 %v448
        %v1772 = vpop.f32.mrf.mxu0
        %v1773 = vadd.f32 0.0, %v1772
        %v1774 = vpop.f32.mrf.mxu0
        %v1775 = vadd.f32 0.0, %v1774
        %1776 = vmatprep.mubr.f32.mxu0 0.0
        %1777 = vmatmul.mubr.f32.gmra.mxu0 %v451
        %v1778 = vpop.f32.mrf.mxu0
        %v1779 = vadd.f32 0.0, %v1778
        %v1780 = vpop.f32.mrf.mxu0
        %v1781 = vadd.f32 0.0, %v1780
        %1782 = vmatprep.mubr.f32.mxu0 0.0
        %1783 = vmatmul.mubr.f32.gmra.mxu0 %v1686
        %v1784 = vpop.f32.mrf.mxu0
        %v1785 = vadd.f32 0.0, %v1784
        %v1786 = vpop.f32.mrf.mxu0
        %v1787 = vadd.f32 0.0, %v1786
        %1788 = vdwg.mxu0
        %v1789 = vadd.f32 %v1297, %v1755
        %v1790 = vadd.f32 %v1299, %v1757
        %v1791 = vadd.f32 %v1303, %v1761
        %v1792 = vadd.f32 %v1305, %v1763
        %v1793 = vadd.f32 %v1309, %v1767
        %v1794 = vadd.f32 %v1311, %v1769
        %v1795 = vadd.f32 %v1315, %v1773
        %v1796 = vadd.f32 %v1317, %v1775
        %v1797 = vadd.f32 %v1321, %v1779
        %v1798 = vadd.f32 %v1323, %v1781
        %v1799 = vadd.f32 %v1327, %v1785
        %v1800 = vadd.f32 %v1329, %v1787
        %s1801 = scalar_lea.vmem %s1, 192
        %v1802 = vld [vmem:[%s1801] sm:$0xff]
        %v1803 = vld [vmem:[%s1801 + $0x8] sm:$0xff]
        %v1804 = vld [vmem:[%s1801 + $0x10] sm:$0xff]
        %v1805 = vld [vmem:[%s1801 + $0x18] sm:$0xff]
        %v1806 = vld [vmem:[%s1801 + $0x20] sm:$0xff]
        %v1807 = vld [vmem:[%s1801 + $0x28] sm:$0xff]
        %v1808 = vld [vmem:[%s1801 + $0x30] sm:$0xf]
        %v1809 = vld [vmem:[%s1801 + $0x38] sm:$0xf]
        %v1811 = vsel %vm453, %v1808, 0
        %v1814 = vsel %vm453, %v1809, 0
        %1816 = vmatprep.subr.mxu0 0.0
        %1817 = vmatpush1.msra.mxu0 0.0
        %1818 = vmatprep.subr.mxu0 0.0
        %1819 = vmatpush1.msra.mxu0 0.0
        %1820 = vmatprep.subr.mxu0 0.0
        %1821 = vmatpush1.msra.mxu0 0.0
        %1822 = vmatprep.subr.mxu0 0.0
        %1823 = vmatpush1.msra.mxu0 0.0
        %1824 = vmatprep.subr.mxu0 0.0
        %1825 = vmatpush1.msra.mxu0 0.0
        %1826 = vmatprep.subr.mxu0 0.0
        %1827 = vmatpush1.msra.mxu0 0.0
        %1828 = vmatprep.subr.mxu0 0.0
        %1829 = vmatpush1.msra.mxu0 0.0
        %1830 = vmatprep.subr.mxu0 0.0
        %1831 = vmatpush1.msra.mxu0 0.0
        %1832 = vmatprep.subr.mxu0 0.0
        %1833 = vmatpush1.msra.mxu0 0.0
        %1834 = vmatprep.subr.mxu0 0.0
        %1835 = vmatpush1.msra.mxu0 0.0
        %1836 = vmatprep.subr.mxu0 0.0
        %1837 = vmatpush1.msra.mxu0 0.0
        %1838 = vmatprep.subr.mxu0 0.0
        %1839 = vmatpush1.msra.mxu0 0.0
        %1840 = vmatprep.subr.mxu0 %v1814
        %1841 = vmatpush1.msra.mxu0 %v1811
        %1842 = vmatprep.subr.mxu0 %v1807
        %1843 = vmatpush1.msra.mxu0 %v1806
        %1844 = vmatprep.subr.mxu0 %v1805
        %1845 = vmatpush1.msra.mxu0 %v1804
        %1846 = vmatprep.subr.mxu0 %v1803
        %1847 = vmatpush1.msra.mxu0 %v1802
        %1848 = vmatprep.subr.mxu0 0.0
        %1849 = vmatpush2.msra.mxu0 0.0
        %1850 = vmatprep.subr.mxu0 0.0
        %1851 = vmatpush2.msra.mxu0 0.0
        %1852 = vmatprep.subr.mxu0 0.0
        %1853 = vmatpush2.msra.mxu0 0.0
        %1854 = vmatprep.subr.mxu0 0.0
        %1855 = vmatpush2.msra.mxu0 0.0
        %1856 = vmatprep.subr.mxu0 0.0
        %1857 = vmatpush2.msra.mxu0 0.0
        %1858 = vmatprep.subr.mxu0 0.0
        %1859 = vmatpush2.msra.mxu0 0.0
        %1860 = vmatprep.subr.mxu0 0.0
        %1861 = vmatpush2.msra.mxu0 0.0
        %1862 = vmatprep.subr.mxu0 0.0
        %1863 = vmatpush2.msra.mxu0 0.0
        %1864 = vmatprep.subr.mxu0 0.0
        %1865 = vmatpush2.msra.mxu0 0.0
        %1866 = vmatprep.subr.mxu0 0.0
        %1867 = vmatpush2.msra.mxu0 0.0
        %1868 = vmatprep.subr.mxu0 0.0
        %1869 = vmatpush2.msra.mxu0 0.0
        %1870 = vmatprep.subr.mxu0 0.0
        %1871 = vmatpush2.msra.mxu0 0.0
        %1872 = vmatprep.subr.mxu0 0.0
        %1873 = vmatpush2.msra.mxu0 0.0
        %1874 = vmatprep.subr.mxu0 0.0
        %1875 = vmatpush2.msra.mxu0 0.0
        %1876 = vmatprep.subr.mxu0 0.0
        %1877 = vmatpush2.msra.mxu0 0.0
        %1878 = vmatprep.subr.mxu0 0.0
        %1879 = vmatpush2.msra.mxu0 0.0
        %1880 = vmatprep.mubr.f32.mxu0 0.0
        %1881 = vmatmul.mubr.f32.gmra.mxu0 %v907
        %v1882 = vpop.f32.mrf.mxu0
        %v1883 = vadd.f32 0.0, %v1882
        %v1884 = vpop.f32.mrf.mxu0
        %v1885 = vadd.f32 0.0, %v1884
        %1886 = vmatprep.mubr.f32.mxu0 0.0
        %1887 = vmatmul.mubr.f32.gmra.mxu0 %v910
        %v1888 = vpop.f32.mrf.mxu0
        %v1889 = vadd.f32 0.0, %v1888
        %v1890 = vpop.f32.mrf.mxu0
        %v1891 = vadd.f32 0.0, %v1890
        %1892 = vmatprep.mubr.f32.mxu0 0.0
        %1893 = vmatmul.mubr.f32.gmra.mxu0 %v913
        %v1894 = vpop.f32.mrf.mxu0
        %v1895 = vadd.f32 0.0, %v1894
        %v1896 = vpop.f32.mrf.mxu0
        %v1897 = vadd.f32 0.0, %v1896
        %1898 = vmatprep.mubr.f32.mxu0 0.0
        %1899 = vmatmul.mubr.f32.gmra.mxu0 %v916
        %v1900 = vpop.f32.mrf.mxu0
        %v1901 = vadd.f32 0.0, %v1900
        %v1902 = vpop.f32.mrf.mxu0
        %v1903 = vadd.f32 0.0, %v1902
        %1904 = vmatprep.mubr.f32.mxu0 0.0
        %1905 = vmatmul.mubr.f32.gmra.mxu0 %v919
        %v1906 = vpop.f32.mrf.mxu0
        %v1907 = vadd.f32 0.0, %v1906
        %v1908 = vpop.f32.mrf.mxu0
        %v1909 = vadd.f32 0.0, %v1908
        %1910 = vmatprep.mubr.f32.mxu0 0.0
        %1911 = vmatmul.mubr.f32.gmra.mxu0 %v922
        %v1912 = vpop.f32.mrf.mxu0
        %v1913 = vadd.f32 0.0, %v1912
        %v1914 = vpop.f32.mrf.mxu0
        %v1915 = vadd.f32 0.0, %v1914
        %1916 = vdwg.mxu0
        %v1917 = vadd.f32 %v1447, %v1883
        %v1918 = vadd.f32 %v1448, %v1885
        %v1919 = vadd.f32 %v1449, %v1889
        %v1920 = vadd.f32 %v1450, %v1891
        %v1921 = vadd.f32 %v1451, %v1895
        %v1922 = vadd.f32 %v1452, %v1897
        %v1923 = vadd.f32 %v1453, %v1901
        %v1924 = vadd.f32 %v1454, %v1903
        %v1925 = vadd.f32 %v1455, %v1907
        %v1926 = vadd.f32 %v1456, %v1909
        %v1927 = vadd.f32 %v1457, %v1913
        %v1928 = vadd.f32 %v1458, %v1915
        %1929 = vmatprep.subr.mxu0 0.0
        %1930 = vmatpush1.msra.mxu0 0.0
        %1931 = vmatprep.subr.mxu0 0.0
        %1932 = vmatpush1.msra.mxu0 0.0
        %1933 = vmatprep.subr.mxu0 0.0
        %1934 = vmatpush1.msra.mxu0 0.0
        %1935 = vmatprep.subr.mxu0 0.0
        %1936 = vmatpush1.msra.mxu0 0.0
        %1937 = vmatprep.subr.mxu0 0.0
        %1938 = vmatpush1.msra.mxu0 0.0
        %1939 = vmatprep.subr.mxu0 0.0
        %1940 = vmatpush1.msra.mxu0 0.0
        %1941 = vmatprep.subr.mxu0 0.0
        %1942 = vmatpush1.msra.mxu0 0.0
        %1943 = vmatprep.subr.mxu0 0.0
        %1944 = vmatpush1.msra.mxu0 0.0
        %1945 = vmatprep.subr.mxu0 0.0
        %1946 = vmatpush1.msra.mxu0 0.0
        %1947 = vmatprep.subr.mxu0 0.0
        %1948 = vmatpush1.msra.mxu0 0.0
        %1949 = vmatprep.subr.mxu0 0.0
        %1950 = vmatpush1.msra.mxu0 0.0
        %1951 = vmatprep.subr.mxu0 0.0
        %1952 = vmatpush1.msra.mxu0 0.0
        %1953 = vmatprep.subr.mxu0 %v1814
        %1954 = vmatpush1.msra.mxu0 %v1811
        %1955 = vmatprep.subr.mxu0 %v1807
        %1956 = vmatpush1.msra.mxu0 %v1806
        %1957 = vmatprep.subr.mxu0 %v1805
        %1958 = vmatpush1.msra.mxu0 %v1804
        %1959 = vmatprep.subr.mxu0 %v1803
        %1960 = vmatpush1.msra.mxu0 %v1802
        %1961 = vmatprep.subr.mxu0 0.0
        %1962 = vmatpush2.msra.mxu0 0.0
        %1963 = vmatprep.subr.mxu0 0.0
        %1964 = vmatpush2.msra.mxu0 0.0
        %1965 = vmatprep.subr.mxu0 0.0
        %1966 = vmatpush2.msra.mxu0 0.0
        %1967 = vmatprep.subr.mxu0 0.0
        %1968 = vmatpush2.msra.mxu0 0.0
        %1969 = vmatprep.subr.mxu0 0.0
        %1970 = vmatpush2.msra.mxu0 0.0
        %1971 = vmatprep.subr.mxu0 0.0
        %1972 = vmatpush2.msra.mxu0 0.0
        %1973 = vmatprep.subr.mxu0 0.0
        %1974 = vmatpush2.msra.mxu0 0.0
        %1975 = vmatprep.subr.mxu0 0.0
        %1976 = vmatpush2.msra.mxu0 0.0
        %1977 = vmatprep.subr.mxu0 0.0
        %1978 = vmatpush2.msra.mxu0 0.0
        %1979 = vmatprep.subr.mxu0 0.0
        %1980 = vmatpush2.msra.mxu0 0.0
        %1981 = vmatprep.subr.mxu0 0.0
        %1982 = vmatpush2.msra.mxu0 0.0
        %1983 = vmatprep.subr.mxu0 0.0
        %1984 = vmatpush2.msra.mxu0 0.0
        %1985 = vmatprep.subr.mxu0 0.0
        %1986 = vmatpush2.msra.mxu0 0.0
        %1987 = vmatprep.subr.mxu0 0.0
        %1988 = vmatpush2.msra.mxu0 0.0
        %1989 = vmatprep.subr.mxu0 0.0
        %1990 = vmatpush2.msra.mxu0 0.0
        %1991 = vmatprep.subr.mxu0 0.0
        %1992 = vmatpush2.msra.mxu0 0.0
        %1993 = vmatprep.mubr.f32.mxu0 0.0
        %1994 = vmatmul.mubr.f32.gmra.mxu0 %v565
        %v1995 = vpop.f32.mrf.mxu0
        %v1996 = vadd.f32 0.0, %v1995
        %v1997 = vpop.f32.mrf.mxu0
        %v1998 = vadd.f32 0.0, %v1997
        %1999 = vmatprep.mubr.f32.mxu0 0.0
        %2000 = vmatmul.mubr.f32.gmra.mxu0 %v568
        %v2001 = vpop.f32.mrf.mxu0
        %v2002 = vadd.f32 0.0, %v2001
        %v2003 = vpop.f32.mrf.mxu0
        %v2004 = vadd.f32 0.0, %v2003
        %2005 = vmatprep.mubr.f32.mxu0 0.0
        %2006 = vmatmul.mubr.f32.gmra.mxu0 %v571
        %v2007 = vpop.f32.mrf.mxu0
        %v2008 = vadd.f32 0.0, %v2007
        %v2009 = vpop.f32.mrf.mxu0
        %v2010 = vadd.f32 0.0, %v2009
        %2011 = vmatprep.mubr.f32.mxu0 0.0
        %2012 = vmatmul.mubr.f32.gmra.mxu0 %v574
        %v2013 = vpop.f32.mrf.mxu0
        %v2014 = vadd.f32 0.0, %v2013
        %v2015 = vpop.f32.mrf.mxu0
        %v2016 = vadd.f32 0.0, %v2015
        %2017 = vmatprep.mubr.f32.mxu0 0.0
        %2018 = vmatmul.mubr.f32.gmra.mxu0 %v577
        %v2019 = vpop.f32.mrf.mxu0
        %v2020 = vadd.f32 0.0, %v2019
        %v2021 = vpop.f32.mrf.mxu0
        %v2022 = vadd.f32 0.0, %v2021
        %2023 = vmatprep.mubr.f32.mxu0 0.0
        %2024 = vmatmul.mubr.f32.gmra.mxu0 %v1127
        %v2025 = vpop.f32.mrf.mxu0
        %v2026 = vadd.f32 0.0, %v2025
        %v2027 = vpop.f32.mrf.mxu0
        %v2028 = vadd.f32 0.0, %v2027
        %2029 = vdwg.mxu0
        %v2030 = vadd.f32 %v1560, %v1996
        %v2031 = vadd.f32 %v1561, %v1998
        %v2032 = vadd.f32 %v1562, %v2002
        %v2033 = vadd.f32 %v1563, %v2004
        %v2034 = vadd.f32 %v1564, %v2008
        %v2035 = vadd.f32 %v1565, %v2010
        %v2036 = vadd.f32 %v1566, %v2014
        %v2037 = vadd.f32 %v1567, %v2016
        %v2038 = vadd.f32 %v1568, %v2020
        %v2039 = vadd.f32 %v1569, %v2022
        %v2040 = vadd.f32 %v1570, %v2026
        %v2041 = vadd.f32 %v1571, %v2028
        %2042 = vmatprep.subr.mxu0 0.0
        %2043 = vmatpush1.msra.mxu0 0.0
        %2044 = vmatprep.subr.mxu0 0.0
        %2045 = vmatpush1.msra.mxu0 0.0
        %2046 = vmatprep.subr.mxu0 0.0
        %2047 = vmatpush1.msra.mxu0 0.0
        %2048 = vmatprep.subr.mxu0 0.0
        %2049 = vmatpush1.msra.mxu0 0.0
        %2050 = vmatprep.subr.mxu0 0.0
        %2051 = vmatpush1.msra.mxu0 0.0
        %2052 = vmatprep.subr.mxu0 0.0
        %2053 = vmatpush1.msra.mxu0 0.0
        %2054 = vmatprep.subr.mxu0 0.0
        %2055 = vmatpush1.msra.mxu0 0.0
        %2056 = vmatprep.subr.mxu0 0.0
        %2057 = vmatpush1.msra.mxu0 0.0
        %2058 = vmatprep.subr.mxu0 0.0
        %2059 = vmatpush1.msra.mxu0 0.0
        %2060 = vmatprep.subr.mxu0 0.0
        %2061 = vmatpush1.msra.mxu0 0.0
        %2062 = vmatprep.subr.mxu0 0.0
        %2063 = vmatpush1.msra.mxu0 0.0
        %2064 = vmatprep.subr.mxu0 0.0
        %2065 = vmatpush1.msra.mxu0 0.0
        %2066 = vmatprep.subr.mxu0 %v1814
        %2067 = vmatpush1.msra.mxu0 %v1811
        %2068 = vmatprep.subr.mxu0 %v1807
        %2069 = vmatpush1.msra.mxu0 %v1806
        %2070 = vmatprep.subr.mxu0 %v1805
        %2071 = vmatpush1.msra.mxu0 %v1804
        %2072 = vmatprep.subr.mxu0 %v1803
        %2073 = vmatpush1.msra.mxu0 %v1802
        %2074 = vmatprep.subr.mxu0 0.0
        %2075 = vmatpush2.msra.mxu0 0.0
        %2076 = vmatprep.subr.mxu0 0.0
        %2077 = vmatpush2.msra.mxu0 0.0
        %2078 = vmatprep.subr.mxu0 0.0
        %2079 = vmatpush2.msra.mxu0 0.0
        %2080 = vmatprep.subr.mxu0 0.0
        %2081 = vmatpush2.msra.mxu0 0.0
        %2082 = vmatprep.subr.mxu0 0.0
        %2083 = vmatpush2.msra.mxu0 0.0
        %2084 = vmatprep.subr.mxu0 0.0
        %2085 = vmatpush2.msra.mxu0 0.0
        %2086 = vmatprep.subr.mxu0 0.0
        %2087 = vmatpush2.msra.mxu0 0.0
        %2088 = vmatprep.subr.mxu0 0.0
        %2089 = vmatpush2.msra.mxu0 0.0
        %2090 = vmatprep.subr.mxu0 0.0
        %2091 = vmatpush2.msra.mxu0 0.0
        %2092 = vmatprep.subr.mxu0 0.0
        %2093 = vmatpush2.msra.mxu0 0.0
        %2094 = vmatprep.subr.mxu0 0.0
        %2095 = vmatpush2.msra.mxu0 0.0
        %2096 = vmatprep.subr.mxu0 0.0
        %2097 = vmatpush2.msra.mxu0 0.0
        %2098 = vmatprep.subr.mxu0 0.0
        %2099 = vmatpush2.msra.mxu0 0.0
        %2100 = vmatprep.subr.mxu0 0.0
        %2101 = vmatpush2.msra.mxu0 0.0
        %2102 = vmatprep.subr.mxu0 0.0
        %2103 = vmatpush2.msra.mxu0 0.0
        %2104 = vmatprep.subr.mxu0 0.0
        %2105 = vmatpush2.msra.mxu0 0.0
        %2106 = vmatprep.mubr.f32.mxu0 0.0
        %2107 = vmatmul.mubr.f32.gmra.mxu0 %v439
        %v2108 = vpop.f32.mrf.mxu0
        %v2109 = vadd.f32 0.0, %v2108
        %v2110 = vpop.f32.mrf.mxu0
        %v2111 = vadd.f32 0.0, %v2110
        %2112 = vmatprep.mubr.f32.mxu0 0.0
        %2113 = vmatmul.mubr.f32.gmra.mxu0 %v442
        %v2114 = vpop.f32.mrf.mxu0
        %v2115 = vadd.f32 0.0, %v2114
        %v2116 = vpop.f32.mrf.mxu0
        %v2117 = vadd.f32 0.0, %v2116
        %2118 = vmatprep.mubr.f32.mxu0 0.0
        %2119 = vmatmul.mubr.f32.gmra.mxu0 %v445
        %v2120 = vpop.f32.mrf.mxu0
        %v2121 = vadd.f32 0.0, %v2120
        %v2122 = vpop.f32.mrf.mxu0
        %v2123 = vadd.f32 0.0, %v2122
        %2124 = vmatprep.mubr.f32.mxu0 0.0
        %2125 = vmatmul.mubr.f32.gmra.mxu0 %v448
        %v2126 = vpop.f32.mrf.mxu0
        %v2127 = vadd.f32 0.0, %v2126
        %v2128 = vpop.f32.mrf.mxu0
        %v2129 = vadd.f32 0.0, %v2128
        %2130 = vmatprep.mubr.f32.mxu0 0.0
        %2131 = vmatmul.mubr.f32.gmra.mxu0 %v451
        %v2132 = vpop.f32.mrf.mxu0
        %v2133 = vadd.f32 0.0, %v2132
        %v2134 = vpop.f32.mrf.mxu0
        %v2135 = vadd.f32 0.0, %v2134
        %2136 = vmatprep.mubr.f32.mxu0 0.0
        %2137 = vmatmul.mubr.f32.gmra.mxu0 %v1686
        %v2138 = vpop.f32.mrf.mxu0
        %v2139 = vadd.f32 0.0, %v2138
        %v2140 = vpop.f32.mrf.mxu0
        %v2141 = vadd.f32 0.0, %v2140
        %2142 = vdwg.mxu0
        %v2143 = vadd.f32 %v1673, %v2109
        %v2144 = vadd.f32 %v1674, %v2111
        %v2145 = vadd.f32 %v1675, %v2115
        %v2146 = vadd.f32 %v1676, %v2117
        %v2147 = vadd.f32 %v1677, %v2121
        %v2148 = vadd.f32 %v1678, %v2123
        %v2149 = vadd.f32 %v1679, %v2127
        %v2150 = vadd.f32 %v1680, %v2129
        %v2151 = vadd.f32 %v1681, %v2133
        %v2152 = vadd.f32 %v1682, %v2135
        %v2153 = vadd.f32 %v1683, %v2139
        %v2154 = vadd.f32 %v1684, %v2141
        %v2156 = vsel %vm434, %v407, 0
        %2158 = vmatprep.subr.mxu0 0.0
        %2159 = vmatpush1.msra.mxu0 0.0
        %2160 = vmatprep.subr.mxu0 0.0
        %2161 = vmatpush1.msra.mxu0 0.0
        %2162 = vmatprep.subr.mxu0 0.0
        %2163 = vmatpush1.msra.mxu0 0.0
        %2164 = vmatprep.subr.mxu0 0.0
        %2165 = vmatpush1.msra.mxu0 0.0
        %2166 = vmatprep.subr.mxu0 0.0
        %2167 = vmatpush1.msra.mxu0 0.0
        %2168 = vmatprep.subr.mxu0 0.0
        %2169 = vmatpush1.msra.mxu0 0.0
        %2170 = vmatprep.subr.mxu0 0.0
        %2171 = vmatpush1.msra.mxu0 0.0
        %2172 = vmatprep.subr.mxu0 0.0
        %2173 = vmatpush1.msra.mxu0 0.0
        %2174 = vmatprep.subr.mxu0 0.0
        %2175 = vmatpush1.msra.mxu0 0.0
        %2176 = vmatprep.subr.mxu0 0.0
        %2177 = vmatpush1.msra.mxu0 0.0
        %2178 = vmatprep.subr.mxu0 0.0
        %2179 = vmatpush1.msra.mxu0 0.0
        %2180 = vmatprep.subr.mxu0 0.0
        %2181 = vmatpush1.msra.mxu0 0.0
        %2182 = vmatprep.subr.mxu0 %v1814
        %2183 = vmatpush1.msra.mxu0 %v1811
        %2184 = vmatprep.subr.mxu0 %v1807
        %2185 = vmatpush1.msra.mxu0 %v1806
        %2186 = vmatprep.subr.mxu0 %v1805
        %2187 = vmatpush1.msra.mxu0 %v1804
        %2188 = vmatprep.subr.mxu0 %v1803
        %2189 = vmatpush1.msra.mxu0 %v1802
        %2190 = vmatprep.subr.mxu0 0.0
        %2191 = vmatpush2.msra.mxu0 0.0
        %2192 = vmatprep.subr.mxu0 0.0
        %2193 = vmatpush2.msra.mxu0 0.0
        %2194 = vmatprep.subr.mxu0 0.0
        %2195 = vmatpush2.msra.mxu0 0.0
        %2196 = vmatprep.subr.mxu0 0.0
        %2197 = vmatpush2.msra.mxu0 0.0
        %2198 = vmatprep.subr.mxu0 0.0
        %2199 = vmatpush2.msra.mxu0 0.0
        %2200 = vmatprep.subr.mxu0 0.0
        %2201 = vmatpush2.msra.mxu0 0.0
        %2202 = vmatprep.subr.mxu0 0.0
        %2203 = vmatpush2.msra.mxu0 0.0
        %2204 = vmatprep.subr.mxu0 0.0
        %2205 = vmatpush2.msra.mxu0 0.0
        %2206 = vmatprep.subr.mxu0 0.0
        %2207 = vmatpush2.msra.mxu0 0.0
        %2208 = vmatprep.subr.mxu0 0.0
        %2209 = vmatpush2.msra.mxu0 0.0
        %2210 = vmatprep.subr.mxu0 0.0
        %2211 = vmatpush2.msra.mxu0 0.0
        %2212 = vmatprep.subr.mxu0 0.0
        %2213 = vmatpush2.msra.mxu0 0.0
        %2214 = vmatprep.subr.mxu0 0.0
        %2215 = vmatpush2.msra.mxu0 0.0
        %2216 = vmatprep.subr.mxu0 0.0
        %2217 = vmatpush2.msra.mxu0 0.0
        %2218 = vmatprep.subr.mxu0 0.0
        %2219 = vmatpush2.msra.mxu0 0.0
        %2220 = vmatprep.subr.mxu0 0.0
        %2221 = vmatpush2.msra.mxu0 0.0
        %2222 = vmatprep.mubr.f32.mxu0 0.0
        %2223 = vmatmul.mubr.f32.gmra.mxu0 %v690
        %v2224 = vpop.f32.mrf.mxu0
        %v2225 = vadd.f32 0.0, %v2224
        %v2226 = vpop.f32.mrf.mxu0
        %v2227 = vadd.f32 0.0, %v2226
        %2228 = vmatprep.mubr.f32.mxu0 0.0
        %2229 = vmatmul.mubr.f32.gmra.mxu0 %v693
        %v2230 = vpop.f32.mrf.mxu0
        %v2231 = vadd.f32 0.0, %v2230
        %v2232 = vpop.f32.mrf.mxu0
        %v2233 = vadd.f32 0.0, %v2232
        %2234 = vmatprep.mubr.f32.mxu0 0.0
        %2235 = vmatmul.mubr.f32.gmra.mxu0 %v696
        %v2236 = vpop.f32.mrf.mxu0
        %v2237 = vadd.f32 0.0, %v2236
        %v2238 = vpop.f32.mrf.mxu0
        %v2239 = vadd.f32 0.0, %v2238
        %2240 = vmatprep.mubr.f32.mxu0 0.0
        %2241 = vmatmul.mubr.f32.gmra.mxu0 %v699
        %v2242 = vpop.f32.mrf.mxu0
        %v2243 = vadd.f32 0.0, %v2242
        %v2244 = vpop.f32.mrf.mxu0
        %v2245 = vadd.f32 0.0, %v2244
        %2246 = vmatprep.mubr.f32.mxu0 0.0
        %2247 = vmatmul.mubr.f32.gmra.mxu0 %v702
        %v2248 = vpop.f32.mrf.mxu0
        %v2249 = vadd.f32 0.0, %v2248
        %v2250 = vpop.f32.mrf.mxu0
        %v2251 = vadd.f32 0.0, %v2250
        %2252 = vmatprep.mubr.f32.mxu0 0.0
        %2253 = vmatmul.mubr.f32.gmra.mxu0 %v2156
        %v2254 = vpop.f32.mrf.mxu0
        %v2255 = vadd.f32 0.0, %v2254
        %v2256 = vpop.f32.mrf.mxu0
        %v2257 = vadd.f32 0.0, %v2256
        %2258 = vdwg.mxu0
        %v2259 = vadd.f32 %v1789, %v2225
        %v2260 = vadd.f32 %v1790, %v2227
        %v2261 = vadd.f32 %v1791, %v2231
        %v2262 = vadd.f32 %v1792, %v2233
        %v2263 = vadd.f32 %v1793, %v2237
        %v2264 = vadd.f32 %v1794, %v2239
        %v2265 = vadd.f32 %v1795, %v2243
        %v2266 = vadd.f32 %v1796, %v2245
        %v2267 = vadd.f32 %v1797, %v2249
        %v2268 = vadd.f32 %v1798, %v2251
        %v2269 = vadd.f32 %v1799, %v2255
        %v2270 = vadd.f32 %v1800, %v2257
        %s2271 = scalar_lea.vmem %s1, 256
        %v2272 = vld [vmem:[%s2271] sm:$0xff]
        %v2273 = vld [vmem:[%s2271 + $0x8] sm:$0xff]
        %v2274 = vld [vmem:[%s2271 + $0x10] sm:$0xff]
        %v2275 = vld [vmem:[%s2271 + $0x18] sm:$0xff]
        %v2276 = vld [vmem:[%s2271 + $0x20] sm:$0xff]
        %v2277 = vld [vmem:[%s2271 + $0x28] sm:$0xff]
        %v2278 = vld [vmem:[%s2271 + $0x30] sm:$0xf]
        %v2279 = vld [vmem:[%s2271 + $0x38] sm:$0xf]
        %v2281 = vsel %vm453, %v2278, 0
        %v2284 = vsel %vm453, %v2279, 0
        %2286 = vmatprep.subr.mxu0 0.0
        %2287 = vmatpush1.msra.mxu0 0.0
        %2288 = vmatprep.subr.mxu0 0.0
        %2289 = vmatpush1.msra.mxu0 0.0
        %2290 = vmatprep.subr.mxu0 0.0
        %2291 = vmatpush1.msra.mxu0 0.0
        %2292 = vmatprep.subr.mxu0 0.0
        %2293 = vmatpush1.msra.mxu0 0.0
        %2294 = vmatprep.subr.mxu0 0.0
        %2295 = vmatpush1.msra.mxu0 0.0
        %2296 = vmatprep.subr.mxu0 0.0
        %2297 = vmatpush1.msra.mxu0 0.0
        %2298 = vmatprep.subr.mxu0 0.0
        %2299 = vmatpush1.msra.mxu0 0.0
        %2300 = vmatprep.subr.mxu0 0.0
        %2301 = vmatpush1.msra.mxu0 0.0
        %2302 = vmatprep.subr.mxu0 0.0
        %2303 = vmatpush1.msra.mxu0 0.0
        %2304 = vmatprep.subr.mxu0 0.0
        %2305 = vmatpush1.msra.mxu0 0.0
        %2306 = vmatprep.subr.mxu0 0.0
        %2307 = vmatpush1.msra.mxu0 0.0
        %2308 = vmatprep.subr.mxu0 0.0
        %2309 = vmatpush1.msra.mxu0 0.0
        %2310 = vmatprep.subr.mxu0 %v2284
        %2311 = vmatpush1.msra.mxu0 %v2281
        %2312 = vmatprep.subr.mxu0 %v2277
        %2313 = vmatpush1.msra.mxu0 %v2276
        %2314 = vmatprep.subr.mxu0 %v2275
        %2315 = vmatpush1.msra.mxu0 %v2274
        %2316 = vmatprep.subr.mxu0 %v2273
        %2317 = vmatpush1.msra.mxu0 %v2272
        %2318 = vmatprep.subr.mxu0 0.0
        %2319 = vmatpush2.msra.mxu0 0.0
        %2320 = vmatprep.subr.mxu0 0.0
        %2321 = vmatpush2.msra.mxu0 0.0
        %2322 = vmatprep.subr.mxu0 0.0
        %2323 = vmatpush2.msra.mxu0 0.0
        %2324 = vmatprep.subr.mxu0 0.0
        %2325 = vmatpush2.msra.mxu0 0.0
        %2326 = vmatprep.subr.mxu0 0.0
        %2327 = vmatpush2.msra.mxu0 0.0
        %2328 = vmatprep.subr.mxu0 0.0
        %2329 = vmatpush2.msra.mxu0 0.0
        %2330 = vmatprep.subr.mxu0 0.0
        %2331 = vmatpush2.msra.mxu0 0.0
        %2332 = vmatprep.subr.mxu0 0.0
        %2333 = vmatpush2.msra.mxu0 0.0
        %2334 = vmatprep.subr.mxu0 0.0
        %2335 = vmatpush2.msra.mxu0 0.0
        %2336 = vmatprep.subr.mxu0 0.0
        %2337 = vmatpush2.msra.mxu0 0.0
        %2338 = vmatprep.subr.mxu0 0.0
        %2339 = vmatpush2.msra.mxu0 0.0
        %2340 = vmatprep.subr.mxu0 0.0
        %2341 = vmatpush2.msra.mxu0 0.0
        %2342 = vmatprep.subr.mxu0 0.0
        %2343 = vmatpush2.msra.mxu0 0.0
        %2344 = vmatprep.subr.mxu0 0.0
        %2345 = vmatpush2.msra.mxu0 0.0
        %2346 = vmatprep.subr.mxu0 0.0
        %2347 = vmatpush2.msra.mxu0 0.0
        %2348 = vmatprep.subr.mxu0 0.0
        %2349 = vmatpush2.msra.mxu0 0.0
        %2350 = vmatprep.mubr.f32.mxu0 0.0
        %2351 = vmatmul.mubr.f32.gmra.mxu0 %v565
        %v2352 = vpop.f32.mrf.mxu0
        %v2353 = vadd.f32 0.0, %v2352
        %v2354 = vpop.f32.mrf.mxu0
        %v2355 = vadd.f32 0.0, %v2354
        %2356 = vmatprep.mubr.f32.mxu0 0.0
        %2357 = vmatmul.mubr.f32.gmra.mxu0 %v568
        %v2358 = vpop.f32.mrf.mxu0
        %v2359 = vadd.f32 0.0, %v2358
        %v2360 = vpop.f32.mrf.mxu0
        %v2361 = vadd.f32 0.0, %v2360
        %2362 = vmatprep.mubr.f32.mxu0 0.0
        %2363 = vmatmul.mubr.f32.gmra.mxu0 %v571
        %v2364 = vpop.f32.mrf.mxu0
        %v2365 = vadd.f32 0.0, %v2364
        %v2366 = vpop.f32.mrf.mxu0
        %v2367 = vadd.f32 0.0, %v2366
        %2368 = vmatprep.mubr.f32.mxu0 0.0
        %2369 = vmatmul.mubr.f32.gmra.mxu0 %v574
        %v2370 = vpop.f32.mrf.mxu0
        %v2371 = vadd.f32 0.0, %v2370
        %v2372 = vpop.f32.mrf.mxu0
        %v2373 = vadd.f32 0.0, %v2372
        %2374 = vmatprep.mubr.f32.mxu0 0.0
        %2375 = vmatmul.mubr.f32.gmra.mxu0 %v577
        %v2376 = vpop.f32.mrf.mxu0
        %v2377 = vadd.f32 0.0, %v2376
        %v2378 = vpop.f32.mrf.mxu0
        %v2379 = vadd.f32 0.0, %v2378
        %2380 = vmatprep.mubr.f32.mxu0 0.0
        %2381 = vmatmul.mubr.f32.gmra.mxu0 %v1127
        %v2382 = vpop.f32.mrf.mxu0
        %v2383 = vadd.f32 0.0, %v2382
        %v2384 = vpop.f32.mrf.mxu0
        %v2385 = vadd.f32 0.0, %v2384
        %2386 = vdwg.mxu0
        %v2387 = vadd.f32 %v1917, %v2353
        %v2388 = vadd.f32 %v1918, %v2355
        %v2389 = vadd.f32 %v1919, %v2359
        %v2390 = vadd.f32 %v1920, %v2361
        %v2391 = vadd.f32 %v1921, %v2365
        %v2392 = vadd.f32 %v1922, %v2367
        %v2393 = vadd.f32 %v1923, %v2371
        %v2394 = vadd.f32 %v1924, %v2373
        %v2395 = vadd.f32 %v1925, %v2377
        %v2396 = vadd.f32 %v1926, %v2379
        %v2397 = vadd.f32 %v1927, %v2383
        %v2398 = vadd.f32 %v1928, %v2385
        %2399 = vmatprep.subr.mxu0 0.0
        %2400 = vmatpush1.msra.mxu0 0.0
        %2401 = vmatprep.subr.mxu0 0.0
        %2402 = vmatpush1.msra.mxu0 0.0
        %2403 = vmatprep.subr.mxu0 0.0
        %2404 = vmatpush1.msra.mxu0 0.0
        %2405 = vmatprep.subr.mxu0 0.0
        %2406 = vmatpush1.msra.mxu0 0.0
        %2407 = vmatprep.subr.mxu0 0.0
        %2408 = vmatpush1.msra.mxu0 0.0
        %2409 = vmatprep.subr.mxu0 0.0
        %2410 = vmatpush1.msra.mxu0 0.0
        %2411 = vmatprep.subr.mxu0 0.0
        %2412 = vmatpush1.msra.mxu0 0.0
        %2413 = vmatprep.subr.mxu0 0.0
        %2414 = vmatpush1.msra.mxu0 0.0
        %2415 = vmatprep.subr.mxu0 0.0
        %2416 = vmatpush1.msra.mxu0 0.0
        %2417 = vmatprep.subr.mxu0 0.0
        %2418 = vmatpush1.msra.mxu0 0.0
        %2419 = vmatprep.subr.mxu0 0.0
        %2420 = vmatpush1.msra.mxu0 0.0
        %2421 = vmatprep.subr.mxu0 0.0
        %2422 = vmatpush1.msra.mxu0 0.0
        %2423 = vmatprep.subr.mxu0 %v2284
        %2424 = vmatpush1.msra.mxu0 %v2281
        %2425 = vmatprep.subr.mxu0 %v2277
        %2426 = vmatpush1.msra.mxu0 %v2276
        %2427 = vmatprep.subr.mxu0 %v2275
        %2428 = vmatpush1.msra.mxu0 %v2274
        %2429 = vmatprep.subr.mxu0 %v2273
        %2430 = vmatpush1.msra.mxu0 %v2272
        %2431 = vmatprep.subr.mxu0 0.0
        %2432 = vmatpush2.msra.mxu0 0.0
        %2433 = vmatprep.subr.mxu0 0.0
        %2434 = vmatpush2.msra.mxu0 0.0
        %2435 = vmatprep.subr.mxu0 0.0
        %2436 = vmatpush2.msra.mxu0 0.0
        %2437 = vmatprep.subr.mxu0 0.0
        %2438 = vmatpush2.msra.mxu0 0.0
        %2439 = vmatprep.subr.mxu0 0.0
        %2440 = vmatpush2.msra.mxu0 0.0
        %2441 = vmatprep.subr.mxu0 0.0
        %2442 = vmatpush2.msra.mxu0 0.0
        %2443 = vmatprep.subr.mxu0 0.0
        %2444 = vmatpush2.msra.mxu0 0.0
        %2445 = vmatprep.subr.mxu0 0.0
        %2446 = vmatpush2.msra.mxu0 0.0
        %2447 = vmatprep.subr.mxu0 0.0
        %2448 = vmatpush2.msra.mxu0 0.0
        %2449 = vmatprep.subr.mxu0 0.0
        %2450 = vmatpush2.msra.mxu0 0.0
        %2451 = vmatprep.subr.mxu0 0.0
        %2452 = vmatpush2.msra.mxu0 0.0
        %2453 = vmatprep.subr.mxu0 0.0
        %2454 = vmatpush2.msra.mxu0 0.0
        %2455 = vmatprep.subr.mxu0 0.0
        %2456 = vmatpush2.msra.mxu0 0.0
        %2457 = vmatprep.subr.mxu0 0.0
        %2458 = vmatpush2.msra.mxu0 0.0
        %2459 = vmatprep.subr.mxu0 0.0
        %2460 = vmatpush2.msra.mxu0 0.0
        %2461 = vmatprep.subr.mxu0 0.0
        %2462 = vmatpush2.msra.mxu0 0.0
        %2463 = vmatprep.mubr.f32.mxu0 0.0
        %2464 = vmatmul.mubr.f32.gmra.mxu0 %v439
        %v2465 = vpop.f32.mrf.mxu0
        %v2466 = vadd.f32 0.0, %v2465
        %v2467 = vpop.f32.mrf.mxu0
        %v2468 = vadd.f32 0.0, %v2467
        %2469 = vmatprep.mubr.f32.mxu0 0.0
        %2470 = vmatmul.mubr.f32.gmra.mxu0 %v442
        %v2471 = vpop.f32.mrf.mxu0
        %v2472 = vadd.f32 0.0, %v2471
        %v2473 = vpop.f32.mrf.mxu0
        %v2474 = vadd.f32 0.0, %v2473
        %2475 = vmatprep.mubr.f32.mxu0 0.0
        %2476 = vmatmul.mubr.f32.gmra.mxu0 %v445
        %v2477 = vpop.f32.mrf.mxu0
        %v2478 = vadd.f32 0.0, %v2477
        %v2479 = vpop.f32.mrf.mxu0
        %v2480 = vadd.f32 0.0, %v2479
        %2481 = vmatprep.mubr.f32.mxu0 0.0
        %2482 = vmatmul.mubr.f32.gmra.mxu0 %v448
        %v2483 = vpop.f32.mrf.mxu0
        %v2484 = vadd.f32 0.0, %v2483
        %v2485 = vpop.f32.mrf.mxu0
        %v2486 = vadd.f32 0.0, %v2485
        %2487 = vmatprep.mubr.f32.mxu0 0.0
        %2488 = vmatmul.mubr.f32.gmra.mxu0 %v451
        %v2489 = vpop.f32.mrf.mxu0
        %v2490 = vadd.f32 0.0, %v2489
        %v2491 = vpop.f32.mrf.mxu0
        %v2492 = vadd.f32 0.0, %v2491
        %2493 = vmatprep.mubr.f32.mxu0 0.0
        %2494 = vmatmul.mubr.f32.gmra.mxu0 %v1686
        %v2495 = vpop.f32.mrf.mxu0
        %v2496 = vadd.f32 0.0, %v2495
        %v2497 = vpop.f32.mrf.mxu0
        %v2498 = vadd.f32 0.0, %v2497
        %2499 = vdwg.mxu0
        %v2500 = vadd.f32 %v2030, %v2466
        %v2501 = vadd.f32 %v2031, %v2468
        %v2502 = vadd.f32 %v2032, %v2472
        %v2503 = vadd.f32 %v2033, %v2474
        %v2504 = vadd.f32 %v2034, %v2478
        %v2505 = vadd.f32 %v2035, %v2480
        %v2506 = vadd.f32 %v2036, %v2484
        %v2507 = vadd.f32 %v2037, %v2486
        %v2508 = vadd.f32 %v2038, %v2490
        %v2509 = vadd.f32 %v2039, %v2492
        %v2510 = vadd.f32 %v2040, %v2496
        %v2511 = vadd.f32 %v2041, %v2498
        %2512 = vmatprep.subr.mxu0 0.0
        %2513 = vmatpush1.msra.mxu0 0.0
        %2514 = vmatprep.subr.mxu0 0.0
        %2515 = vmatpush1.msra.mxu0 0.0
        %2516 = vmatprep.subr.mxu0 0.0
        %2517 = vmatpush1.msra.mxu0 0.0
        %2518 = vmatprep.subr.mxu0 0.0
        %2519 = vmatpush1.msra.mxu0 0.0
        %2520 = vmatprep.subr.mxu0 0.0
        %2521 = vmatpush1.msra.mxu0 0.0
        %2522 = vmatprep.subr.mxu0 0.0
        %2523 = vmatpush1.msra.mxu0 0.0
        %2524 = vmatprep.subr.mxu0 0.0
        %2525 = vmatpush1.msra.mxu0 0.0
        %2526 = vmatprep.subr.mxu0 0.0
        %2527 = vmatpush1.msra.mxu0 0.0
        %2528 = vmatprep.subr.mxu0 0.0
        %2529 = vmatpush1.msra.mxu0 0.0
        %2530 = vmatprep.subr.mxu0 0.0
        %2531 = vmatpush1.msra.mxu0 0.0
        %2532 = vmatprep.subr.mxu0 0.0
        %2533 = vmatpush1.msra.mxu0 0.0
        %2534 = vmatprep.subr.mxu0 0.0
        %2535 = vmatpush1.msra.mxu0 0.0
        %2536 = vmatprep.subr.mxu0 %v2284
        %2537 = vmatpush1.msra.mxu0 %v2281
        %2538 = vmatprep.subr.mxu0 %v2277
        %2539 = vmatpush1.msra.mxu0 %v2276
        %2540 = vmatprep.subr.mxu0 %v2275
        %2541 = vmatpush1.msra.mxu0 %v2274
        %2542 = vmatprep.subr.mxu0 %v2273
        %2543 = vmatpush1.msra.mxu0 %v2272
        %2544 = vmatprep.subr.mxu0 0.0
        %2545 = vmatpush2.msra.mxu0 0.0
        %2546 = vmatprep.subr.mxu0 0.0
        %2547 = vmatpush2.msra.mxu0 0.0
        %2548 = vmatprep.subr.mxu0 0.0
        %2549 = vmatpush2.msra.mxu0 0.0
        %2550 = vmatprep.subr.mxu0 0.0
        %2551 = vmatpush2.msra.mxu0 0.0
        %2552 = vmatprep.subr.mxu0 0.0
        %2553 = vmatpush2.msra.mxu0 0.0
        %2554 = vmatprep.subr.mxu0 0.0
        %2555 = vmatpush2.msra.mxu0 0.0
        %2556 = vmatprep.subr.mxu0 0.0
        %2557 = vmatpush2.msra.mxu0 0.0
        %2558 = vmatprep.subr.mxu0 0.0
        %2559 = vmatpush2.msra.mxu0 0.0
        %2560 = vmatprep.subr.mxu0 0.0
        %2561 = vmatpush2.msra.mxu0 0.0
        %2562 = vmatprep.subr.mxu0 0.0
        %2563 = vmatpush2.msra.mxu0 0.0
        %2564 = vmatprep.subr.mxu0 0.0
        %2565 = vmatpush2.msra.mxu0 0.0
        %2566 = vmatprep.subr.mxu0 0.0
        %2567 = vmatpush2.msra.mxu0 0.0
        %2568 = vmatprep.subr.mxu0 0.0
        %2569 = vmatpush2.msra.mxu0 0.0
        %2570 = vmatprep.subr.mxu0 0.0
        %2571 = vmatpush2.msra.mxu0 0.0
        %2572 = vmatprep.subr.mxu0 0.0
        %2573 = vmatpush2.msra.mxu0 0.0
        %2574 = vmatprep.subr.mxu0 0.0
        %2575 = vmatpush2.msra.mxu0 0.0
        %2576 = vmatprep.mubr.f32.mxu0 0.0
        %2577 = vmatmul.mubr.f32.gmra.mxu0 %v690
        %v2578 = vpop.f32.mrf.mxu0
        %v2579 = vadd.f32 0.0, %v2578
        %v2580 = vpop.f32.mrf.mxu0
        %v2581 = vadd.f32 0.0, %v2580
        %2582 = vmatprep.mubr.f32.mxu0 0.0
        %2583 = vmatmul.mubr.f32.gmra.mxu0 %v693
        %v2584 = vpop.f32.mrf.mxu0
        %v2585 = vadd.f32 0.0, %v2584
        %v2586 = vpop.f32.mrf.mxu0
        %v2587 = vadd.f32 0.0, %v2586
        %2588 = vmatprep.mubr.f32.mxu0 0.0
        %2589 = vmatmul.mubr.f32.gmra.mxu0 %v696
        %v2590 = vpop.f32.mrf.mxu0
        %v2591 = vadd.f32 0.0, %v2590
        %v2592 = vpop.f32.mrf.mxu0
        %v2593 = vadd.f32 0.0, %v2592
        %2594 = vmatprep.mubr.f32.mxu0 0.0
        %2595 = vmatmul.mubr.f32.gmra.mxu0 %v699
        %v2596 = vpop.f32.mrf.mxu0
        %v2597 = vadd.f32 0.0, %v2596
        %v2598 = vpop.f32.mrf.mxu0
        %v2599 = vadd.f32 0.0, %v2598
        %2600 = vmatprep.mubr.f32.mxu0 0.0
        %2601 = vmatmul.mubr.f32.gmra.mxu0 %v702
        %v2602 = vpop.f32.mrf.mxu0
        %v2603 = vadd.f32 0.0, %v2602
        %v2604 = vpop.f32.mrf.mxu0
        %v2605 = vadd.f32 0.0, %v2604
        %2606 = vmatprep.mubr.f32.mxu0 0.0
        %2607 = vmatmul.mubr.f32.gmra.mxu0 %v2156
        %v2608 = vpop.f32.mrf.mxu0
        %v2609 = vadd.f32 0.0, %v2608
        %v2610 = vpop.f32.mrf.mxu0
        %v2611 = vadd.f32 0.0, %v2610
        %2612 = vdwg.mxu0
        %v2613 = vadd.f32 %v2143, %v2579
        %v2614 = vadd.f32 %v2144, %v2581
        %v2615 = vadd.f32 %v2145, %v2585
        %v2616 = vadd.f32 %v2146, %v2587
        %v2617 = vadd.f32 %v2147, %v2591
        %v2618 = vadd.f32 %v2148, %v2593
        %v2619 = vadd.f32 %v2149, %v2597
        %v2620 = vadd.f32 %v2150, %v2599
        %v2621 = vadd.f32 %v2151, %v2603
        %v2622 = vadd.f32 %v2152, %v2605
        %v2623 = vadd.f32 %v2153, %v2609
        %v2624 = vadd.f32 %v2154, %v2611
        %v2626 = vsel %vm434, %v415, 0
        %2628 = vmatprep.subr.mxu0 0.0
        %2629 = vmatpush1.msra.mxu0 0.0
        %2630 = vmatprep.subr.mxu0 0.0
        %2631 = vmatpush1.msra.mxu0 0.0
        %2632 = vmatprep.subr.mxu0 0.0
        %2633 = vmatpush1.msra.mxu0 0.0
        %2634 = vmatprep.subr.mxu0 0.0
        %2635 = vmatpush1.msra.mxu0 0.0
        %2636 = vmatprep.subr.mxu0 0.0
        %2637 = vmatpush1.msra.mxu0 0.0
        %2638 = vmatprep.subr.mxu0 0.0
        %2639 = vmatpush1.msra.mxu0 0.0
        %2640 = vmatprep.subr.mxu0 0.0
        %2641 = vmatpush1.msra.mxu0 0.0
        %2642 = vmatprep.subr.mxu0 0.0
        %2643 = vmatpush1.msra.mxu0 0.0
        %2644 = vmatprep.subr.mxu0 0.0
        %2645 = vmatpush1.msra.mxu0 0.0
        %2646 = vmatprep.subr.mxu0 0.0
        %2647 = vmatpush1.msra.mxu0 0.0
        %2648 = vmatprep.subr.mxu0 0.0
        %2649 = vmatpush1.msra.mxu0 0.0
        %2650 = vmatprep.subr.mxu0 0.0
        %2651 = vmatpush1.msra.mxu0 0.0
        %2652 = vmatprep.subr.mxu0 %v2284
        %2653 = vmatpush1.msra.mxu0 %v2281
        %2654 = vmatprep.subr.mxu0 %v2277
        %2655 = vmatpush1.msra.mxu0 %v2276
        %2656 = vmatprep.subr.mxu0 %v2275
        %2657 = vmatpush1.msra.mxu0 %v2274
        %2658 = vmatprep.subr.mxu0 %v2273
        %2659 = vmatpush1.msra.mxu0 %v2272
        %2660 = vmatprep.subr.mxu0 0.0
        %2661 = vmatpush2.msra.mxu0 0.0
        %2662 = vmatprep.subr.mxu0 0.0
        %2663 = vmatpush2.msra.mxu0 0.0
        %2664 = vmatprep.subr.mxu0 0.0
        %2665 = vmatpush2.msra.mxu0 0.0
        %2666 = vmatprep.subr.mxu0 0.0
        %2667 = vmatpush2.msra.mxu0 0.0
        %2668 = vmatprep.subr.mxu0 0.0
        %2669 = vmatpush2.msra.mxu0 0.0
        %2670 = vmatprep.subr.mxu0 0.0
        %2671 = vmatpush2.msra.mxu0 0.0
        %2672 = vmatprep.subr.mxu0 0.0
        %2673 = vmatpush2.msra.mxu0 0.0
        %2674 = vmatprep.subr.mxu0 0.0
        %2675 = vmatpush2.msra.mxu0 0.0
        %2676 = vmatprep.subr.mxu0 0.0
        %2677 = vmatpush2.msra.mxu0 0.0
        %2678 = vmatprep.subr.mxu0 0.0
        %2679 = vmatpush2.msra.mxu0 0.0
        %2680 = vmatprep.subr.mxu0 0.0
        %2681 = vmatpush2.msra.mxu0 0.0
        %2682 = vmatprep.subr.mxu0 0.0
        %2683 = vmatpush2.msra.mxu0 0.0
        %2684 = vmatprep.subr.mxu0 0.0
        %2685 = vmatpush2.msra.mxu0 0.0
        %2686 = vmatprep.subr.mxu0 0.0
        %2687 = vmatpush2.msra.mxu0 0.0
        %2688 = vmatprep.subr.mxu0 0.0
        %2689 = vmatpush2.msra.mxu0 0.0
        %2690 = vmatprep.subr.mxu0 0.0
        %2691 = vmatpush2.msra.mxu0 0.0
        %2692 = vmatprep.mubr.f32.mxu0 0.0
        %2693 = vmatmul.mubr.f32.gmra.mxu0 %v910
        %v2694 = vpop.f32.mrf.mxu0
        %v2695 = vadd.f32 0.0, %v2694
        %v2696 = vpop.f32.mrf.mxu0
        %v2697 = vadd.f32 0.0, %v2696
        %2698 = vmatprep.mubr.f32.mxu0 0.0
        %2699 = vmatmul.mubr.f32.gmra.mxu0 %v913
        %v2700 = vpop.f32.mrf.mxu0
        %v2701 = vadd.f32 0.0, %v2700
        %v2702 = vpop.f32.mrf.mxu0
        %v2703 = vadd.f32 0.0, %v2702
        %2704 = vmatprep.mubr.f32.mxu0 0.0
        %2705 = vmatmul.mubr.f32.gmra.mxu0 %v916
        %v2706 = vpop.f32.mrf.mxu0
        %v2707 = vadd.f32 0.0, %v2706
        %v2708 = vpop.f32.mrf.mxu0
        %v2709 = vadd.f32 0.0, %v2708
        %2710 = vmatprep.mubr.f32.mxu0 0.0
        %2711 = vmatmul.mubr.f32.gmra.mxu0 %v919
        %v2712 = vpop.f32.mrf.mxu0
        %v2713 = vadd.f32 0.0, %v2712
        %v2714 = vpop.f32.mrf.mxu0
        %v2715 = vadd.f32 0.0, %v2714
        %2716 = vmatprep.mubr.f32.mxu0 0.0
        %2717 = vmatmul.mubr.f32.gmra.mxu0 %v922
        %v2718 = vpop.f32.mrf.mxu0
        %v2719 = vadd.f32 0.0, %v2718
        %v2720 = vpop.f32.mrf.mxu0
        %v2721 = vadd.f32 0.0, %v2720
        %2722 = vmatprep.mubr.f32.mxu0 0.0
        %2723 = vmatmul.mubr.f32.gmra.mxu0 %v2626
        %v2724 = vpop.f32.mrf.mxu0
        %v2725 = vadd.f32 0.0, %v2724
        %v2726 = vpop.f32.mrf.mxu0
        %v2727 = vadd.f32 0.0, %v2726
        %2728 = vdwg.mxu0
        %v2729 = vadd.f32 %v2259, %v2695
        %v2730 = vadd.f32 %v2260, %v2697
        %v2731 = vadd.f32 %v2261, %v2701
        %v2732 = vadd.f32 %v2262, %v2703
        %v2733 = vadd.f32 %v2263, %v2707
        %v2734 = vadd.f32 %v2264, %v2709
        %v2735 = vadd.f32 %v2265, %v2713
        %v2736 = vadd.f32 %v2266, %v2715
        %v2737 = vadd.f32 %v2267, %v2719
        %v2738 = vadd.f32 %v2268, %v2721
        %v2739 = vadd.f32 %v2269, %v2725
        %v2740 = vadd.f32 %v2270, %v2727
        %v2742 = vlaneseq
        %v2743 = vshrl.u32 %v2742, 7
        %v2744 = vsub.s32 0, %v2743
        %v2745 = vrot.slane %v416, %v2744
        %v2746 = vlaneseq
        %v2747 = vshrl.u32 %v2746, 7
        %v2748 = vsub.s32 1, %v2747
        %v2749 = vrot.slane %v416, %v2748
        %v2752 = vadd.f32 %v2387, %v2745
        %v2753 = vadd.f32 %v2388, %v2749
        %v2754 = vadd.f32 %v2389, %v2745
        %v2755 = vadd.f32 %v2390, %v2749
        %v2756 = vadd.f32 %v2391, %v2745
        %v2757 = vadd.f32 %v2392, %v2749
        %v2758 = vadd.f32 %v2393, %v2745
        %v2759 = vadd.f32 %v2394, %v2749
        %v2760 = vadd.f32 %v2395, %v2745
        %v2761 = vadd.f32 %v2396, %v2749
        %v2762 = vadd.f32 %v2397, %v2745
        %v2763 = vadd.f32 %v2398, %v2749
        %v2764 = vmax.f32 %v2752, 0.0
        %v2765 = vmax.f32 %v2753, 0.0
        %v2766 = vmax.f32 %v2754, 0.0
        %v2767 = vmax.f32 %v2755, 0.0
        %v2768 = vmax.f32 %v2756, 0.0
        %v2769 = vmax.f32 %v2757, 0.0
        %v2770 = vmax.f32 %v2758, 0.0
        %v2771 = vmax.f32 %v2759, 0.0
        %v2772 = vmax.f32 %v2760, 0.0
        %v2773 = vmax.f32 %v2761, 0.0
        %v2774 = vmax.f32 %v2762, 0.0
        %v2775 = vmax.f32 %v2763, 0.0
        %v2776 = vadd.f32 %v2500, %v2745
        %v2777 = vadd.f32 %v2501, %v2749
        %v2778 = vadd.f32 %v2502, %v2745
        %v2779 = vadd.f32 %v2503, %v2749
        %v2780 = vadd.f32 %v2504, %v2745
        %v2781 = vadd.f32 %v2505, %v2749
        %v2782 = vadd.f32 %v2506, %v2745
        %v2783 = vadd.f32 %v2507, %v2749
        %v2784 = vadd.f32 %v2508, %v2745
        %v2785 = vadd.f32 %v2509, %v2749
        %v2786 = vadd.f32 %v2510, %v2745
        %v2787 = vadd.f32 %v2511, %v2749
        %v2788 = vmax.f32 %v2776, 0.0
        %v2789 = vmax.f32 %v2777, 0.0
        %v2790 = vmax.f32 %v2778, 0.0
        %v2791 = vmax.f32 %v2779, 0.0
        %v2792 = vmax.f32 %v2780, 0.0
        %v2793 = vmax.f32 %v2781, 0.0
        %v2794 = vmax.f32 %v2782, 0.0
        %v2795 = vmax.f32 %v2783, 0.0
        %v2796 = vmax.f32 %v2784, 0.0
        %v2797 = vmax.f32 %v2785, 0.0
        %v2798 = vmax.f32 %v2786, 0.0
        %v2799 = vmax.f32 %v2787, 0.0
        %v2800 = vadd.f32 %v2613, %v2745
        %v2801 = vadd.f32 %v2614, %v2749
        %v2802 = vadd.f32 %v2615, %v2745
        %v2803 = vadd.f32 %v2616, %v2749
        %v2804 = vadd.f32 %v2617, %v2745
        %v2805 = vadd.f32 %v2618, %v2749
        %v2806 = vadd.f32 %v2619, %v2745
        %v2807 = vadd.f32 %v2620, %v2749
        %v2808 = vadd.f32 %v2621, %v2745
        %v2809 = vadd.f32 %v2622, %v2749
        %v2810 = vadd.f32 %v2623, %v2745
        %v2811 = vadd.f32 %v2624, %v2749
        %v2812 = vmax.f32 %v2800, 0.0
        %v2813 = vmax.f32 %v2801, 0.0
        %v2814 = vmax.f32 %v2802, 0.0
        %v2815 = vmax.f32 %v2803, 0.0
        %v2816 = vmax.f32 %v2804, 0.0
        %v2817 = vmax.f32 %v2805, 0.0
        %v2818 = vmax.f32 %v2806, 0.0
        %v2819 = vmax.f32 %v2807, 0.0
        %v2820 = vmax.f32 %v2808, 0.0
        %v2821 = vmax.f32 %v2809, 0.0
        %v2822 = vmax.f32 %v2810, 0.0
        %v2823 = vmax.f32 %v2811, 0.0
        %v2824 = vadd.f32 %v2729, %v2745
        %v2825 = vadd.f32 %v2730, %v2749
        %v2826 = vadd.f32 %v2731, %v2745
        %v2827 = vadd.f32 %v2732, %v2749
        %v2828 = vadd.f32 %v2733, %v2745
        %v2829 = vadd.f32 %v2734, %v2749
        %v2830 = vadd.f32 %v2735, %v2745
        %v2831 = vadd.f32 %v2736, %v2749
        %v2832 = vadd.f32 %v2737, %v2745
        %v2833 = vadd.f32 %v2738, %v2749
        %v2834 = vadd.f32 %v2739, %v2745
        %v2835 = vadd.f32 %v2740, %v2749
        %v2836 = vmax.f32 %v2824, 0.0
        %v2837 = vmax.f32 %v2825, 0.0
        %v2838 = vmax.f32 %v2826, 0.0
        %v2839 = vmax.f32 %v2827, 0.0
        %v2840 = vmax.f32 %v2828, 0.0
        %v2841 = vmax.f32 %v2829, 0.0
        %v2842 = vmax.f32 %v2830, 0.0
        %v2843 = vmax.f32 %v2831, 0.0
        %v2844 = vmax.f32 %v2832, 0.0
        %v2845 = vmax.f32 %v2833, 0.0
        %v2846 = vmax.f32 %v2834, 0.0
        %v2847 = vmax.f32 %v2835, 0.0
        %v2848 = vmax.f32 %v2764, %v2765
        %v2849 = vmax.f32 %v2766, %v2767
        %v2850 = vmax.f32 %v2768, %v2769
        %v2851 = vmax.f32 %v2770, %v2771
        %v2852 = vmax.f32 %v2772, %v2773
        %v2853 = vmax.f32 %v2774, %v2775
        %v2854 = vmax.f32 %v2788, %v2789
        %v2855 = vmax.f32 %v2790, %v2791
        %v2856 = vmax.f32 %v2792, %v2793
        %v2857 = vmax.f32 %v2794, %v2795
        %v2858 = vmax.f32 %v2796, %v2797
        %v2859 = vmax.f32 %v2798, %v2799
        %v2860 = vmax.f32 %v2848, %v2854
        %v2861 = vmax.f32 %v2849, %v2855
        %v2862 = vmax.f32 %v2850, %v2856
        %v2863 = vmax.f32 %v2851, %v2857
        %v2864 = vmax.f32 %v2852, %v2858
        %v2865 = vmax.f32 %v2853, %v2859
        %v2866 = vmax.f32 %v2812, %v2813
        %v2867 = vmax.f32 %v2814, %v2815
        %v2868 = vmax.f32 %v2816, %v2817
        %v2869 = vmax.f32 %v2818, %v2819
        %v2870 = vmax.f32 %v2820, %v2821
        %v2871 = vmax.f32 %v2822, %v2823
        %v2872 = vmax.f32 %v2836, %v2837
        %v2873 = vmax.f32 %v2838, %v2839
        %v2874 = vmax.f32 %v2840, %v2841
        %v2875 = vmax.f32 %v2842, %v2843
        %v2876 = vmax.f32 %v2844, %v2845
        %v2877 = vmax.f32 %v2846, %v2847
        %v2878 = vmax.f32 %v2866, %v2872
        %v2879 = vmax.f32 %v2867, %v2873
        %v2880 = vmax.f32 %v2868, %v2874
        %v2881 = vmax.f32 %v2869, %v2875
        %v2882 = vmax.f32 %v2870, %v2876
        %v2883 = vmax.f32 %v2871, %v2877
        %v2884 = vld [vmem:[%s4] sm:$0x3]
        %v2885 = vld [vmem:[%s3] sm:$0xff]
        %v2886 = vld [vmem:[%s3 + $0x8] sm:$0xff]
        %v2887 = vld [vmem:[%s3 + $0x10] sm:$0xff]
        %v2888 = vld [vmem:[%s3 + $0x18] sm:$0xff]
        %v2889 = vld [vmem:[%s3 + $0x20] sm:$0xff]
        %v2890 = vld [vmem:[%s3 + $0x28] sm:$0xff]
        %v2891 = vld [vmem:[%s3 + $0x30] sm:$0xff]
        %v2892 = vld [vmem:[%s3 + $0x38] sm:$0xff]
        %v2893 = vld [vmem:[%s3 + $0x40] sm:$0xff]
        %v2894 = vld [vmem:[%s3 + $0x48] sm:$0xff]
        %v2895 = vld [vmem:[%s3 + $0x50] sm:$0xff]
        %v2896 = vld [vmem:[%s3 + $0x58] sm:$0xff]
        %v2897 = vld [vmem:[%s3 + $0x60] sm:$0xff]
        %v2898 = vld [vmem:[%s3 + $0x68] sm:$0xff]
        %v2899 = vld [vmem:[%s3 + $0x70] sm:$0xff]
        %v2900 = vld [vmem:[%s3 + $0x78] sm:$0xff]
        %v2901 = vld [vmem:[%s3 + $0x80] sm:$0xff]
        %v2902 = vld [vmem:[%s3 + $0x88] sm:$0xff]
        %v2903 = vld [vmem:[%s3 + $0x90] sm:$0xff]
        %v2904 = vld [vmem:[%s3 + $0x98] sm:$0xff]
        %v2905 = vld [vmem:[%s3 + $0xa0] sm:$0xff]
        %v2906 = vld [vmem:[%s3 + $0xa8] sm:$0xff]
        %v2907 = vld [vmem:[%s3 + $0xb0] sm:$0xff]
        %v2908 = vld [vmem:[%s3 + $0xb8] sm:$0xff]
        %v2909 = vld [vmem:[%s3 + $0xc0] sm:$0xff]
        %v2910 = vld [vmem:[%s3 + $0xc8] sm:$0xff]
        %v2911 = vld [vmem:[%s3 + $0xd0] sm:$0xff]
        %v2912 = vld [vmem:[%s3 + $0xd8] sm:$0xff]
        %v2913 = vld [vmem:[%s3 + $0xe0] sm:$0xff]
        %v2914 = vld [vmem:[%s3 + $0xe8] sm:$0xff]
        %v2915 = vld [vmem:[%s3 + $0xf0] sm:$0xff]
        %v2916 = vld [vmem:[%s3 + $0xf8] sm:$0xff]
        %s2917 = scalar_lea.vmem %s3, 256
        %v2918 = vld [vmem:[%s2917] sm:$0xff]
        %v2919 = vld [vmem:[%s2917 + $0x8] sm:$0xff]
        %v2920 = vld [vmem:[%s2917 + $0x10] sm:$0xff]
        %v2921 = vld [vmem:[%s2917 + $0x18] sm:$0xff]
        %v2922 = vld [vmem:[%s2917 + $0x20] sm:$0xff]
        %v2923 = vld [vmem:[%s2917 + $0x28] sm:$0xff]
        %v2924 = vld [vmem:[%s2917 + $0x30] sm:$0xff]
        %v2925 = vld [vmem:[%s2917 + $0x38] sm:$0xff]
        %v2926 = vld [vmem:[%s2917 + $0x40] sm:$0xff]
        %v2927 = vld [vmem:[%s2917 + $0x48] sm:$0xff]
        %v2928 = vld [vmem:[%s2917 + $0x50] sm:$0xff]
        %v2929 = vld [vmem:[%s2917 + $0x58] sm:$0xff]
        %v2930 = vld [vmem:[%s2917 + $0x60] sm:$0xff]
        %v2931 = vld [vmem:[%s2917 + $0x68] sm:$0xff]
        %v2932 = vld [vmem:[%s2917 + $0x70] sm:$0xff]
        %v2933 = vld [vmem:[%s2917 + $0x78] sm:$0xff]
        %v2934 = vld [vmem:[%s2917 + $0x80] sm:$0xff]
        %v2935 = vld [vmem:[%s2917 + $0x88] sm:$0xff]
        %v2936 = vld [vmem:[%s2917 + $0x90] sm:$0xff]
        %v2937 = vld [vmem:[%s2917 + $0x98] sm:$0xff]
        %v2938 = vld [vmem:[%s2917 + $0xa0] sm:$0xff]
        %v2939 = vld [vmem:[%s2917 + $0xa8] sm:$0xff]
        %v2940 = vld [vmem:[%s2917 + $0xb0] sm:$0xff]
        %v2941 = vld [vmem:[%s2917 + $0xb8] sm:$0xff]
        %v2942 = vld [vmem:[%s2917 + $0xc0] sm:$0xff]
        %v2943 = vld [vmem:[%s2917 + $0xc8] sm:$0xff]
        %v2944 = vld [vmem:[%s2917 + $0xd0] sm:$0xff]
        %v2945 = vld [vmem:[%s2917 + $0xd8] sm:$0xff]
        %v2946 = vld [vmem:[%s2917 + $0xe0] sm:$0xff]
        %v2947 = vld [vmem:[%s2917 + $0xe8] sm:$0xff]
        %v2948 = vld [vmem:[%s2917 + $0xf0] sm:$0xff]
        %v2949 = vld [vmem:[%s2917 + $0xf8] sm:$0xff]
        %2950 = vmatprep.subr.mxu0 %v2949
        %2951 = vmatpush1.msra.mxu0 %v2948
        %2952 = vmatprep.subr.mxu0 %v2947
        %2953 = vmatpush1.msra.mxu0 %v2946
        %2954 = vmatprep.subr.mxu0 %v2945
        %2955 = vmatpush1.msra.mxu0 %v2944
        %2956 = vmatprep.subr.mxu0 %v2943
        %2957 = vmatpush1.msra.mxu0 %v2942
        %2958 = vmatprep.subr.mxu0 %v2941
        %2959 = vmatpush1.msra.mxu0 %v2940
        %2960 = vmatprep.subr.mxu0 %v2939
        %2961 = vmatpush1.msra.mxu0 %v2938
        %2962 = vmatprep.subr.mxu0 %v2937
        %2963 = vmatpush1.msra.mxu0 %v2936
        %2964 = vmatprep.subr.mxu0 %v2935
        %2965 = vmatpush1.msra.mxu0 %v2934
        %2966 = vmatprep.subr.mxu0 %v2933
        %2967 = vmatpush1.msra.mxu0 %v2932
        %2968 = vmatprep.subr.mxu0 %v2931
        %2969 = vmatpush1.msra.mxu0 %v2930
        %2970 = vmatprep.subr.mxu0 %v2929
        %2971 = vmatpush1.msra.mxu0 %v2928
        %2972 = vmatprep.subr.mxu0 %v2927
        %2973 = vmatpush1.msra.mxu0 %v2926
        %2974 = vmatprep.subr.mxu0 %v2925
        %2975 = vmatpush1.msra.mxu0 %v2924
        %2976 = vmatprep.subr.mxu0 %v2923
        %2977 = vmatpush1.msra.mxu0 %v2922
        %2978 = vmatprep.subr.mxu0 %v2921
        %2979 = vmatpush1.msra.mxu0 %v2920
        %2980 = vmatprep.subr.mxu0 %v2919
        %2981 = vmatpush1.msra.mxu0 %v2918
        %2982 = vmatprep.subr.mxu0 0.0
        %2983 = vmatpush2.msra.mxu0 0.0
        %2984 = vmatprep.subr.mxu0 0.0
        %2985 = vmatpush2.msra.mxu0 0.0
        %2986 = vmatprep.subr.mxu0 0.0
        %2987 = vmatpush2.msra.mxu0 0.0
        %2988 = vmatprep.subr.mxu0 0.0
        %2989 = vmatpush2.msra.mxu0 0.0
        %2990 = vmatprep.subr.mxu0 0.0
        %2991 = vmatpush2.msra.mxu0 0.0
        %2992 = vmatprep.subr.mxu0 0.0
        %2993 = vmatpush2.msra.mxu0 0.0
        %2994 = vmatprep.subr.mxu0 0.0
        %2995 = vmatpush2.msra.mxu0 0.0
        %2996 = vmatprep.subr.mxu0 0.0
        %2997 = vmatpush2.msra.mxu0 0.0
        %2998 = vmatprep.subr.mxu0 0.0
        %2999 = vmatpush2.msra.mxu0 0.0
        %3000 = vmatprep.subr.mxu0 0.0
        %3001 = vmatpush2.msra.mxu0 0.0
        %3002 = vmatprep.subr.mxu0 0.0
        %3003 = vmatpush2.msra.mxu0 0.0
        %3004 = vmatprep.subr.mxu0 0.0
        %3005 = vmatpush2.msra.mxu0 0.0
        %3006 = vmatprep.subr.mxu0 0.0
        %3007 = vmatpush2.msra.mxu0 0.0
        %3008 = vmatprep.subr.mxu0 0.0
        %3009 = vmatpush2.msra.mxu0 0.0
        %3010 = vmatprep.subr.mxu0 0.0
        %3011 = vmatpush2.msra.mxu0 0.0
        %3012 = vmatprep.subr.mxu0 0.0
        %3013 = vmatpush2.msra.mxu0 0.0
        %3014 = vmatprep.mubr.f32.mxu0 0.0
        %3015 = vmatmul.mubr.f32.gmra.mxu0 %v2878
        %v3016 = vpop.f32.mrf.mxu0
        %v3017 = vadd.f32 0.0, %v3016
        %v3018 = vpop.f32.mrf.mxu0
        %v3019 = vadd.f32 0.0, %v3018
        %3020 = vmatprep.mubr.f32.mxu0 0.0
        %3021 = vmatmul.mubr.f32.gmra.mxu0 %v2879
        %v3022 = vpop.f32.mrf.mxu0
        %v3023 = vadd.f32 0.0, %v3022
        %v3024 = vpop.f32.mrf.mxu0
        %v3025 = vadd.f32 0.0, %v3024
        %3026 = vmatprep.mubr.f32.mxu0 0.0
        %3027 = vmatmul.mubr.f32.gmra.mxu0 %v2880
        %v3028 = vpop.f32.mrf.mxu0
        %v3029 = vadd.f32 0.0, %v3028
        %v3030 = vpop.f32.mrf.mxu0
        %v3031 = vadd.f32 0.0, %v3030
        %3032 = vmatprep.mubr.f32.mxu0 0.0
        %3033 = vmatmul.mubr.f32.gmra.mxu0 %v2881
        %v3034 = vpop.f32.mrf.mxu0
        %v3035 = vadd.f32 0.0, %v3034
        %v3036 = vpop.f32.mrf.mxu0
        %v3037 = vadd.f32 0.0, %v3036
        %3038 = vdwg.mxu0
        %3039 = vmatprep.subr.mxu0 %v2916
        %3040 = vmatpush1.msra.mxu0 %v2915
        %3041 = vmatprep.subr.mxu0 %v2914
        %3042 = vmatpush1.msra.mxu0 %v2913
        %3043 = vmatprep.subr.mxu0 %v2912
        %3044 = vmatpush1.msra.mxu0 %v2911
        %3045 = vmatprep.subr.mxu0 %v2910
        %3046 = vmatpush1.msra.mxu0 %v2909
        %3047 = vmatprep.subr.mxu0 %v2908
        %3048 = vmatpush1.msra.mxu0 %v2907
        %3049 = vmatprep.subr.mxu0 %v2906
        %3050 = vmatpush1.msra.mxu0 %v2905
        %3051 = vmatprep.subr.mxu0 %v2904
        %3052 = vmatpush1.msra.mxu0 %v2903
        %3053 = vmatprep.subr.mxu0 %v2902
        %3054 = vmatpush1.msra.mxu0 %v2901
        %3055 = vmatprep.subr.mxu0 %v2900
        %3056 = vmatpush1.msra.mxu0 %v2899
        %3057 = vmatprep.subr.mxu0 %v2898
        %3058 = vmatpush1.msra.mxu0 %v2897
        %3059 = vmatprep.subr.mxu0 %v2896
        %3060 = vmatpush1.msra.mxu0 %v2895
        %3061 = vmatprep.subr.mxu0 %v2894
        %3062 = vmatpush1.msra.mxu0 %v2893
        %3063 = vmatprep.subr.mxu0 %v2892
        %3064 = vmatpush1.msra.mxu0 %v2891
        %3065 = vmatprep.subr.mxu0 %v2890
        %3066 = vmatpush1.msra.mxu0 %v2889
        %3067 = vmatprep.subr.mxu0 %v2888
        %3068 = vmatpush1.msra.mxu0 %v2887
        %3069 = vmatprep.subr.mxu0 %v2886
        %3070 = vmatpush1.msra.mxu0 %v2885
        %3071 = vmatprep.subr.mxu0 0.0
        %3072 = vmatpush2.msra.mxu0 0.0
        %3073 = vmatprep.subr.mxu0 0.0
        %3074 = vmatpush2.msra.mxu0 0.0
        %3075 = vmatprep.subr.mxu0 0.0
        %3076 = vmatpush2.msra.mxu0 0.0
        %3077 = vmatprep.subr.mxu0 0.0
        %3078 = vmatpush2.msra.mxu0 0.0
        %3079 = vmatprep.subr.mxu0 0.0
        %3080 = vmatpush2.msra.mxu0 0.0
        %3081 = vmatprep.subr.mxu0 0.0
        %3082 = vmatpush2.msra.mxu0 0.0
        %3083 = vmatprep.subr.mxu0 0.0
        %3084 = vmatpush2.msra.mxu0 0.0
        %3085 = vmatprep.subr.mxu0 0.0
        %3086 = vmatpush2.msra.mxu0 0.0
        %3087 = vmatprep.subr.mxu0 0.0
        %3088 = vmatpush2.msra.mxu0 0.0
        %3089 = vmatprep.subr.mxu0 0.0
        %3090 = vmatpush2.msra.mxu0 0.0
        %3091 = vmatprep.subr.mxu0 0.0
        %3092 = vmatpush2.msra.mxu0 0.0
        %3093 = vmatprep.subr.mxu0 0.0
        %3094 = vmatpush2.msra.mxu0 0.0
        %3095 = vmatprep.subr.mxu0 0.0
        %3096 = vmatpush2.msra.mxu0 0.0
        %3097 = vmatprep.subr.mxu0 0.0
        %3098 = vmatpush2.msra.mxu0 0.0
        %3099 = vmatprep.subr.mxu0 0.0
        %3100 = vmatpush2.msra.mxu0 0.0
        %3101 = vmatprep.subr.mxu0 0.0
        %3102 = vmatpush2.msra.mxu0 0.0
        %3103 = vmatprep.mubr.f32.mxu0 0.0
        %3104 = vmatmul.mubr.f32.gmra.mxu0 %v2860
        %v3105 = vpop.f32.mrf.mxu0
        %v3106 = vadd.f32 %v3017, %v3105
        %v3107 = vpop.f32.mrf.mxu0
        %v3108 = vadd.f32 %v3019, %v3107
        %3109 = vmatprep.mubr.f32.mxu0 0.0
        %3110 = vmatmul.mubr.f32.gmra.mxu0 %v2861
        %v3111 = vpop.f32.mrf.mxu0
        %v3112 = vadd.f32 %v3023, %v3111
        %v3113 = vpop.f32.mrf.mxu0
        %v3114 = vadd.f32 %v3025, %v3113
        %3115 = vmatprep.mubr.f32.mxu0 0.0
        %3116 = vmatmul.mubr.f32.gmra.mxu0 %v2862
        %v3117 = vpop.f32.mrf.mxu0
        %v3118 = vadd.f32 %v3029, %v3117
        %v3119 = vpop.f32.mrf.mxu0
        %v3120 = vadd.f32 %v3031, %v3119
        %3121 = vmatprep.mubr.f32.mxu0 0.0
        %3122 = vmatmul.mubr.f32.gmra.mxu0 %v2863
        %v3123 = vpop.f32.mrf.mxu0
        %v3124 = vadd.f32 %v3035, %v3123
        %v3125 = vpop.f32.mrf.mxu0
        %v3126 = vadd.f32 %v3037, %v3125
        %3127 = vdwg.mxu0
        %3128 = vmatprep.subr.mxu0 %v2949
        %3129 = vmatpush1.msra.mxu0 %v2948
        %3130 = vmatprep.subr.mxu0 %v2947
        %3131 = vmatpush1.msra.mxu0 %v2946
        %3132 = vmatprep.subr.mxu0 %v2945
        %3133 = vmatpush1.msra.mxu0 %v2944
        %3134 = vmatprep.subr.mxu0 %v2943
        %3135 = vmatpush1.msra.mxu0 %v2942
        %3136 = vmatprep.subr.mxu0 %v2941
        %3137 = vmatpush1.msra.mxu0 %v2940
        %3138 = vmatprep.subr.mxu0 %v2939
        %3139 = vmatpush1.msra.mxu0 %v2938
        %3140 = vmatprep.subr.mxu0 %v2937
        %3141 = vmatpush1.msra.mxu0 %v2936
        %3142 = vmatprep.subr.mxu0 %v2935
        %3143 = vmatpush1.msra.mxu0 %v2934
        %3144 = vmatprep.subr.mxu0 %v2933
        %3145 = vmatpush1.msra.mxu0 %v2932
        %3146 = vmatprep.subr.mxu0 %v2931
        %3147 = vmatpush1.msra.mxu0 %v2930
        %3148 = vmatprep.subr.mxu0 %v2929
        %3149 = vmatpush1.msra.mxu0 %v2928
        %3150 = vmatprep.subr.mxu0 %v2927
        %3151 = vmatpush1.msra.mxu0 %v2926
        %3152 = vmatprep.subr.mxu0 %v2925
        %3153 = vmatpush1.msra.mxu0 %v2924
        %3154 = vmatprep.subr.mxu0 %v2923
        %3155 = vmatpush1.msra.mxu0 %v2922
        %3156 = vmatprep.subr.mxu0 %v2921
        %3157 = vmatpush1.msra.mxu0 %v2920
        %3158 = vmatprep.subr.mxu0 %v2919
        %3159 = vmatpush1.msra.mxu0 %v2918
        %3160 = vmatprep.subr.mxu0 0.0
        %3161 = vmatpush2.msra.mxu0 0.0
        %3162 = vmatprep.subr.mxu0 0.0
        %3163 = vmatpush2.msra.mxu0 0.0
        %3164 = vmatprep.subr.mxu0 0.0
        %3165 = vmatpush2.msra.mxu0 0.0
        %3166 = vmatprep.subr.mxu0 0.0
        %3167 = vmatpush2.msra.mxu0 0.0
        %3168 = vmatprep.subr.mxu0 0.0
        %3169 = vmatpush2.msra.mxu0 0.0
        %3170 = vmatprep.subr.mxu0 0.0
        %3171 = vmatpush2.msra.mxu0 0.0
        %3172 = vmatprep.subr.mxu0 0.0
        %3173 = vmatpush2.msra.mxu0 0.0
        %3174 = vmatprep.subr.mxu0 0.0
        %3175 = vmatpush2.msra.mxu0 0.0
        %3176 = vmatprep.subr.mxu0 0.0
        %3177 = vmatpush2.msra.mxu0 0.0
        %3178 = vmatprep.subr.mxu0 0.0
        %3179 = vmatpush2.msra.mxu0 0.0
        %3180 = vmatprep.subr.mxu0 0.0
        %3181 = vmatpush2.msra.mxu0 0.0
        %3182 = vmatprep.subr.mxu0 0.0
        %3183 = vmatpush2.msra.mxu0 0.0
        %3184 = vmatprep.subr.mxu0 0.0
        %3185 = vmatpush2.msra.mxu0 0.0
        %3186 = vmatprep.subr.mxu0 0.0
        %3187 = vmatpush2.msra.mxu0 0.0
        %3188 = vmatprep.subr.mxu0 0.0
        %3189 = vmatpush2.msra.mxu0 0.0
        %3190 = vmatprep.subr.mxu0 0.0
        %3191 = vmatpush2.msra.mxu0 0.0
        %3192 = vmatprep.mubr.f32.mxu0 0.0
        %3193 = vmatmul.mubr.f32.gmra.mxu0 %v2861
        %v3194 = vpop.f32.mrf.mxu0
        %v3195 = vadd.f32 0.0, %v3194
        %v3196 = vpop.f32.mrf.mxu0
        %v3197 = vadd.f32 0.0, %v3196
        %3198 = vmatprep.mubr.f32.mxu0 0.0
        %3199 = vmatmul.mubr.f32.gmra.mxu0 %v2862
        %v3200 = vpop.f32.mrf.mxu0
        %v3201 = vadd.f32 0.0, %v3200
        %v3202 = vpop.f32.mrf.mxu0
        %v3203 = vadd.f32 0.0, %v3202
        %3204 = vmatprep.mubr.f32.mxu0 0.0
        %3205 = vmatmul.mubr.f32.gmra.mxu0 %v2863
        %v3206 = vpop.f32.mrf.mxu0
        %v3207 = vadd.f32 0.0, %v3206
        %v3208 = vpop.f32.mrf.mxu0
        %v3209 = vadd.f32 0.0, %v3208
        %3210 = vmatprep.mubr.f32.mxu0 0.0
        %3211 = vmatmul.mubr.f32.gmra.mxu0 %v2864
        %v3212 = vpop.f32.mrf.mxu0
        %v3213 = vadd.f32 0.0, %v3212
        %v3214 = vpop.f32.mrf.mxu0
        %v3215 = vadd.f32 0.0, %v3214
        %3216 = vdwg.mxu0
        %3217 = vmatprep.subr.mxu0 %v2916
        %3218 = vmatpush1.msra.mxu0 %v2915
        %3219 = vmatprep.subr.mxu0 %v2914
        %3220 = vmatpush1.msra.mxu0 %v2913
        %3221 = vmatprep.subr.mxu0 %v2912
        %3222 = vmatpush1.msra.mxu0 %v2911
        %3223 = vmatprep.subr.mxu0 %v2910
        %3224 = vmatpush1.msra.mxu0 %v2909
        %3225 = vmatprep.subr.mxu0 %v2908
        %3226 = vmatpush1.msra.mxu0 %v2907
        %3227 = vmatprep.subr.mxu0 %v2906
        %3228 = vmatpush1.msra.mxu0 %v2905
        %3229 = vmatprep.subr.mxu0 %v2904
        %3230 = vmatpush1.msra.mxu0 %v2903
        %3231 = vmatprep.subr.mxu0 %v2902
        %3232 = vmatpush1.msra.mxu0 %v2901
        %3233 = vmatprep.subr.mxu0 %v2900
        %3234 = vmatpush1.msra.mxu0 %v2899
        %3235 = vmatprep.subr.mxu0 %v2898
        %3236 = vmatpush1.msra.mxu0 %v2897
        %3237 = vmatprep.subr.mxu0 %v2896
        %3238 = vmatpush1.msra.mxu0 %v2895
        %3239 = vmatprep.subr.mxu0 %v2894
        %3240 = vmatpush1.msra.mxu0 %v2893
        %3241 = vmatprep.subr.mxu0 %v2892
        %3242 = vmatpush1.msra.mxu0 %v2891
        %3243 = vmatprep.subr.mxu0 %v2890
        %3244 = vmatpush1.msra.mxu0 %v2889
        %3245 = vmatprep.subr.mxu0 %v2888
        %3246 = vmatpush1.msra.mxu0 %v2887
        %3247 = vmatprep.subr.mxu0 %v2886
        %3248 = vmatpush1.msra.mxu0 %v2885
        %3249 = vmatprep.subr.mxu0 0.0
        %3250 = vmatpush2.msra.mxu0 0.0
        %3251 = vmatprep.subr.mxu0 0.0
        %3252 = vmatpush2.msra.mxu0 0.0
        %3253 = vmatprep.subr.mxu0 0.0
        %3254 = vmatpush2.msra.mxu0 0.0
        %3255 = vmatprep.subr.mxu0 0.0
        %3256 = vmatpush2.msra.mxu0 0.0
        %3257 = vmatprep.subr.mxu0 0.0
        %3258 = vmatpush2.msra.mxu0 0.0
        %3259 = vmatprep.subr.mxu0 0.0
        %3260 = vmatpush2.msra.mxu0 0.0
        %3261 = vmatprep.subr.mxu0 0.0
        %3262 = vmatpush2.msra.mxu0 0.0
        %3263 = vmatprep.subr.mxu0 0.0
        %3264 = vmatpush2.msra.mxu0 0.0
        %3265 = vmatprep.subr.mxu0 0.0
        %3266 = vmatpush2.msra.mxu0 0.0
        %3267 = vmatprep.subr.mxu0 0.0
        %3268 = vmatpush2.msra.mxu0 0.0
        %3269 = vmatprep.subr.mxu0 0.0
        %3270 = vmatpush2.msra.mxu0 0.0
        %3271 = vmatprep.subr.mxu0 0.0
        %3272 = vmatpush2.msra.mxu0 0.0
        %3273 = vmatprep.subr.mxu0 0.0
        %3274 = vmatpush2.msra.mxu0 0.0
        %3275 = vmatprep.subr.mxu0 0.0
        %3276 = vmatpush2.msra.mxu0 0.0
        %3277 = vmatprep.subr.mxu0 0.0
        %3278 = vmatpush2.msra.mxu0 0.0
        %3279 = vmatprep.subr.mxu0 0.0
        %3280 = vmatpush2.msra.mxu0 0.0
        %3281 = vmatprep.mubr.f32.mxu0 0.0
        %3282 = vmatmul.mubr.f32.gmra.mxu0 %v2878
        %v3283 = vpop.f32.mrf.mxu0
        %v3284 = vadd.f32 %v3195, %v3283
        %v3285 = vpop.f32.mrf.mxu0
        %v3286 = vadd.f32 %v3197, %v3285
        %3287 = vmatprep.mubr.f32.mxu0 0.0
        %3288 = vmatmul.mubr.f32.gmra.mxu0 %v2879
        %v3289 = vpop.f32.mrf.mxu0
        %v3290 = vadd.f32 %v3201, %v3289
        %v3291 = vpop.f32.mrf.mxu0
        %v3292 = vadd.f32 %v3203, %v3291
        %3293 = vmatprep.mubr.f32.mxu0 0.0
        %3294 = vmatmul.mubr.f32.gmra.mxu0 %v2880
        %v3295 = vpop.f32.mrf.mxu0
        %v3296 = vadd.f32 %v3207, %v3295
        %v3297 = vpop.f32.mrf.mxu0
        %v3298 = vadd.f32 %v3209, %v3297
        %3299 = vmatprep.mubr.f32.mxu0 0.0
        %3300 = vmatmul.mubr.f32.gmra.mxu0 %v2881
        %v3301 = vpop.f32.mrf.mxu0
        %v3302 = vadd.f32 %v3213, %v3301
        %v3303 = vpop.f32.mrf.mxu0
        %v3304 = vadd.f32 %v3215, %v3303
        %3305 = vdwg.mxu0
        %s3306 = scalar_lea.vmem %s3, 512
        %v3307 = vld [vmem:[%s3306] sm:$0xff]
        %v3308 = vld [vmem:[%s3306 + $0x8] sm:$0xff]
        %v3309 = vld [vmem:[%s3306 + $0x10] sm:$0xff]
        %v3310 = vld [vmem:[%s3306 + $0x18] sm:$0xff]
        %v3311 = vld [vmem:[%s3306 + $0x20] sm:$0xff]
        %v3312 = vld [vmem:[%s3306 + $0x28] sm:$0xff]
        %v3313 = vld [vmem:[%s3306 + $0x30] sm:$0xff]
        %v3314 = vld [vmem:[%s3306 + $0x38] sm:$0xff]
        %v3315 = vld [vmem:[%s3306 + $0x40] sm:$0xff]
        %v3316 = vld [vmem:[%s3306 + $0x48] sm:$0xff]
        %v3317 = vld [vmem:[%s3306 + $0x50] sm:$0xff]
        %v3318 = vld [vmem:[%s3306 + $0x58] sm:$0xff]
        %v3319 = vld [vmem:[%s3306 + $0x60] sm:$0xff]
        %v3320 = vld [vmem:[%s3306 + $0x68] sm:$0xff]
        %v3321 = vld [vmem:[%s3306 + $0x70] sm:$0xff]
        %v3322 = vld [vmem:[%s3306 + $0x78] sm:$0xff]
        %v3323 = vld [vmem:[%s3306 + $0x80] sm:$0xff]
        %v3324 = vld [vmem:[%s3306 + $0x88] sm:$0xff]
        %v3325 = vld [vmem:[%s3306 + $0x90] sm:$0xff]
        %v3326 = vld [vmem:[%s3306 + $0x98] sm:$0xff]
        %v3327 = vld [vmem:[%s3306 + $0xa0] sm:$0xff]
        %v3328 = vld [vmem:[%s3306 + $0xa8] sm:$0xff]
        %v3329 = vld [vmem:[%s3306 + $0xb0] sm:$0xff]
        %v3330 = vld [vmem:[%s3306 + $0xb8] sm:$0xff]
        %v3331 = vld [vmem:[%s3306 + $0xc0] sm:$0xff]
        %v3332 = vld [vmem:[%s3306 + $0xc8] sm:$0xff]
        %v3333 = vld [vmem:[%s3306 + $0xd0] sm:$0xff]
        %v3334 = vld [vmem:[%s3306 + $0xd8] sm:$0xff]
        %v3335 = vld [vmem:[%s3306 + $0xe0] sm:$0xff]
        %v3336 = vld [vmem:[%s3306 + $0xe8] sm:$0xff]
        %v3337 = vld [vmem:[%s3306 + $0xf0] sm:$0xff]
        %v3338 = vld [vmem:[%s3306 + $0xf8] sm:$0xff]
        %3339 = vmatprep.subr.mxu0 %v3338
        %3340 = vmatpush1.msra.mxu0 %v3337
        %3341 = vmatprep.subr.mxu0 %v3336
        %3342 = vmatpush1.msra.mxu0 %v3335
        %3343 = vmatprep.subr.mxu0 %v3334
        %3344 = vmatpush1.msra.mxu0 %v3333
        %3345 = vmatprep.subr.mxu0 %v3332
        %3346 = vmatpush1.msra.mxu0 %v3331
        %3347 = vmatprep.subr.mxu0 %v3330
        %3348 = vmatpush1.msra.mxu0 %v3329
        %3349 = vmatprep.subr.mxu0 %v3328
        %3350 = vmatpush1.msra.mxu0 %v3327
        %3351 = vmatprep.subr.mxu0 %v3326
        %3352 = vmatpush1.msra.mxu0 %v3325
        %3353 = vmatprep.subr.mxu0 %v3324
        %3354 = vmatpush1.msra.mxu0 %v3323
        %3355 = vmatprep.subr.mxu0 %v3322
        %3356 = vmatpush1.msra.mxu0 %v3321
        %3357 = vmatprep.subr.mxu0 %v3320
        %3358 = vmatpush1.msra.mxu0 %v3319
        %3359 = vmatprep.subr.mxu0 %v3318
        %3360 = vmatpush1.msra.mxu0 %v3317
        %3361 = vmatprep.subr.mxu0 %v3316
        %3362 = vmatpush1.msra.mxu0 %v3315
        %3363 = vmatprep.subr.mxu0 %v3314
        %3364 = vmatpush1.msra.mxu0 %v3313
        %3365 = vmatprep.subr.mxu0 %v3312
        %3366 = vmatpush1.msra.mxu0 %v3311
        %3367 = vmatprep.subr.mxu0 %v3310
        %3368 = vmatpush1.msra.mxu0 %v3309
        %3369 = vmatprep.subr.mxu0 %v3308
        %3370 = vmatpush1.msra.mxu0 %v3307
        %3371 = vmatprep.subr.mxu0 0.0
        %3372 = vmatpush2.msra.mxu0 0.0
        %3373 = vmatprep.subr.mxu0 0.0
        %3374 = vmatpush2.msra.mxu0 0.0
        %3375 = vmatprep.subr.mxu0 0.0
        %3376 = vmatpush2.msra.mxu0 0.0
        %3377 = vmatprep.subr.mxu0 0.0
        %3378 = vmatpush2.msra.mxu0 0.0
        %3379 = vmatprep.subr.mxu0 0.0
        %3380 = vmatpush2.msra.mxu0 0.0
        %3381 = vmatprep.subr.mxu0 0.0
        %3382 = vmatpush2.msra.mxu0 0.0
        %3383 = vmatprep.subr.mxu0 0.0
        %3384 = vmatpush2.msra.mxu0 0.0
        %3385 = vmatprep.subr.mxu0 0.0
        %3386 = vmatpush2.msra.mxu0 0.0
        %3387 = vmatprep.subr.mxu0 0.0
        %3388 = vmatpush2.msra.mxu0 0.0
        %3389 = vmatprep.subr.mxu0 0.0
        %3390 = vmatpush2.msra.mxu0 0.0
        %3391 = vmatprep.subr.mxu0 0.0
        %3392 = vmatpush2.msra.mxu0 0.0
        %3393 = vmatprep.subr.mxu0 0.0
        %3394 = vmatpush2.msra.mxu0 0.0
        %3395 = vmatprep.subr.mxu0 0.0
        %3396 = vmatpush2.msra.mxu0 0.0
        %3397 = vmatprep.subr.mxu0 0.0
        %3398 = vmatpush2.msra.mxu0 0.0
        %3399 = vmatprep.subr.mxu0 0.0
        %3400 = vmatpush2.msra.mxu0 0.0
        %3401 = vmatprep.subr.mxu0 0.0
        %3402 = vmatpush2.msra.mxu0 0.0
        %3403 = vmatprep.mubr.f32.mxu0 0.0
        %3404 = vmatmul.mubr.f32.gmra.mxu0 %v2861
        %v3405 = vpop.f32.mrf.mxu0
        %v3406 = vadd.f32 0.0, %v3405
        %v3407 = vpop.f32.mrf.mxu0
        %v3408 = vadd.f32 0.0, %v3407
        %3409 = vmatprep.mubr.f32.mxu0 0.0
        %3410 = vmatmul.mubr.f32.gmra.mxu0 %v2862
        %v3411 = vpop.f32.mrf.mxu0
        %v3412 = vadd.f32 0.0, %v3411
        %v3413 = vpop.f32.mrf.mxu0
        %v3414 = vadd.f32 0.0, %v3413
        %3415 = vmatprep.mubr.f32.mxu0 0.0
        %3416 = vmatmul.mubr.f32.gmra.mxu0 %v2863
        %v3417 = vpop.f32.mrf.mxu0
        %v3418 = vadd.f32 0.0, %v3417
        %v3419 = vpop.f32.mrf.mxu0
        %v3420 = vadd.f32 0.0, %v3419
        %3421 = vmatprep.mubr.f32.mxu0 0.0
        %3422 = vmatmul.mubr.f32.gmra.mxu0 %v2864
        %v3423 = vpop.f32.mrf.mxu0
        %v3424 = vadd.f32 0.0, %v3423
        %v3425 = vpop.f32.mrf.mxu0
        %v3426 = vadd.f32 0.0, %v3425
        %3427 = vdwg.mxu0
        %v3428 = vadd.f32 %v3106, %v3406
        %v3429 = vadd.f32 %v3108, %v3408
        %v3430 = vadd.f32 %v3112, %v3412
        %v3431 = vadd.f32 %v3114, %v3414
        %v3432 = vadd.f32 %v3118, %v3418
        %v3433 = vadd.f32 %v3120, %v3420
        %v3434 = vadd.f32 %v3124, %v3424
        %v3435 = vadd.f32 %v3126, %v3426
        %3436 = vmatprep.subr.mxu0 %v3338
        %3437 = vmatpush1.msra.mxu0 %v3337
        %3438 = vmatprep.subr.mxu0 %v3336
        %3439 = vmatpush1.msra.mxu0 %v3335
        %3440 = vmatprep.subr.mxu0 %v3334
        %3441 = vmatpush1.msra.mxu0 %v3333
        %3442 = vmatprep.subr.mxu0 %v3332
        %3443 = vmatpush1.msra.mxu0 %v3331
        %3444 = vmatprep.subr.mxu0 %v3330
        %3445 = vmatpush1.msra.mxu0 %v3329
        %3446 = vmatprep.subr.mxu0 %v3328
        %3447 = vmatpush1.msra.mxu0 %v3327
        %3448 = vmatprep.subr.mxu0 %v3326
        %3449 = vmatpush1.msra.mxu0 %v3325
        %3450 = vmatprep.subr.mxu0 %v3324
        %3451 = vmatpush1.msra.mxu0 %v3323
        %3452 = vmatprep.subr.mxu0 %v3322
        %3453 = vmatpush1.msra.mxu0 %v3321
        %3454 = vmatprep.subr.mxu0 %v3320
        %3455 = vmatpush1.msra.mxu0 %v3319
        %3456 = vmatprep.subr.mxu0 %v3318
        %3457 = vmatpush1.msra.mxu0 %v3317
        %3458 = vmatprep.subr.mxu0 %v3316
        %3459 = vmatpush1.msra.mxu0 %v3315
        %3460 = vmatprep.subr.mxu0 %v3314
        %3461 = vmatpush1.msra.mxu0 %v3313
        %3462 = vmatprep.subr.mxu0 %v3312
        %3463 = vmatpush1.msra.mxu0 %v3311
        %3464 = vmatprep.subr.mxu0 %v3310
        %3465 = vmatpush1.msra.mxu0 %v3309
        %3466 = vmatprep.subr.mxu0 %v3308
        %3467 = vmatpush1.msra.mxu0 %v3307
        %3468 = vmatprep.subr.mxu0 0.0
        %3469 = vmatpush2.msra.mxu0 0.0
        %3470 = vmatprep.subr.mxu0 0.0
        %3471 = vmatpush2.msra.mxu0 0.0
        %3472 = vmatprep.subr.mxu0 0.0
        %3473 = vmatpush2.msra.mxu0 0.0
        %3474 = vmatprep.subr.mxu0 0.0
        %3475 = vmatpush2.msra.mxu0 0.0
        %3476 = vmatprep.subr.mxu0 0.0
        %3477 = vmatpush2.msra.mxu0 0.0
        %3478 = vmatprep.subr.mxu0 0.0
        %3479 = vmatpush2.msra.mxu0 0.0
        %3480 = vmatprep.subr.mxu0 0.0
        %3481 = vmatpush2.msra.mxu0 0.0
        %3482 = vmatprep.subr.mxu0 0.0
        %3483 = vmatpush2.msra.mxu0 0.0
        %3484 = vmatprep.subr.mxu0 0.0
        %3485 = vmatpush2.msra.mxu0 0.0
        %3486 = vmatprep.subr.mxu0 0.0
        %3487 = vmatpush2.msra.mxu0 0.0
        %3488 = vmatprep.subr.mxu0 0.0
        %3489 = vmatpush2.msra.mxu0 0.0
        %3490 = vmatprep.subr.mxu0 0.0
        %3491 = vmatpush2.msra.mxu0 0.0
        %3492 = vmatprep.subr.mxu0 0.0
        %3493 = vmatpush2.msra.mxu0 0.0
        %3494 = vmatprep.subr.mxu0 0.0
        %3495 = vmatpush2.msra.mxu0 0.0
        %3496 = vmatprep.subr.mxu0 0.0
        %3497 = vmatpush2.msra.mxu0 0.0
        %3498 = vmatprep.subr.mxu0 0.0
        %3499 = vmatpush2.msra.mxu0 0.0
        %3500 = vmatprep.mubr.f32.mxu0 0.0
        %3501 = vmatmul.mubr.f32.gmra.mxu0 %v2879
        %v3502 = vpop.f32.mrf.mxu0
        %v3503 = vadd.f32 0.0, %v3502
        %v3504 = vpop.f32.mrf.mxu0
        %v3505 = vadd.f32 0.0, %v3504
        %3506 = vmatprep.mubr.f32.mxu0 0.0
        %3507 = vmatmul.mubr.f32.gmra.mxu0 %v2880
        %v3508 = vpop.f32.mrf.mxu0
        %v3509 = vadd.f32 0.0, %v3508
        %v3510 = vpop.f32.mrf.mxu0
        %v3511 = vadd.f32 0.0, %v3510
        %3512 = vmatprep.mubr.f32.mxu0 0.0
        %3513 = vmatmul.mubr.f32.gmra.mxu0 %v2881
        %v3514 = vpop.f32.mrf.mxu0
        %v3515 = vadd.f32 0.0, %v3514
        %v3516 = vpop.f32.mrf.mxu0
        %v3517 = vadd.f32 0.0, %v3516
        %3518 = vmatprep.mubr.f32.mxu0 0.0
        %3519 = vmatmul.mubr.f32.gmra.mxu0 %v2882
        %v3520 = vpop.f32.mrf.mxu0
        %v3521 = vadd.f32 0.0, %v3520
        %v3522 = vpop.f32.mrf.mxu0
        %v3523 = vadd.f32 0.0, %v3522
        %3524 = vdwg.mxu0
        %v3525 = vadd.f32 %v3284, %v3503
        %v3526 = vadd.f32 %v3286, %v3505
        %v3527 = vadd.f32 %v3290, %v3509
        %v3528 = vadd.f32 %v3292, %v3511
        %v3529 = vadd.f32 %v3296, %v3515
        %v3530 = vadd.f32 %v3298, %v3517
        %v3531 = vadd.f32 %v3302, %v3521
        %v3532 = vadd.f32 %v3304, %v3523
        %s3533 = scalar_lea.vmem %s3, 768
        %v3534 = vld [vmem:[%s3533] sm:$0xff]
        %v3535 = vld [vmem:[%s3533 + $0x8] sm:$0xff]
        %v3536 = vld [vmem:[%s3533 + $0x10] sm:$0xff]
        %v3537 = vld [vmem:[%s3533 + $0x18] sm:$0xff]
        %v3538 = vld [vmem:[%s3533 + $0x20] sm:$0xff]
        %v3539 = vld [vmem:[%s3533 + $0x28] sm:$0xff]
        %v3540 = vld [vmem:[%s3533 + $0x30] sm:$0xff]
        %v3541 = vld [vmem:[%s3533 + $0x38] sm:$0xff]
        %v3542 = vld [vmem:[%s3533 + $0x40] sm:$0xff]
        %v3543 = vld [vmem:[%s3533 + $0x48] sm:$0xff]
        %v3544 = vld [vmem:[%s3533 + $0x50] sm:$0xff]
        %v3545 = vld [vmem:[%s3533 + $0x58] sm:$0xff]
        %v3546 = vld [vmem:[%s3533 + $0x60] sm:$0xff]
        %v3547 = vld [vmem:[%s3533 + $0x68] sm:$0xff]
        %v3548 = vld [vmem:[%s3533 + $0x70] sm:$0xff]
        %v3549 = vld [vmem:[%s3533 + $0x78] sm:$0xff]
        %v3550 = vld [vmem:[%s3533 + $0x80] sm:$0xff]
        %v3551 = vld [vmem:[%s3533 + $0x88] sm:$0xff]
        %v3552 = vld [vmem:[%s3533 + $0x90] sm:$0xff]
        %v3553 = vld [vmem:[%s3533 + $0x98] sm:$0xff]
        %v3554 = vld [vmem:[%s3533 + $0xa0] sm:$0xff]
        %v3555 = vld [vmem:[%s3533 + $0xa8] sm:$0xff]
        %v3556 = vld [vmem:[%s3533 + $0xb0] sm:$0xff]
        %v3557 = vld [vmem:[%s3533 + $0xb8] sm:$0xff]
        %v3558 = vld [vmem:[%s3533 + $0xc0] sm:$0xff]
        %v3559 = vld [vmem:[%s3533 + $0xc8] sm:$0xff]
        %v3560 = vld [vmem:[%s3533 + $0xd0] sm:$0xff]
        %v3561 = vld [vmem:[%s3533 + $0xd8] sm:$0xff]
        %v3562 = vld [vmem:[%s3533 + $0xe0] sm:$0xff]
        %v3563 = vld [vmem:[%s3533 + $0xe8] sm:$0xff]
        %v3564 = vld [vmem:[%s3533 + $0xf0] sm:$0xff]
        %v3565 = vld [vmem:[%s3533 + $0xf8] sm:$0xff]
        %3566 = vmatprep.subr.mxu0 %v3565
        %3567 = vmatpush1.msra.mxu0 %v3564
        %3568 = vmatprep.subr.mxu0 %v3563
        %3569 = vmatpush1.msra.mxu0 %v3562
        %3570 = vmatprep.subr.mxu0 %v3561
        %3571 = vmatpush1.msra.mxu0 %v3560
        %3572 = vmatprep.subr.mxu0 %v3559
        %3573 = vmatpush1.msra.mxu0 %v3558
        %3574 = vmatprep.subr.mxu0 %v3557
        %3575 = vmatpush1.msra.mxu0 %v3556
        %3576 = vmatprep.subr.mxu0 %v3555
        %3577 = vmatpush1.msra.mxu0 %v3554
        %3578 = vmatprep.subr.mxu0 %v3553
        %3579 = vmatpush1.msra.mxu0 %v3552
        %3580 = vmatprep.subr.mxu0 %v3551
        %3581 = vmatpush1.msra.mxu0 %v3550
        %3582 = vmatprep.subr.mxu0 %v3549
        %3583 = vmatpush1.msra.mxu0 %v3548
        %3584 = vmatprep.subr.mxu0 %v3547
        %3585 = vmatpush1.msra.mxu0 %v3546
        %3586 = vmatprep.subr.mxu0 %v3545
        %3587 = vmatpush1.msra.mxu0 %v3544
        %3588 = vmatprep.subr.mxu0 %v3543
        %3589 = vmatpush1.msra.mxu0 %v3542
        %3590 = vmatprep.subr.mxu0 %v3541
        %3591 = vmatpush1.msra.mxu0 %v3540
        %3592 = vmatprep.subr.mxu0 %v3539
        %3593 = vmatpush1.msra.mxu0 %v3538
        %3594 = vmatprep.subr.mxu0 %v3537
        %3595 = vmatpush1.msra.mxu0 %v3536
        %3596 = vmatprep.subr.mxu0 %v3535
        %3597 = vmatpush1.msra.mxu0 %v3534
        %3598 = vmatprep.subr.mxu0 0.0
        %3599 = vmatpush2.msra.mxu0 0.0
        %3600 = vmatprep.subr.mxu0 0.0
        %3601 = vmatpush2.msra.mxu0 0.0
        %3602 = vmatprep.subr.mxu0 0.0
        %3603 = vmatpush2.msra.mxu0 0.0
        %3604 = vmatprep.subr.mxu0 0.0
        %3605 = vmatpush2.msra.mxu0 0.0
        %3606 = vmatprep.subr.mxu0 0.0
        %3607 = vmatpush2.msra.mxu0 0.0
        %3608 = vmatprep.subr.mxu0 0.0
        %3609 = vmatpush2.msra.mxu0 0.0
        %3610 = vmatprep.subr.mxu0 0.0
        %3611 = vmatpush2.msra.mxu0 0.0
        %3612 = vmatprep.subr.mxu0 0.0
        %3613 = vmatpush2.msra.mxu0 0.0
        %3614 = vmatprep.subr.mxu0 0.0
        %3615 = vmatpush2.msra.mxu0 0.0
        %3616 = vmatprep.subr.mxu0 0.0
        %3617 = vmatpush2.msra.mxu0 0.0
        %3618 = vmatprep.subr.mxu0 0.0
        %3619 = vmatpush2.msra.mxu0 0.0
        %3620 = vmatprep.subr.mxu0 0.0
        %3621 = vmatpush2.msra.mxu0 0.0
        %3622 = vmatprep.subr.mxu0 0.0
        %3623 = vmatpush2.msra.mxu0 0.0
        %3624 = vmatprep.subr.mxu0 0.0
        %3625 = vmatpush2.msra.mxu0 0.0
        %3626 = vmatprep.subr.mxu0 0.0
        %3627 = vmatpush2.msra.mxu0 0.0
        %3628 = vmatprep.subr.mxu0 0.0
        %3629 = vmatpush2.msra.mxu0 0.0
        %3630 = vmatprep.mubr.f32.mxu0 0.0
        %3631 = vmatmul.mubr.f32.gmra.mxu0 %v2879
        %v3632 = vpop.f32.mrf.mxu0
        %v3633 = vadd.f32 0.0, %v3632
        %v3634 = vpop.f32.mrf.mxu0
        %v3635 = vadd.f32 0.0, %v3634
        %3636 = vmatprep.mubr.f32.mxu0 0.0
        %3637 = vmatmul.mubr.f32.gmra.mxu0 %v2880
        %v3638 = vpop.f32.mrf.mxu0
        %v3639 = vadd.f32 0.0, %v3638
        %v3640 = vpop.f32.mrf.mxu0
        %v3641 = vadd.f32 0.0, %v3640
        %3642 = vmatprep.mubr.f32.mxu0 0.0
        %3643 = vmatmul.mubr.f32.gmra.mxu0 %v2881
        %v3644 = vpop.f32.mrf.mxu0
        %v3645 = vadd.f32 0.0, %v3644
        %v3646 = vpop.f32.mrf.mxu0
        %v3647 = vadd.f32 0.0, %v3646
        %3648 = vmatprep.mubr.f32.mxu0 0.0
        %3649 = vmatmul.mubr.f32.gmra.mxu0 %v2882
        %v3650 = vpop.f32.mrf.mxu0
        %v3651 = vadd.f32 0.0, %v3650
        %v3652 = vpop.f32.mrf.mxu0
        %v3653 = vadd.f32 0.0, %v3652
        %3654 = vdwg.mxu0
        %v3655 = vadd.f32 %v3428, %v3633
        %v3656 = vadd.f32 %v3429, %v3635
        %v3657 = vadd.f32 %v3430, %v3639
        %v3658 = vadd.f32 %v3431, %v3641
        %v3659 = vadd.f32 %v3432, %v3645
        %v3660 = vadd.f32 %v3433, %v3647
        %v3661 = vadd.f32 %v3434, %v3651
        %v3662 = vadd.f32 %v3435, %v3653
        %3663 = vmatprep.subr.mxu0 %v3565
        %3664 = vmatpush1.msra.mxu0 %v3564
        %3665 = vmatprep.subr.mxu0 %v3563
        %3666 = vmatpush1.msra.mxu0 %v3562
        %3667 = vmatprep.subr.mxu0 %v3561
        %3668 = vmatpush1.msra.mxu0 %v3560
        %3669 = vmatprep.subr.mxu0 %v3559
        %3670 = vmatpush1.msra.mxu0 %v3558
        %3671 = vmatprep.subr.mxu0 %v3557
        %3672 = vmatpush1.msra.mxu0 %v3556
        %3673 = vmatprep.subr.mxu0 %v3555
        %3674 = vmatpush1.msra.mxu0 %v3554
        %3675 = vmatprep.subr.mxu0 %v3553
        %3676 = vmatpush1.msra.mxu0 %v3552
        %3677 = vmatprep.subr.mxu0 %v3551
        %3678 = vmatpush1.msra.mxu0 %v3550
        %3679 = vmatprep.subr.mxu0 %v3549
        %3680 = vmatpush1.msra.mxu0 %v3548
        %3681 = vmatprep.subr.mxu0 %v3547
        %3682 = vmatpush1.msra.mxu0 %v3546
        %3683 = vmatprep.subr.mxu0 %v3545
        %3684 = vmatpush1.msra.mxu0 %v3544
        %3685 = vmatprep.subr.mxu0 %v3543
        %3686 = vmatpush1.msra.mxu0 %v3542
        %3687 = vmatprep.subr.mxu0 %v3541
        %3688 = vmatpush1.msra.mxu0 %v3540
        %3689 = vmatprep.subr.mxu0 %v3539
        %3690 = vmatpush1.msra.mxu0 %v3538
        %3691 = vmatprep.subr.mxu0 %v3537
        %3692 = vmatpush1.msra.mxu0 %v3536
        %3693 = vmatprep.subr.mxu0 %v3535
        %3694 = vmatpush1.msra.mxu0 %v3534
        %3695 = vmatprep.subr.mxu0 0.0
        %3696 = vmatpush2.msra.mxu0 0.0
        %3697 = vmatprep.subr.mxu0 0.0
        %3698 = vmatpush2.msra.mxu0 0.0
        %3699 = vmatprep.subr.mxu0 0.0
        %3700 = vmatpush2.msra.mxu0 0.0
        %3701 = vmatprep.subr.mxu0 0.0
        %3702 = vmatpush2.msra.mxu0 0.0
        %3703 = vmatprep.subr.mxu0 0.0
        %3704 = vmatpush2.msra.mxu0 0.0
        %3705 = vmatprep.subr.mxu0 0.0
        %3706 = vmatpush2.msra.mxu0 0.0
        %3707 = vmatprep.subr.mxu0 0.0
        %3708 = vmatpush2.msra.mxu0 0.0
        %3709 = vmatprep.subr.mxu0 0.0
        %3710 = vmatpush2.msra.mxu0 0.0
        %3711 = vmatprep.subr.mxu0 0.0
        %3712 = vmatpush2.msra.mxu0 0.0
        %3713 = vmatprep.subr.mxu0 0.0
        %3714 = vmatpush2.msra.mxu0 0.0
        %3715 = vmatprep.subr.mxu0 0.0
        %3716 = vmatpush2.msra.mxu0 0.0
        %3717 = vmatprep.subr.mxu0 0.0
        %3718 = vmatpush2.msra.mxu0 0.0
        %3719 = vmatprep.subr.mxu0 0.0
        %3720 = vmatpush2.msra.mxu0 0.0
        %3721 = vmatprep.subr.mxu0 0.0
        %3722 = vmatpush2.msra.mxu0 0.0
        %3723 = vmatprep.subr.mxu0 0.0
        %3724 = vmatpush2.msra.mxu0 0.0
        %3725 = vmatprep.subr.mxu0 0.0
        %3726 = vmatpush2.msra.mxu0 0.0
        %3727 = vmatprep.mubr.f32.mxu0 0.0
        %3728 = vmatmul.mubr.f32.gmra.mxu0 %v2862
        %v3729 = vpop.f32.mrf.mxu0
        %v3730 = vadd.f32 0.0, %v3729
        %v3731 = vpop.f32.mrf.mxu0
        %v3732 = vadd.f32 0.0, %v3731
        %3733 = vmatprep.mubr.f32.mxu0 0.0
        %3734 = vmatmul.mubr.f32.gmra.mxu0 %v2863
        %v3735 = vpop.f32.mrf.mxu0
        %v3736 = vadd.f32 0.0, %v3735
        %v3737 = vpop.f32.mrf.mxu0
        %v3738 = vadd.f32 0.0, %v3737
        %3739 = vmatprep.mubr.f32.mxu0 0.0
        %3740 = vmatmul.mubr.f32.gmra.mxu0 %v2864
        %v3741 = vpop.f32.mrf.mxu0
        %v3742 = vadd.f32 0.0, %v3741
        %v3743 = vpop.f32.mrf.mxu0
        %v3744 = vadd.f32 0.0, %v3743
        %3745 = vmatprep.mubr.f32.mxu0 0.0
        %3746 = vmatmul.mubr.f32.gmra.mxu0 %v2865
        %v3747 = vpop.f32.mrf.mxu0
        %v3748 = vadd.f32 0.0, %v3747
        %v3749 = vpop.f32.mrf.mxu0
        %v3750 = vadd.f32 0.0, %v3749
        %3751 = vdwg.mxu0
        %v3752 = vadd.f32 %v3525, %v3730
        %v3753 = vadd.f32 %v3526, %v3732
        %v3754 = vadd.f32 %v3527, %v3736
        %v3755 = vadd.f32 %v3528, %v3738
        %v3756 = vadd.f32 %v3529, %v3742
        %v3757 = vadd.f32 %v3530, %v3744
        %v3758 = vadd.f32 %v3531, %v3748
        %v3759 = vadd.f32 %v3532, %v3750
        %s3760 = scalar_lea.vmem %s3, 1024
        %v3761 = vld [vmem:[%s3760] sm:$0xff]
        %v3762 = vld [vmem:[%s3760 + $0x8] sm:$0xff]
        %v3763 = vld [vmem:[%s3760 + $0x10] sm:$0xff]
        %v3764 = vld [vmem:[%s3760 + $0x18] sm:$0xff]
        %v3765 = vld [vmem:[%s3760 + $0x20] sm:$0xff]
        %v3766 = vld [vmem:[%s3760 + $0x28] sm:$0xff]
        %v3767 = vld [vmem:[%s3760 + $0x30] sm:$0xff]
        %v3768 = vld [vmem:[%s3760 + $0x38] sm:$0xff]
        %v3769 = vld [vmem:[%s3760 + $0x40] sm:$0xff]
        %v3770 = vld [vmem:[%s3760 + $0x48] sm:$0xff]
        %v3771 = vld [vmem:[%s3760 + $0x50] sm:$0xff]
        %v3772 = vld [vmem:[%s3760 + $0x58] sm:$0xff]
        %v3773 = vld [vmem:[%s3760 + $0x60] sm:$0xff]
        %v3774 = vld [vmem:[%s3760 + $0x68] sm:$0xff]
        %v3775 = vld [vmem:[%s3760 + $0x70] sm:$0xff]
        %v3776 = vld [vmem:[%s3760 + $0x78] sm:$0xff]
        %v3777 = vld [vmem:[%s3760 + $0x80] sm:$0xff]
        %v3778 = vld [vmem:[%s3760 + $0x88] sm:$0xff]
        %v3779 = vld [vmem:[%s3760 + $0x90] sm:$0xff]
        %v3780 = vld [vmem:[%s3760 + $0x98] sm:$0xff]
        %v3781 = vld [vmem:[%s3760 + $0xa0] sm:$0xff]
        %v3782 = vld [vmem:[%s3760 + $0xa8] sm:$0xff]
        %v3783 = vld [vmem:[%s3760 + $0xb0] sm:$0xff]
        %v3784 = vld [vmem:[%s3760 + $0xb8] sm:$0xff]
        %v3785 = vld [vmem:[%s3760 + $0xc0] sm:$0xff]
        %v3786 = vld [vmem:[%s3760 + $0xc8] sm:$0xff]
        %v3787 = vld [vmem:[%s3760 + $0xd0] sm:$0xff]
        %v3788 = vld [vmem:[%s3760 + $0xd8] sm:$0xff]
        %v3789 = vld [vmem:[%s3760 + $0xe0] sm:$0xff]
        %v3790 = vld [vmem:[%s3760 + $0xe8] sm:$0xff]
        %v3791 = vld [vmem:[%s3760 + $0xf0] sm:$0xff]
        %v3792 = vld [vmem:[%s3760 + $0xf8] sm:$0xff]
        %3793 = vmatprep.subr.mxu0 %v3792
        %3794 = vmatpush1.msra.mxu0 %v3791
        %3795 = vmatprep.subr.mxu0 %v3790
        %3796 = vmatpush1.msra.mxu0 %v3789
        %3797 = vmatprep.subr.mxu0 %v3788
        %3798 = vmatpush1.msra.mxu0 %v3787
        %3799 = vmatprep.subr.mxu0 %v3786
        %3800 = vmatpush1.msra.mxu0 %v3785
        %3801 = vmatprep.subr.mxu0 %v3784
        %3802 = vmatpush1.msra.mxu0 %v3783
        %3803 = vmatprep.subr.mxu0 %v3782
        %3804 = vmatpush1.msra.mxu0 %v3781
        %3805 = vmatprep.subr.mxu0 %v3780
        %3806 = vmatpush1.msra.mxu0 %v3779
        %3807 = vmatprep.subr.mxu0 %v3778
        %3808 = vmatpush1.msra.mxu0 %v3777
        %3809 = vmatprep.subr.mxu0 %v3776
        %3810 = vmatpush1.msra.mxu0 %v3775
        %3811 = vmatprep.subr.mxu0 %v3774
        %3812 = vmatpush1.msra.mxu0 %v3773
        %3813 = vmatprep.subr.mxu0 %v3772
        %3814 = vmatpush1.msra.mxu0 %v3771
        %3815 = vmatprep.subr.mxu0 %v3770
        %3816 = vmatpush1.msra.mxu0 %v3769
        %3817 = vmatprep.subr.mxu0 %v3768
        %3818 = vmatpush1.msra.mxu0 %v3767
        %3819 = vmatprep.subr.mxu0 %v3766
        %3820 = vmatpush1.msra.mxu0 %v3765
        %3821 = vmatprep.subr.mxu0 %v3764
        %3822 = vmatpush1.msra.mxu0 %v3763
        %3823 = vmatprep.subr.mxu0 %v3762
        %3824 = vmatpush1.msra.mxu0 %v3761
        %3825 = vmatprep.subr.mxu0 0.0
        %3826 = vmatpush2.msra.mxu0 0.0
        %3827 = vmatprep.subr.mxu0 0.0
        %3828 = vmatpush2.msra.mxu0 0.0
        %3829 = vmatprep.subr.mxu0 0.0
        %3830 = vmatpush2.msra.mxu0 0.0
        %3831 = vmatprep.subr.mxu0 0.0
        %3832 = vmatpush2.msra.mxu0 0.0
        %3833 = vmatprep.subr.mxu0 0.0
        %3834 = vmatpush2.msra.mxu0 0.0
        %3835 = vmatprep.subr.mxu0 0.0
        %3836 = vmatpush2.msra.mxu0 0.0
        %3837 = vmatprep.subr.mxu0 0.0
        %3838 = vmatpush2.msra.mxu0 0.0
        %3839 = vmatprep.subr.mxu0 0.0
        %3840 = vmatpush2.msra.mxu0 0.0
        %3841 = vmatprep.subr.mxu0 0.0
        %3842 = vmatpush2.msra.mxu0 0.0
        %3843 = vmatprep.subr.mxu0 0.0
        %3844 = vmatpush2.msra.mxu0 0.0
        %3845 = vmatprep.subr.mxu0 0.0
        %3846 = vmatpush2.msra.mxu0 0.0
        %3847 = vmatprep.subr.mxu0 0.0
        %3848 = vmatpush2.msra.mxu0 0.0
        %3849 = vmatprep.subr.mxu0 0.0
        %3850 = vmatpush2.msra.mxu0 0.0
        %3851 = vmatprep.subr.mxu0 0.0
        %3852 = vmatpush2.msra.mxu0 0.0
        %3853 = vmatprep.subr.mxu0 0.0
        %3854 = vmatpush2.msra.mxu0 0.0
        %3855 = vmatprep.subr.mxu0 0.0
        %3856 = vmatpush2.msra.mxu0 0.0
        %3857 = vmatprep.mubr.f32.mxu0 0.0
        %3858 = vmatmul.mubr.f32.gmra.mxu0 %v2862
        %v3859 = vpop.f32.mrf.mxu0
        %v3860 = vadd.f32 0.0, %v3859
        %v3861 = vpop.f32.mrf.mxu0
        %v3862 = vadd.f32 0.0, %v3861
        %3863 = vmatprep.mubr.f32.mxu0 0.0
        %3864 = vmatmul.mubr.f32.gmra.mxu0 %v2863
        %v3865 = vpop.f32.mrf.mxu0
        %v3866 = vadd.f32 0.0, %v3865
        %v3867 = vpop.f32.mrf.mxu0
        %v3868 = vadd.f32 0.0, %v3867
        %3869 = vmatprep.mubr.f32.mxu0 0.0
        %3870 = vmatmul.mubr.f32.gmra.mxu0 %v2864
        %v3871 = vpop.f32.mrf.mxu0
        %v3872 = vadd.f32 0.0, %v3871
        %v3873 = vpop.f32.mrf.mxu0
        %v3874 = vadd.f32 0.0, %v3873
        %3875 = vmatprep.mubr.f32.mxu0 0.0
        %3876 = vmatmul.mubr.f32.gmra.mxu0 %v2865
        %v3877 = vpop.f32.mrf.mxu0
        %v3878 = vadd.f32 0.0, %v3877
        %v3879 = vpop.f32.mrf.mxu0
        %v3880 = vadd.f32 0.0, %v3879
        %3881 = vdwg.mxu0
        %v3882 = vadd.f32 %v3655, %v3860
        %v3883 = vadd.f32 %v3656, %v3862
        %v3884 = vadd.f32 %v3657, %v3866
        %v3885 = vadd.f32 %v3658, %v3868
        %v3886 = vadd.f32 %v3659, %v3872
        %v3887 = vadd.f32 %v3660, %v3874
        %v3888 = vadd.f32 %v3661, %v3878
        %v3889 = vadd.f32 %v3662, %v3880
        %3890 = vmatprep.subr.mxu0 %v3792
        %3891 = vmatpush1.msra.mxu0 %v3791
        %3892 = vmatprep.subr.mxu0 %v3790
        %3893 = vmatpush1.msra.mxu0 %v3789
        %3894 = vmatprep.subr.mxu0 %v3788
        %3895 = vmatpush1.msra.mxu0 %v3787
        %3896 = vmatprep.subr.mxu0 %v3786
        %3897 = vmatpush1.msra.mxu0 %v3785
        %3898 = vmatprep.subr.mxu0 %v3784
        %3899 = vmatpush1.msra.mxu0 %v3783
        %3900 = vmatprep.subr.mxu0 %v3782
        %3901 = vmatpush1.msra.mxu0 %v3781
        %3902 = vmatprep.subr.mxu0 %v3780
        %3903 = vmatpush1.msra.mxu0 %v3779
        %3904 = vmatprep.subr.mxu0 %v3778
        %3905 = vmatpush1.msra.mxu0 %v3777
        %3906 = vmatprep.subr.mxu0 %v3776
        %3907 = vmatpush1.msra.mxu0 %v3775
        %3908 = vmatprep.subr.mxu0 %v3774
        %3909 = vmatpush1.msra.mxu0 %v3773
        %3910 = vmatprep.subr.mxu0 %v3772
        %3911 = vmatpush1.msra.mxu0 %v3771
        %3912 = vmatprep.subr.mxu0 %v3770
        %3913 = vmatpush1.msra.mxu0 %v3769
        %3914 = vmatprep.subr.mxu0 %v3768
        %3915 = vmatpush1.msra.mxu0 %v3767
        %3916 = vmatprep.subr.mxu0 %v3766
        %3917 = vmatpush1.msra.mxu0 %v3765
        %3918 = vmatprep.subr.mxu0 %v3764
        %3919 = vmatpush1.msra.mxu0 %v3763
        %3920 = vmatprep.subr.mxu0 %v3762
        %3921 = vmatpush1.msra.mxu0 %v3761
        %3922 = vmatprep.subr.mxu0 0.0
        %3923 = vmatpush2.msra.mxu0 0.0
        %3924 = vmatprep.subr.mxu0 0.0
        %3925 = vmatpush2.msra.mxu0 0.0
        %3926 = vmatprep.subr.mxu0 0.0
        %3927 = vmatpush2.msra.mxu0 0.0
        %3928 = vmatprep.subr.mxu0 0.0
        %3929 = vmatpush2.msra.mxu0 0.0
        %3930 = vmatprep.subr.mxu0 0.0
        %3931 = vmatpush2.msra.mxu0 0.0
        %3932 = vmatprep.subr.mxu0 0.0
        %3933 = vmatpush2.msra.mxu0 0.0
        %3934 = vmatprep.subr.mxu0 0.0
        %3935 = vmatpush2.msra.mxu0 0.0
        %3936 = vmatprep.subr.mxu0 0.0
        %3937 = vmatpush2.msra.mxu0 0.0
        %3938 = vmatprep.subr.mxu0 0.0
        %3939 = vmatpush2.msra.mxu0 0.0
        %3940 = vmatprep.subr.mxu0 0.0
        %3941 = vmatpush2.msra.mxu0 0.0
        %3942 = vmatprep.subr.mxu0 0.0
        %3943 = vmatpush2.msra.mxu0 0.0
        %3944 = vmatprep.subr.mxu0 0.0
        %3945 = vmatpush2.msra.mxu0 0.0
        %3946 = vmatprep.subr.mxu0 0.0
        %3947 = vmatpush2.msra.mxu0 0.0
        %3948 = vmatprep.subr.mxu0 0.0
        %3949 = vmatpush2.msra.mxu0 0.0
        %3950 = vmatprep.subr.mxu0 0.0
        %3951 = vmatpush2.msra.mxu0 0.0
        %3952 = vmatprep.subr.mxu0 0.0
        %3953 = vmatpush2.msra.mxu0 0.0
        %3954 = vmatprep.mubr.f32.mxu0 0.0
        %3955 = vmatmul.mubr.f32.gmra.mxu0 %v2880
        %v3956 = vpop.f32.mrf.mxu0
        %v3957 = vadd.f32 0.0, %v3956
        %v3958 = vpop.f32.mrf.mxu0
        %v3959 = vadd.f32 0.0, %v3958
        %3960 = vmatprep.mubr.f32.mxu0 0.0
        %3961 = vmatmul.mubr.f32.gmra.mxu0 %v2881
        %v3962 = vpop.f32.mrf.mxu0
        %v3963 = vadd.f32 0.0, %v3962
        %v3964 = vpop.f32.mrf.mxu0
        %v3965 = vadd.f32 0.0, %v3964
        %3966 = vmatprep.mubr.f32.mxu0 0.0
        %3967 = vmatmul.mubr.f32.gmra.mxu0 %v2882
        %v3968 = vpop.f32.mrf.mxu0
        %v3969 = vadd.f32 0.0, %v3968
        %v3970 = vpop.f32.mrf.mxu0
        %v3971 = vadd.f32 0.0, %v3970
        %3972 = vmatprep.mubr.f32.mxu0 0.0
        %3973 = vmatmul.mubr.f32.gmra.mxu0 %v2883
        %v3974 = vpop.f32.mrf.mxu0
        %v3975 = vadd.f32 0.0, %v3974
        %v3976 = vpop.f32.mrf.mxu0
        %v3977 = vadd.f32 0.0, %v3976
        %3978 = vdwg.mxu0
        %v3979 = vadd.f32 %v3752, %v3957
        %v3980 = vadd.f32 %v3753, %v3959
        %v3981 = vadd.f32 %v3754, %v3963
        %v3982 = vadd.f32 %v3755, %v3965
        %v3983 = vadd.f32 %v3756, %v3969
        %v3984 = vadd.f32 %v3757, %v3971
        %v3985 = vadd.f32 %v3758, %v3975
        %v3986 = vadd.f32 %v3759, %v3977
        %v3988 = vlaneseq
        %v3989 = vshrl.u32 %v3988, 7
        %v3990 = vsub.s32 0, %v3989
        %v3991 = vrot.slane %v2884, %v3990
        %v3992 = vlaneseq
        %v3993 = vshrl.u32 %v3992, 7
        %v3994 = vsub.s32 1, %v3993
        %v3995 = vrot.slane %v2884, %v3994
        %v3998 = vadd.f32 %v3882, %v3991
        %v3999 = vadd.f32 %v3883, %v3995
        %v4000 = vadd.f32 %v3884, %v3991
        %v4001 = vadd.f32 %v3885, %v3995
        %v4002 = vadd.f32 %v3886, %v3991
        %v4003 = vadd.f32 %v3887, %v3995
        %v4004 = vadd.f32 %v3888, %v3991
        %v4005 = vadd.f32 %v3889, %v3995
        %v4006 = vmax.f32 %v3998, 0.0
        %v4007 = vmax.f32 %v3999, 0.0
        %v4008 = vmax.f32 %v4000, 0.0
        %v4009 = vmax.f32 %v4001, 0.0
        %v4010 = vmax.f32 %v4002, 0.0
        %v4011 = vmax.f32 %v4003, 0.0
        %v4012 = vmax.f32 %v4004, 0.0
        %v4013 = vmax.f32 %v4005, 0.0
        %v4014 = vadd.f32 %v3979, %v3991
        %v4015 = vadd.f32 %v3980, %v3995
        %v4016 = vadd.f32 %v3981, %v3991
        %v4017 = vadd.f32 %v3982, %v3995
        %v4018 = vadd.f32 %v3983, %v3991
        %v4019 = vadd.f32 %v3984, %v3995
        %v4020 = vadd.f32 %v3985, %v3991
        %v4021 = vadd.f32 %v3986, %v3995
        %v4022 = vmax.f32 %v4014, 0.0
        %v4023 = vmax.f32 %v4015, 0.0
        %v4024 = vmax.f32 %v4016, 0.0
        %v4025 = vmax.f32 %v4017, 0.0
        %v4026 = vmax.f32 %v4018, 0.0
        %v4027 = vmax.f32 %v4019, 0.0
        %v4028 = vmax.f32 %v4020, 0.0
        %v4029 = vmax.f32 %v4021, 0.0
        %v4030 = vmax.f32 %v4006, %v4007
        %v4031 = vmax.f32 %v4008, %v4009
        %v4032 = vmax.f32 %v4010, %v4011
        %v4033 = vmax.f32 %v4012, %v4013
        %v4034 = vmax.f32 %v4022, %v4023
        %v4035 = vmax.f32 %v4024, %v4025
        %v4036 = vmax.f32 %v4026, %v4027
        %v4037 = vmax.f32 %v4028, %v4029
        %v4038 = vmax.f32 %v4030, %v4034
        %v4039 = vmax.f32 %v4031, %v4035
        %v4040 = vmax.f32 %v4032, %v4036
        %v4041 = vmax.f32 %v4033, %v4037
        %v4042 = vld [vmem:[%s5] sm:$0xff]
        %v4043 = vld [vmem:[%s5 + $0x8] sm:$0xff]
        %v4044 = vld [vmem:[%s5 + $0x10] sm:$0xff]
        %v4045 = vld [vmem:[%s5 + $0x18] sm:$0xff]
        %v4046 = vld [vmem:[%s5 + $0x20] sm:$0xff]
        %v4047 = vld [vmem:[%s5 + $0x28] sm:$0xff]
        %v4048 = vld [vmem:[%s5 + $0x30] sm:$0xff]
        %v4049 = vld [vmem:[%s5 + $0x38] sm:$0xff]
        %v4050 = vld [vmem:[%s5 + $0x40] sm:$0xff]
        %v4051 = vld [vmem:[%s5 + $0x48] sm:$0xff]
        %v4052 = vld [vmem:[%s5 + $0x50] sm:$0xff]
        %v4053 = vld [vmem:[%s5 + $0x58] sm:$0xff]
        %v4054 = vld [vmem:[%s5 + $0x60] sm:$0xff]
        %v4055 = vld [vmem:[%s5 + $0x68] sm:$0xff]
        %v4056 = vld [vmem:[%s5 + $0x70] sm:$0xff]
        %v4057 = vld [vmem:[%s5 + $0x78] sm:$0xff]
        %s4058 = scalar_lea.vmem %s5, 128
        %v4059 = vld [vmem:[%s4058] sm:$0xff]
        %v4060 = vld [vmem:[%s4058 + $0x8] sm:$0xff]
        %v4061 = vld [vmem:[%s4058 + $0x10] sm:$0xff]
        %v4062 = vld [vmem:[%s4058 + $0x18] sm:$0xff]
        %v4063 = vld [vmem:[%s4058 + $0x20] sm:$0xff]
        %v4064 = vld [vmem:[%s4058 + $0x28] sm:$0xff]
        %v4065 = vld [vmem:[%s4058 + $0x30] sm:$0xff]
        %v4066 = vld [vmem:[%s4058 + $0x38] sm:$0xff]
        %v4067 = vld [vmem:[%s4058 + $0x40] sm:$0xff]
        %v4068 = vld [vmem:[%s4058 + $0x48] sm:$0xff]
        %v4069 = vld [vmem:[%s4058 + $0x50] sm:$0xff]
        %v4070 = vld [vmem:[%s4058 + $0x58] sm:$0xff]
        %v4071 = vld [vmem:[%s4058 + $0x60] sm:$0xff]
        %v4072 = vld [vmem:[%s4058 + $0x68] sm:$0xff]
        %v4073 = vld [vmem:[%s4058 + $0x70] sm:$0xff]
        %v4074 = vld [vmem:[%s4058 + $0x78] sm:$0xff]
        %4075 = vmatprep.subr.mxu0 0.0
        %4076 = vmatpush1.msra.mxu0 %v4074
        %4077 = vmatprep.subr.mxu0 0.0
        %4078 = vmatpush1.msra.mxu0 %v4073
        %4079 = vmatprep.subr.mxu0 0.0
        %4080 = vmatpush1.msra.mxu0 %v4072
        %4081 = vmatprep.subr.mxu0 0.0
        %4082 = vmatpush1.msra.mxu0 %v4071
        %4083 = vmatprep.subr.mxu0 0.0
        %4084 = vmatpush1.msra.mxu0 %v4070
        %4085 = vmatprep.subr.mxu0 0.0
        %4086 = vmatpush1.msra.mxu0 %v4069
        %4087 = vmatprep.subr.mxu0 0.0
        %4088 = vmatpush1.msra.mxu0 %v4068
        %4089 = vmatprep.subr.mxu0 0.0
        %4090 = vmatpush1.msra.mxu0 %v4067
        %4091 = vmatprep.subr.mxu0 0.0
        %4092 = vmatpush1.msra.mxu0 %v4066
        %4093 = vmatprep.subr.mxu0 0.0
        %4094 = vmatpush1.msra.mxu0 %v4065
        %4095 = vmatprep.subr.mxu0 0.0
        %4096 = vmatpush1.msra.mxu0 %v4064
        %4097 = vmatprep.subr.mxu0 0.0
        %4098 = vmatpush1.msra.mxu0 %v4063
        %4099 = vmatprep.subr.mxu0 0.0
        %4100 = vmatpush1.msra.mxu0 %v4062
        %4101 = vmatprep.subr.mxu0 0.0
        %4102 = vmatpush1.msra.mxu0 %v4061
        %4103 = vmatprep.subr.mxu0 0.0
        %4104 = vmatpush1.msra.mxu0 %v4060
        %4105 = vmatprep.subr.mxu0 0.0
        %4106 = vmatpush1.msra.mxu0 %v4059
        %4107 = vmatprep.subr.mxu0 0.0
        %4108 = vmatpush2.msra.mxu0 0.0
        %4109 = vmatprep.subr.mxu0 0.0
        %4110 = vmatpush2.msra.mxu0 0.0
        %4111 = vmatprep.subr.mxu0 0.0
        %4112 = vmatpush2.msra.mxu0 0.0
        %4113 = vmatprep.subr.mxu0 0.0
        %4114 = vmatpush2.msra.mxu0 0.0
        %4115 = vmatprep.subr.mxu0 0.0
        %4116 = vmatpush2.msra.mxu0 0.0
        %4117 = vmatprep.subr.mxu0 0.0
        %4118 = vmatpush2.msra.mxu0 0.0
        %4119 = vmatprep.subr.mxu0 0.0
        %4120 = vmatpush2.msra.mxu0 0.0
        %4121 = vmatprep.subr.mxu0 0.0
        %4122 = vmatpush2.msra.mxu0 0.0
        %4123 = vmatprep.subr.mxu0 0.0
        %4124 = vmatpush2.msra.mxu0 0.0
        %4125 = vmatprep.subr.mxu0 0.0
        %4126 = vmatpush2.msra.mxu0 0.0
        %4127 = vmatprep.subr.mxu0 0.0
        %4128 = vmatpush2.msra.mxu0 0.0
        %4129 = vmatprep.subr.mxu0 0.0
        %4130 = vmatpush2.msra.mxu0 0.0
        %4131 = vmatprep.subr.mxu0 0.0
        %4132 = vmatpush2.msra.mxu0 0.0
        %4133 = vmatprep.subr.mxu0 0.0
        %4134 = vmatpush2.msra.mxu0 0.0
        %4135 = vmatprep.subr.mxu0 0.0
        %4136 = vmatpush2.msra.mxu0 0.0
        %4137 = vmatprep.subr.mxu0 0.0
        %4138 = vmatpush2.msra.mxu0 0.0
        %4139 = vmatprep.mubr.f32.mxu0 0.0
        %4140 = vmatmul.mubr.f32.gmra.mxu0 %v4039
        %v4141 = vpop.f32.mrf.mxu0
        %v4142 = vadd.f32 0.0, %v4141
        %v4143 = vpop.f32.mrf.mxu0
        %4144 = vdwg.mxu0
        %4145 = vmatprep.subr.mxu0 0.0
        %4146 = vmatpush1.msra.mxu0 %v4057
        %4147 = vmatprep.subr.mxu0 0.0
        %4148 = vmatpush1.msra.mxu0 %v4056
        %4149 = vmatprep.subr.mxu0 0.0
        %4150 = vmatpush1.msra.mxu0 %v4055
        %4151 = vmatprep.subr.mxu0 0.0
        %4152 = vmatpush1.msra.mxu0 %v4054
        %4153 = vmatprep.subr.mxu0 0.0
        %4154 = vmatpush1.msra.mxu0 %v4053
        %4155 = vmatprep.subr.mxu0 0.0
        %4156 = vmatpush1.msra.mxu0 %v4052
        %4157 = vmatprep.subr.mxu0 0.0
        %4158 = vmatpush1.msra.mxu0 %v4051
        %4159 = vmatprep.subr.mxu0 0.0
        %4160 = vmatpush1.msra.mxu0 %v4050
        %4161 = vmatprep.subr.mxu0 0.0
        %4162 = vmatpush1.msra.mxu0 %v4049
        %4163 = vmatprep.subr.mxu0 0.0
        %4164 = vmatpush1.msra.mxu0 %v4048
        %4165 = vmatprep.subr.mxu0 0.0
        %4166 = vmatpush1.msra.mxu0 %v4047
        %4167 = vmatprep.subr.mxu0 0.0
        %4168 = vmatpush1.msra.mxu0 %v4046
        %4169 = vmatprep.subr.mxu0 0.0
        %4170 = vmatpush1.msra.mxu0 %v4045
        %4171 = vmatprep.subr.mxu0 0.0
        %4172 = vmatpush1.msra.mxu0 %v4044
        %4173 = vmatprep.subr.mxu0 0.0
        %4174 = vmatpush1.msra.mxu0 %v4043
        %4175 = vmatprep.subr.mxu0 0.0
        %4176 = vmatpush1.msra.mxu0 %v4042
        %4177 = vmatprep.subr.mxu0 0.0
        %4178 = vmatpush2.msra.mxu0 0.0
        %4179 = vmatprep.subr.mxu0 0.0
        %4180 = vmatpush2.msra.mxu0 0.0
        %4181 = vmatprep.subr.mxu0 0.0
        %4182 = vmatpush2.msra.mxu0 0.0
        %4183 = vmatprep.subr.mxu0 0.0
        %4184 = vmatpush2.msra.mxu0 0.0
        %4185 = vmatprep.subr.mxu0 0.0
        %4186 = vmatpush2.msra.mxu0 0.0
        %4187 = vmatprep.subr.mxu0 0.0
        %4188 = vmatpush2.msra.mxu0 0.0
        %4189 = vmatprep.subr.mxu0 0.0
        %4190 = vmatpush2.msra.mxu0 0.0
        %4191 = vmatprep.subr.mxu0 0.0
        %4192 = vmatpush2.msra.mxu0 0.0
        %4193 = vmatprep.subr.mxu0 0.0
        %4194 = vmatpush2.msra.mxu0 0.0
        %4195 = vmatprep.subr.mxu0 0.0
        %4196 = vmatpush2.msra.mxu0 0.0
        %4197 = vmatprep.subr.mxu0 0.0
        %4198 = vmatpush2.msra.mxu0 0.0
        %4199 = vmatprep.subr.mxu0 0.0
        %4200 = vmatpush2.msra.mxu0 0.0
        %4201 = vmatprep.subr.mxu0 0.0
        %4202 = vmatpush2.msra.mxu0 0.0
        %4203 = vmatprep.subr.mxu0 0.0
        %4204 = vmatpush2.msra.mxu0 0.0
        %4205 = vmatprep.subr.mxu0 0.0
        %4206 = vmatpush2.msra.mxu0 0.0
        %4207 = vmatprep.subr.mxu0 0.0
        %4208 = vmatpush2.msra.mxu0 0.0
        %4209 = vmatprep.mubr.f32.mxu0 0.0
        %4210 = vmatmul.mubr.f32.gmra.mxu0 %v4038
        %v4211 = vpop.f32.mrf.mxu0
        %v4212 = vadd.f32 %v4142, %v4211
        %v4213 = vpop.f32.mrf.mxu0
        %4214 = vdwg.mxu0
        %s4215 = scalar_lea.vmem %s5, 256
        %v4216 = vld [vmem:[%s4215] sm:$0xff]
        %v4217 = vld [vmem:[%s4215 + $0x8] sm:$0xff]
        %v4218 = vld [vmem:[%s4215 + $0x10] sm:$0xff]
        %v4219 = vld [vmem:[%s4215 + $0x18] sm:$0xff]
        %v4220 = vld [vmem:[%s4215 + $0x20] sm:$0xff]
        %v4221 = vld [vmem:[%s4215 + $0x28] sm:$0xff]
        %v4222 = vld [vmem:[%s4215 + $0x30] sm:$0xff]
        %v4223 = vld [vmem:[%s4215 + $0x38] sm:$0xff]
        %v4224 = vld [vmem:[%s4215 + $0x40] sm:$0xff]
        %v4225 = vld [vmem:[%s4215 + $0x48] sm:$0xff]
        %v4226 = vld [vmem:[%s4215 + $0x50] sm:$0xff]
        %v4227 = vld [vmem:[%s4215 + $0x58] sm:$0xff]
        %v4228 = vld [vmem:[%s4215 + $0x60] sm:$0xff]
        %v4229 = vld [vmem:[%s4215 + $0x68] sm:$0xff]
        %v4230 = vld [vmem:[%s4215 + $0x70] sm:$0xff]
        %v4231 = vld [vmem:[%s4215 + $0x78] sm:$0xff]
        %4232 = vmatprep.subr.mxu0 0.0
        %4233 = vmatpush1.msra.mxu0 %v4231
        %4234 = vmatprep.subr.mxu0 0.0
        %4235 = vmatpush1.msra.mxu0 %v4230
        %4236 = vmatprep.subr.mxu0 0.0
        %4237 = vmatpush1.msra.mxu0 %v4229
        %4238 = vmatprep.subr.mxu0 0.0
        %4239 = vmatpush1.msra.mxu0 %v4228
        %4240 = vmatprep.subr.mxu0 0.0
        %4241 = vmatpush1.msra.mxu0 %v4227
        %4242 = vmatprep.subr.mxu0 0.0
        %4243 = vmatpush1.msra.mxu0 %v4226
        %4244 = vmatprep.subr.mxu0 0.0
        %4245 = vmatpush1.msra.mxu0 %v4225
        %4246 = vmatprep.subr.mxu0 0.0
        %4247 = vmatpush1.msra.mxu0 %v4224
        %4248 = vmatprep.subr.mxu0 0.0
        %4249 = vmatpush1.msra.mxu0 %v4223
        %4250 = vmatprep.subr.mxu0 0.0
        %4251 = vmatpush1.msra.mxu0 %v4222
        %4252 = vmatprep.subr.mxu0 0.0
        %4253 = vmatpush1.msra.mxu0 %v4221
        %4254 = vmatprep.subr.mxu0 0.0
        %4255 = vmatpush1.msra.mxu0 %v4220
        %4256 = vmatprep.subr.mxu0 0.0
        %4257 = vmatpush1.msra.mxu0 %v4219
        %4258 = vmatprep.subr.mxu0 0.0
        %4259 = vmatpush1.msra.mxu0 %v4218
        %4260 = vmatprep.subr.mxu0 0.0
        %4261 = vmatpush1.msra.mxu0 %v4217
        %4262 = vmatprep.subr.mxu0 0.0
        %4263 = vmatpush1.msra.mxu0 %v4216
        %4264 = vmatprep.subr.mxu0 0.0
        %4265 = vmatpush2.msra.mxu0 0.0
        %4266 = vmatprep.subr.mxu0 0.0
        %4267 = vmatpush2.msra.mxu0 0.0
        %4268 = vmatprep.subr.mxu0 0.0
        %4269 = vmatpush2.msra.mxu0 0.0
        %4270 = vmatprep.subr.mxu0 0.0
        %4271 = vmatpush2.msra.mxu0 0.0
        %4272 = vmatprep.subr.mxu0 0.0
        %4273 = vmatpush2.msra.mxu0 0.0
        %4274 = vmatprep.subr.mxu0 0.0
        %4275 = vmatpush2.msra.mxu0 0.0
        %4276 = vmatprep.subr.mxu0 0.0
        %4277 = vmatpush2.msra.mxu0 0.0
        %4278 = vmatprep.subr.mxu0 0.0
        %4279 = vmatpush2.msra.mxu0 0.0
        %4280 = vmatprep.subr.mxu0 0.0
        %4281 = vmatpush2.msra.mxu0 0.0
        %4282 = vmatprep.subr.mxu0 0.0
        %4283 = vmatpush2.msra.mxu0 0.0
        %4284 = vmatprep.subr.mxu0 0.0
        %4285 = vmatpush2.msra.mxu0 0.0
        %4286 = vmatprep.subr.mxu0 0.0
        %4287 = vmatpush2.msra.mxu0 0.0
        %4288 = vmatprep.subr.mxu0 0.0
        %4289 = vmatpush2.msra.mxu0 0.0
        %4290 = vmatprep.subr.mxu0 0.0
        %4291 = vmatpush2.msra.mxu0 0.0
        %4292 = vmatprep.subr.mxu0 0.0
        %4293 = vmatpush2.msra.mxu0 0.0
        %4294 = vmatprep.subr.mxu0 0.0
        %4295 = vmatpush2.msra.mxu0 0.0
        %4296 = vmatprep.mubr.f32.mxu0 0.0
        %4297 = vmatmul.mubr.f32.gmra.mxu0 %v4040
        %v4298 = vpop.f32.mrf.mxu0
        %v4299 = vadd.f32 0.0, %v4298
        %v4300 = vpop.f32.mrf.mxu0
        %4301 = vdwg.mxu0
        %v4302 = vadd.f32 %v4212, %v4299
        %s4303 = scalar_lea.vmem %s5, 384
        %v4304 = vld [vmem:[%s4303] sm:$0xff]
        %v4305 = vld [vmem:[%s4303 + $0x8] sm:$0xff]
        %v4306 = vld [vmem:[%s4303 + $0x10] sm:$0xff]
        %v4307 = vld [vmem:[%s4303 + $0x18] sm:$0xff]
        %v4308 = vld [vmem:[%s4303 + $0x20] sm:$0xff]
        %v4309 = vld [vmem:[%s4303 + $0x28] sm:$0xff]
        %v4310 = vld [vmem:[%s4303 + $0x30] sm:$0xff]
        %v4311 = vld [vmem:[%s4303 + $0x38] sm:$0xff]
        %v4312 = vld [vmem:[%s4303 + $0x40] sm:$0xff]
        %v4313 = vld [vmem:[%s4303 + $0x48] sm:$0xff]
        %v4314 = vld [vmem:[%s4303 + $0x50] sm:$0xff]
        %v4315 = vld [vmem:[%s4303 + $0x58] sm:$0xff]
        %v4316 = vld [vmem:[%s4303 + $0x60] sm:$0xff]
        %v4317 = vld [vmem:[%s4303 + $0x68] sm:$0xff]
        %v4318 = vld [vmem:[%s4303 + $0x70] sm:$0xff]
        %v4319 = vld [vmem:[%s4303 + $0x78] sm:$0xff]
        %4320 = vmatprep.subr.mxu0 0.0
        %4321 = vmatpush1.msra.mxu0 %v4319
        %4322 = vmatprep.subr.mxu0 0.0
        %4323 = vmatpush1.msra.mxu0 %v4318
        %4324 = vmatprep.subr.mxu0 0.0
        %4325 = vmatpush1.msra.mxu0 %v4317
        %4326 = vmatprep.subr.mxu0 0.0
        %4327 = vmatpush1.msra.mxu0 %v4316
        %4328 = vmatprep.subr.mxu0 0.0
        %4329 = vmatpush1.msra.mxu0 %v4315
        %4330 = vmatprep.subr.mxu0 0.0
        %4331 = vmatpush1.msra.mxu0 %v4314
        %4332 = vmatprep.subr.mxu0 0.0
        %4333 = vmatpush1.msra.mxu0 %v4313
        %4334 = vmatprep.subr.mxu0 0.0
        %4335 = vmatpush1.msra.mxu0 %v4312
        %4336 = vmatprep.subr.mxu0 0.0
        %4337 = vmatpush1.msra.mxu0 %v4311
        %4338 = vmatprep.subr.mxu0 0.0
        %4339 = vmatpush1.msra.mxu0 %v4310
        %4340 = vmatprep.subr.mxu0 0.0
        %4341 = vmatpush1.msra.mxu0 %v4309
        %4342 = vmatprep.subr.mxu0 0.0
        %4343 = vmatpush1.msra.mxu0 %v4308
        %4344 = vmatprep.subr.mxu0 0.0
        %4345 = vmatpush1.msra.mxu0 %v4307
        %4346 = vmatprep.subr.mxu0 0.0
        %4347 = vmatpush1.msra.mxu0 %v4306
        %4348 = vmatprep.subr.mxu0 0.0
        %4349 = vmatpush1.msra.mxu0 %v4305
        %4350 = vmatprep.subr.mxu0 0.0
        %4351 = vmatpush1.msra.mxu0 %v4304
        %4352 = vmatprep.subr.mxu0 0.0
        %4353 = vmatpush2.msra.mxu0 0.0
        %4354 = vmatprep.subr.mxu0 0.0
        %4355 = vmatpush2.msra.mxu0 0.0
        %4356 = vmatprep.subr.mxu0 0.0
        %4357 = vmatpush2.msra.mxu0 0.0
        %4358 = vmatprep.subr.mxu0 0.0
        %4359 = vmatpush2.msra.mxu0 0.0
        %4360 = vmatprep.subr.mxu0 0.0
        %4361 = vmatpush2.msra.mxu0 0.0
        %4362 = vmatprep.subr.mxu0 0.0
        %4363 = vmatpush2.msra.mxu0 0.0
        %4364 = vmatprep.subr.mxu0 0.0
        %4365 = vmatpush2.msra.mxu0 0.0
        %4366 = vmatprep.subr.mxu0 0.0
        %4367 = vmatpush2.msra.mxu0 0.0
        %4368 = vmatprep.subr.mxu0 0.0
        %4369 = vmatpush2.msra.mxu0 0.0
        %4370 = vmatprep.subr.mxu0 0.0
        %4371 = vmatpush2.msra.mxu0 0.0
        %4372 = vmatprep.subr.mxu0 0.0
        %4373 = vmatpush2.msra.mxu0 0.0
        %4374 = vmatprep.subr.mxu0 0.0
        %4375 = vmatpush2.msra.mxu0 0.0
        %4376 = vmatprep.subr.mxu0 0.0
        %4377 = vmatpush2.msra.mxu0 0.0
        %4378 = vmatprep.subr.mxu0 0.0
        %4379 = vmatpush2.msra.mxu0 0.0
        %4380 = vmatprep.subr.mxu0 0.0
        %4381 = vmatpush2.msra.mxu0 0.0
        %4382 = vmatprep.subr.mxu0 0.0
        %4383 = vmatpush2.msra.mxu0 0.0
        %4384 = vmatprep.mubr.f32.mxu0 0.0
        %4385 = vmatmul.mubr.f32.gmra.mxu0 %v4041
        %v4386 = vpop.f32.mrf.mxu0
        %v4387 = vadd.f32 0.0, %v4386
        %v4388 = vpop.f32.mrf.mxu0
        %4389 = vdwg.mxu0
        %v4390 = vadd.f32 %v4302, %v4387
        %v4391 = vld [vmem:[%s6] sm:$0x1]
        %v4393 = vlaneseq
        %v4394 = vshrl.u32 %v4393, 7
        %v4395 = vsub.s32 0, %v4394
        %v4396 = vrot.slane %v4391, %v4395
        %v4398 = vadd.f32 %v4390, %v4396
        %v4399 = vmax.f32 %v4398, 0.0
        %v4400 = vld [vmem:[%s7] sm:$0xff]
        %v4401 = vld [vmem:[%s7 + $0x8] sm:$0xff]
        %v4402 = vld [vmem:[%s7 + $0x10] sm:$0xff]
        %v4403 = vld [vmem:[%s7 + $0x18] sm:$0xff]
        %v4404 = vld [vmem:[%s7 + $0x20] sm:$0xff]
        %v4405 = vld [vmem:[%s7 + $0x28] sm:$0xff]
        %v4406 = vld [vmem:[%s7 + $0x30] sm:$0xff]
        %v4407 = vld [vmem:[%s7 + $0x38] sm:$0xff]
        %v4408 = vld [vmem:[%s7 + $0x40] sm:$0xff]
        %v4409 = vld [vmem:[%s7 + $0x48] sm:$0xff]
        %v4410 = vld [vmem:[%s7 + $0x50] sm:$0xff]
        %v4411 = vld [vmem:[%s7 + $0x58] sm:$0xff]
        %v4412 = vld [vmem:[%s7 + $0x60] sm:$0xff]
        %v4413 = vld [vmem:[%s7 + $0x68] sm:$0xff]
        %v4414 = vld [vmem:[%s7 + $0x70] sm:$0xff]
        %v4415 = vld [vmem:[%s7 + $0x78] sm:$0xff]
        %v4416 = vld [vmem:[%s8] sm:$0x1]
        %v4418 = vlaneseq
        %v4419 = vshrl.u32 %v4418, 7
        %v4420 = vsub.s32 0, %v4419
        %v4421 = vrot.slane %v4416, %v4420
        %4423 = vmatprep.subr.mxu0 0.0
        %4424 = vmatpush1.msra.mxu0 %v4415
        %4425 = vmatprep.subr.mxu0 0.0
        %4426 = vmatpush1.msra.mxu0 %v4414
        %4427 = vmatprep.subr.mxu0 0.0
        %4428 = vmatpush1.msra.mxu0 %v4413
        %4429 = vmatprep.subr.mxu0 0.0
        %4430 = vmatpush1.msra.mxu0 %v4412
        %4431 = vmatprep.subr.mxu0 0.0
        %4432 = vmatpush1.msra.mxu0 %v4411
        %4433 = vmatprep.subr.mxu0 0.0
        %4434 = vmatpush1.msra.mxu0 %v4410
        %4435 = vmatprep.subr.mxu0 0.0
        %4436 = vmatpush1.msra.mxu0 %v4409
        %4437 = vmatprep.subr.mxu0 0.0
        %4438 = vmatpush1.msra.mxu0 %v4408
        %4439 = vmatprep.subr.mxu0 0.0
        %4440 = vmatpush1.msra.mxu0 %v4407
        %4441 = vmatprep.subr.mxu0 0.0
        %4442 = vmatpush1.msra.mxu0 %v4406
        %4443 = vmatprep.subr.mxu0 0.0
        %4444 = vmatpush1.msra.mxu0 %v4405
        %4445 = vmatprep.subr.mxu0 0.0
        %4446 = vmatpush1.msra.mxu0 %v4404
        %4447 = vmatprep.subr.mxu0 0.0
        %4448 = vmatpush1.msra.mxu0 %v4403
        %4449 = vmatprep.subr.mxu0 0.0
        %4450 = vmatpush1.msra.mxu0 %v4402
        %4451 = vmatprep.subr.mxu0 0.0
        %4452 = vmatpush1.msra.mxu0 %v4401
        %4453 = vmatprep.subr.mxu0 0.0
        %4454 = vmatpush1.msra.mxu0 %v4400
        %4455 = vmatprep.subr.mxu0 0.0
        %4456 = vmatpush2.msra.mxu0 0.0
        %4457 = vmatprep.subr.mxu0 0.0
        %4458 = vmatpush2.msra.mxu0 0.0
        %4459 = vmatprep.subr.mxu0 0.0
        %4460 = vmatpush2.msra.mxu0 0.0
        %4461 = vmatprep.subr.mxu0 0.0
        %4462 = vmatpush2.msra.mxu0 0.0
        %4463 = vmatprep.subr.mxu0 0.0
        %4464 = vmatpush2.msra.mxu0 0.0
        %4465 = vmatprep.subr.mxu0 0.0
        %4466 = vmatpush2.msra.mxu0 0.0
        %4467 = vmatprep.subr.mxu0 0.0
        %4468 = vmatpush2.msra.mxu0 0.0
        %4469 = vmatprep.subr.mxu0 0.0
        %4470 = vmatpush2.msra.mxu0 0.0
        %4471 = vmatprep.subr.mxu0 0.0
        %4472 = vmatpush2.msra.mxu0 0.0
        %4473 = vmatprep.subr.mxu0 0.0
        %4474 = vmatpush2.msra.mxu0 0.0
        %4475 = vmatprep.subr.mxu0 0.0
        %4476 = vmatpush2.msra.mxu0 0.0
        %4477 = vmatprep.subr.mxu0 0.0
        %4478 = vmatpush2.msra.mxu0 0.0
        %4479 = vmatprep.subr.mxu0 0.0
        %4480 = vmatpush2.msra.mxu0 0.0
        %4481 = vmatprep.subr.mxu0 0.0
        %4482 = vmatpush2.msra.mxu0 0.0
        %4483 = vmatprep.subr.mxu0 0.0
        %4484 = vmatpush2.msra.mxu0 0.0
        %4485 = vmatprep.subr.mxu0 0.0
        %4486 = vmatpush2.msra.mxu0 0.0
        %4487 = vmatprep.mubr.f32.mxu0 0.0
        %4488 = vmatmul.mubr.f32.gmra.mxu0 %v4399
        %v4489 = vpop.f32.mrf.mxu0
        %v4490 = vadd.f32 %v4421, %v4489
        %v4491 = vpop.f32.mrf.mxu0
        %4492 = vdwg.mxu0
        %v4493 = vmax.f32 %v4490, 0.0
        %v4494 = vld [vmem:[%s9] sm:$0xff]
        %v4495 = vld [vmem:[%s9 + $0x8] sm:$0xff]
        %v4496 = vld [vmem:[%s9 + $0x10] sm:$0xff]
        %v4497 = vld [vmem:[%s9 + $0x18] sm:$0xff]
        %v4498 = vld [vmem:[%s9 + $0x20] sm:$0xff]
        %v4499 = vld [vmem:[%s9 + $0x28] sm:$0xff]
        %v4500 = vld [vmem:[%s9 + $0x30] sm:$0xff]
        %v4501 = vld [vmem:[%s9 + $0x38] sm:$0xff]
        %v4502 = vld [vmem:[%s9 + $0x40] sm:$0xff]
        %v4503 = vld [vmem:[%s9 + $0x48] sm:$0xff]
        %v4504 = vld [vmem:[%s9 + $0x50] sm:$0xff]
        %v4505 = vld [vmem:[%s9 + $0x58] sm:$0xff]
        %v4506 = vld [vmem:[%s9 + $0x60] sm:$0xff]
        %v4507 = vld [vmem:[%s9 + $0x68] sm:$0xff]
        %v4508 = vld [vmem:[%s9 + $0x70] sm:$0xff]
        %v4509 = vld [vmem:[%s9 + $0x78] sm:$0xff]
        %v4510 = vld [vmem:[%s10] sm:$0x1]
        %v4512 = vlaneseq
        %v4513 = vshrl.u32 %v4512, 7
        %v4514 = vsub.s32 0, %v4513
        %v4515 = vrot.slane %v4510, %v4514
        %4517 = vmatprep.subr.mxu0 0.0
        %4518 = vmatpush1.msra.mxu0 %v4509
        %4519 = vmatprep.subr.mxu0 0.0
        %4520 = vmatpush1.msra.mxu0 %v4508
        %4521 = vmatprep.subr.mxu0 0.0
        %4522 = vmatpush1.msra.mxu0 %v4507
        %4523 = vmatprep.subr.mxu0 0.0
        %4524 = vmatpush1.msra.mxu0 %v4506
        %4525 = vmatprep.subr.mxu0 0.0
        %4526 = vmatpush1.msra.mxu0 %v4505
        %4527 = vmatprep.subr.mxu0 0.0
        %4528 = vmatpush1.msra.mxu0 %v4504
        %4529 = vmatprep.subr.mxu0 0.0
        %4530 = vmatpush1.msra.mxu0 %v4503
        %4531 = vmatprep.subr.mxu0 0.0
        %4532 = vmatpush1.msra.mxu0 %v4502
        %4533 = vmatprep.subr.mxu0 0.0
        %4534 = vmatpush1.msra.mxu0 %v4501
        %4535 = vmatprep.subr.mxu0 0.0
        %4536 = vmatpush1.msra.mxu0 %v4500
        %4537 = vmatprep.subr.mxu0 0.0
        %4538 = vmatpush1.msra.mxu0 %v4499
        %4539 = vmatprep.subr.mxu0 0.0
        %4540 = vmatpush1.msra.mxu0 %v4498
        %4541 = vmatprep.subr.mxu0 0.0
        %4542 = vmatpush1.msra.mxu0 %v4497
        %4543 = vmatprep.subr.mxu0 0.0
        %4544 = vmatpush1.msra.mxu0 %v4496
        %4545 = vmatprep.subr.mxu0 0.0
        %4546 = vmatpush1.msra.mxu0 %v4495
        %4547 = vmatprep.subr.mxu0 0.0
        %4548 = vmatpush1.msra.mxu0 %v4494
        %4549 = vmatprep.subr.mxu0 0.0
        %4550 = vmatpush2.msra.mxu0 0.0
        %4551 = vmatprep.subr.mxu0 0.0
        %4552 = vmatpush2.msra.mxu0 0.0
        %4553 = vmatprep.subr.mxu0 0.0
        %4554 = vmatpush2.msra.mxu0 0.0
        %4555 = vmatprep.subr.mxu0 0.0
        %4556 = vmatpush2.msra.mxu0 0.0
        %4557 = vmatprep.subr.mxu0 0.0
        %4558 = vmatpush2.msra.mxu0 0.0
        %4559 = vmatprep.subr.mxu0 0.0
        %4560 = vmatpush2.msra.mxu0 0.0
        %4561 = vmatprep.subr.mxu0 0.0
        %4562 = vmatpush2.msra.mxu0 0.0
        %4563 = vmatprep.subr.mxu0 0.0
        %4564 = vmatpush2.msra.mxu0 0.0
        %4565 = vmatprep.subr.mxu0 0.0
        %4566 = vmatpush2.msra.mxu0 0.0
        %4567 = vmatprep.subr.mxu0 0.0
        %4568 = vmatpush2.msra.mxu0 0.0
        %4569 = vmatprep.subr.mxu0 0.0
        %4570 = vmatpush2.msra.mxu0 0.0
        %4571 = vmatprep.subr.mxu0 0.0
        %4572 = vmatpush2.msra.mxu0 0.0
        %4573 = vmatprep.subr.mxu0 0.0
        %4574 = vmatpush2.msra.mxu0 0.0
        %4575 = vmatprep.subr.mxu0 0.0
        %4576 = vmatpush2.msra.mxu0 0.0
        %4577 = vmatprep.subr.mxu0 0.0
        %4578 = vmatpush2.msra.mxu0 0.0
        %4579 = vmatprep.subr.mxu0 0.0
        %4580 = vmatpush2.msra.mxu0 0.0
        %4581 = vmatprep.mubr.f32.mxu0 0.0
        %4582 = vmatmul.mubr.f32.gmra.mxu0 %v4493
        %v4583 = vpop.f32.mrf.mxu0
        %v4584 = vadd.f32 %v4515, %v4583
        %v4585 = vpop.f32.mrf.mxu0
        %4586 = vdwg.mxu0
        %4587 = vst [vmem:[%s379] sm:$0xff] %v4584
        %s4588 = sand.u32 %s269, 1
        %s4589 = scalar_lea.sflag [#allocation3], %s4588
        %s4590 = sand.u32 %s269, 1
        %s4591 = smul.addr %s4590, 8
        %s4592 = scalar_lea.vmem [#allocation2], %s4591
        // Predicated region
        $region65: #{fmnist_cnn_forward.1} parent=63 // pred_check
          %p4593 = pneg %p279
        $region66: #{fmnist_cnn_forward.1} parent=63 // pred_check_branch
          %4595 = sbr.rel (%p4593) target = $region68
        $region67: #{fmnist_cnn_forward.1} parent=63 // pred_region
          %s4597 = ssub.s32 128, 128
          %4598 = vsyncadd %s4589, %s4597
          %s4599 = smul.addr %s25, 128
          %s4600 = scalar_lea.hbm %s11, %s4599
          %s4602 = sshll.u32 %s4592, 4
          %s4603 = int_to_ptr.vmem [resolvable:$true] %s4602
          %4605 = dma.vmem_to_hbm [thread:$0]  %s4603, 128, %s4600, %s4589
        $region68: #{fmnist_cnn_forward.1} parent=63 // pred_fallthru
          _
      $region64: #{fmnist_cnn_forward.1} parent=5 // pred_fallthru
        _
      %p4606 = scmp.le.s32.totalorder 2, %s20
      // Predicated region
      $region69: #{fmnist_cnn_forward.1} parent=5 // pred_check
        %p4607 = pneg %p4606
      $region70: #{fmnist_cnn_forward.1} parent=5 // pred_check_branch
        %4609 = sbr.rel (%p4607) target = $region72
      $region71: #{fmnist_cnn_forward.1} parent=5 // pred_region
        %s4610 = ssub.s32 %s20, 2
        // Predicated region
        $region73: #{fmnist_cnn_forward.1} parent=71 // pred_check
          %p4611 = pneg %p285
        $region74: #{fmnist_cnn_forward.1} parent=71 // pred_check_branch
          %4613 = sbr.rel (%p4611) target = $region76
        $region75: #{fmnist_cnn_forward.1} parent=71 // pred_region
          %s4614 = sand.u32 %s270, 1
          %s4615 = scalar_lea.sflag [#allocation3], %s4614
          %s4616 = sand.u32 %s270, 1
          %s4617 = smul.addr %s4616, 8
          %s4618 = scalar_lea.vmem [#allocation2], %s4617
          %4619 = dma.done %s4615, 128
        $region76: #{fmnist_cnn_forward.1} parent=71 // pred_fallthru
          _
      $region72: #{fmnist_cnn_forward.1} parent=5 // pred_fallthru
        _
    $region6: #{fmnist_cnn_forward.1} parent=1 // loop_footer
      %s24 = sadd.s32 1, %s20
    $region7: #{fmnist_cnn_forward.1} parent=1 // loop_footer_branch
      %19 = sbr.rel target = $region3
    $region8: #{fmnist_cnn_forward.1} parent=1 // loop_exit
      _
    %4620 = vsyncpa [#allocation3], 1
    %s4621 = scalar_lea.sflag [#allocation3], 1
    %4622 = vsyncpa %s4621, 1

</llo_original>
